<compile_context>
chip_gen: v7x
topology: tpu7x:2x2x1
jax: 0.10.0
libtpu: 0.0.40
codegen_flags: <defaults>
</compile_context>

<pallas_src>
import functools

import numpy as np
import jax
import jax.numpy as jnp
from jax.experimental import pallas as pl
from jax.experimental.pallas import tpu as pltpu

# ----------------------------- model config (small shapes) ------------------
B = 2            # batch
N_AGENTS = 2     # num_agents (n_max_player)
OBS_LEN = 8
PRED_LEN = 4
T_TOTAL = OBS_LEN + PRED_LEN      # 12
X_DIM = 2
S_DIM = 4
P_DIM = 2
Z_DIM = 16
EMB_DIM = 8                       # per-agent ShotTypeEmb head width
NN_IN = 26                        # matches nn.Linear(26, 8)
NN_OUT = 8
PZ_IN = 944                       # matches nn.Linear(944, 2*z_dim)

VMEM = pltpu.MemorySpace.VMEM

# Order of weight tensors passed to the fused kernel (after the 9 activations).
WEIGHT_NAMES = (
    'A_x', 'A_s', 'b_ls',                                           # ShotTypeEmb stand-in (fused heads)
    'B_x', 'B_ls', 'B_rel', 'B_shot', 'B_hit', 'b_nn',              # self.nn Linear(26,8)
    'W_past', 'b_past',                                             # PastEncoder stand-in
    'W_all_f', 'W_all_p', 'b_all',                                  # FutureEncoder stand-in
    'W_q_mu', 'W_q_lv', 'b_q_mu', 'b_q_lv',                         # q_layer
    'W_pz_mu', 'W_pz_lv', 'b_pz_mu', 'b_pz_lv',                     # pz_layer
    'W_dt_p', 'W_dt_z', 'b_dt',                                     # decoder traj head
    'W_ds_p', 'W_ds_z', 'b_ds',                                     # decoder shot head
    'W_dh_p', 'W_dh_z', 'b_dh',                                     # decoder hit head
)


# ------------------------------- fused kernel -------------------------------

def _fused_kernel(x_ref, shot_ref, hit_ref, rel_ref,
                  xt_ref, st_ref, ht_ref, eps_ref, pair_ref,
                  a_x_ref, a_s_ref, b_ste_ref,
                  b_x_ref, b_ls_ref, b_re_ref, b_sh_ref, b_hi_ref, b_nn_ref,
                  w_past_ref, b_past_ref,
                  w_allf_ref, w_allp_ref, b_all_ref,
                  wq_mu_ref, wq_lv_ref, bq_mu_ref, bq_lv_ref,
                  wpz_mu_ref, wpz_lv_ref, bpz_mu_ref, bpz_lv_ref,
                  wdt_p_ref, wdt_z_ref, bdt_ref,
                  wds_p_ref, wds_z_ref, bds_ref,
                  wdh_p_ref, wdh_z_ref, bdh_ref,
                  out_ref, *, batch, nagents, nsteps):
    f32 = jnp.float32

    def mm(a, b):
        return jnp.dot(a, b, preferred_element_type=f32)

    X = x_ref[...]          # (R, T*2)   traj, per-agent rows, time flattened on lanes
    SHOT = shot_ref[...]    # (R, T*4)
    HIT = hit_ref[...]      # (R, T*2)
    REL = rel_ref[...]      # (R, T*2)

    # --- ShotTypeEmb stand-in (fused locs/semb heads, block-diag matmuls) ----
    # TODO(synk): ShotTypeEmb is loaded from an external checkpoint in the
    # reference; deterministic linear stand-in producing (locs_out || shot_out)
    # interleaved per timestep: (R, T*16).
    ls = mm(X, a_x_ref[...]) + mm(SHOT, a_s_ref[...]) + b_ste_ref[...]

    # --- self.nn Linear(26, 8): dot-of-concat == sum-of-dots over groups -----
    feats = (mm(X, b_x_ref[...]) + mm(ls, b_ls_ref[...]) + mm(REL, b_re_ref[...])
             + mm(SHOT, b_sh_ref[...]) + mm(HIT, b_hi_ref[...])
             + b_nn_ref[...])                                              # (R, T*8)
    # .clone().detach() in the reference is a forward no-op (kernel is fwd-only).

    # --- PastEncoder / FutureEncoder stand-ins -------------------------------
    # TODO(synk): PastEncoder internals unspecified; W_past has zero rows on the
    # prediction timesteps so only the obs_len*8 features feed it (== stand-in
    # Linear(obs_len*8, 944)).
    past = mm(feats, w_past_ref[...]) + b_past_ref[...]                    # (R, 944)
    # TODO(synk): FutureEncoder internals unspecified; Linear(T*8 + 944, 2*z).
    allf = mm(feats, w_allf_ref[...]) + mm(past, w_allp_ref[...]) + b_all_ref[...]

    # --- q / p Gaussians ------------------------------------------------------
    mu_q = mm(allf, wq_mu_ref[...]) + bq_mu_ref[...]
    lv_q = mm(allf, wq_lv_ref[...]) + bq_lv_ref[...]
    mu_p = mm(past, wpz_mu_ref[...]) + bpz_mu_ref[...]
    lv_p = mm(past, wpz_lv_ref[...]) + bpz_lv_ref[...]

    qz = mu_q + eps_ref[...] * jnp.exp(0.5 * lv_q)                         # rsample

    kl = 0.5 * (lv_p - lv_q
                + (jnp.exp(lv_q) + (mu_q - mu_p) ** 2) / jnp.exp(lv_p)
                - 1.0)
    loss_kl = jnp.maximum(jnp.sum(kl) / (batch * nagents), 2.0)            # clamp_min_(2.0)

    # NOTE: the reference re-evaluates pz_layer on the same input (p_z_params is
    # bit-identical to pz_param) and draws pz_sampled which is never used in
    # forward() -> dead code, dropped here.

    # --- TrajDecoder stand-in: per-head linear on [past_feature || qz] --------
    # TODO(synk): TrajDecoder internals unspecified; linear stand-in with
    # per-head ((T-1)*2 traj, (T-1)*4 shot, (T-1)*2 hit) outputs.
    pred = mm(past, wdt_p_ref[...]) + mm(qz, wdt_z_ref[...]) + bdt_ref[...]      # (R, 22)
    shot_lg = mm(past, wds_p_ref[...]) + mm(qz, wds_z_ref[...]) + bds_ref[...]   # (R, 44)
    hit_lg = mm(past, wdh_p_ref[...]) + mm(qz, wdh_z_ref[...]) + bdh_ref[...]    # (R, 22)

    R = X.shape[0]
    tm1 = nsteps - 1

    # --- prediction loss vs real_traj[:, 1:] ---------------------------------
    diff = xt_ref[...] - pred
    sq = diff * diff
    loss_pred = jnp.sum(sq) / batch / tm1

    # --- ADE / FDE / MSE (x/y lane pairing via constant (22, 11) matmul) -----
    # TODO(synk): average/final_displacement_error helpers are not given in the
    # reference module; standard ADE/FDE/MSE over the skip-first alignment.
    d2 = mm(sq, pair_ref[...])                                             # (R, T-1)
    dist = jnp.sqrt(d2 + 1e-12)
    loss_ade = jnp.sum(dist) / (R * tm1)
    col = jax.lax.broadcasted_iota(jnp.int32, dist.shape, 1)
    loss_fde = jnp.sum(jnp.where(col == tm1 - 1, dist, 0.0)) / R
    loss_mse = jnp.sum(d2) / (R * tm1)

    # --- BCE with logits (== BCE(sigmoid(x), t)), sum reduction --------------
    def bce_sum(x, t):
        return jnp.sum(jnp.maximum(x, 0.0) - x * t
                       + jnp.log(1.0 + jnp.exp(-jnp.abs(x))))

    ce_shot = bce_sum(shot_lg, st_ref[...]) / (tm1 * R)
    ce_hit = bce_sum(hit_lg, ht_ref[...]) / (tm1 * R)

    total = loss_pred + loss_kl + ce_shot * 0.01 + ce_hit * 0.01

    # --- pack all scalar losses into one lane-dense (1, 128) output ----------
    lane = jax.lax.broadcasted_iota(jnp.int32, (1, 128), 1)
    out = jnp.zeros((1, 128), f32)
    for i, v in enumerate((total, loss_pred, loss_kl, loss_ade,
                           loss_fde, loss_mse, ce_shot, ce_hit)):
        out = jnp.where(lane == i, v, out)
    out_ref[...] = out


# ------------------------------- parameters --------------------------------

def init_params(key):
    ks = jax.random.split(key, 8)

    def lin(k, fan_in, fan_out):
        kw, kb = jax.random.split(k)
        scale = 1.0 / np.sqrt(np.float32(fan_in))
        w = np.asarray(jax.random.uniform(kw, (fan_in, fan_out), jnp.float32, -scale, scale))
        b = np.asarray(jax.random.uniform(kb, (1, fan_out), jnp.float32, -scale, scale))
        return w, b

    def bdiag(w, t):
        kk, mm_ = w.shape
        out = np.zeros((t * kk, t * mm_), np.float32)
        for i in range(t):
            out[i * kk:(i + 1) * kk, i * mm_:(i + 1) * mm_] = w
        return out

    T = T_TOTAL
    TM1 = T - 1
    p = {}

    # ShotTypeEmb stand-in: (x||shot) -> (locs(8) || shot_emb(8)) per timestep,
    # kept interleaved per timestep so both heads come out of one matmul pair.
    W_ste, b_ste = lin(ks[0], X_DIM + S_DIM, 2 * EMB_DIM)
    p['A_x'] = bdiag(W_ste[:X_DIM, :], T)        # (T*2,  T*16)
    p['A_s'] = bdiag(W_ste[X_DIM:, :], T)        # (T*4,  T*16)
    p['b_ls'] = np.tile(b_ste, (1, T))           # (1,    T*16)

    # self.nn = Linear(26, 8): split by concat group [x|locs|rel|shot|semb|hit];
    # the locs and semb groups are fused into one block (matches the interleaved
    # [locs_t || semb_t] layout produced above).
    W_nn, b_nn = lin(ks[1], NN_IN, NN_OUT)
    off = np.cumsum([0, X_DIM, EMB_DIM, X_DIM, S_DIM, EMB_DIM, P_DIM])
    p['B_x'] = bdiag(W_nn[off[0]:off[1], :], T)
    p['B_ls'] = bdiag(np.vstack([W_nn[off[1]:off[2], :],
                                 W_nn[off[4]:off[5], :]]), T)   # (T*16, T*8)
    p['B_rel'] = bdiag(W_nn[off[2]:off[3], :], T)
    p['B_shot'] = bdiag(W_nn[off[3]:off[4], :], T)
    p['B_hit'] = bdiag(W_nn[off[5]:off[6], :], T)
    p['b_nn'] = np.tile(b_nn, (1, T))

    # PastEncoder stand-in: Linear(obs_len*8 -> 944); zero rows on future steps.
    W_past, b_past = lin(ks[2], OBS_LEN * NN_OUT, PZ_IN)
    p['W_past'] = np.concatenate(
        [W_past, np.zeros((PRED_LEN * NN_OUT, PZ_IN), np.float32)], axis=0)
    p['b_past'] = b_past

    # FutureEncoder stand-in: Linear(T*8 + 944 -> 2*z), split to avoid concat.
    W_all, b_all = lin(ks[3], T * NN_OUT + PZ_IN, 2 * Z_DIM)
    p['W_all_f'] = W_all[:T * NN_OUT]
    p['W_all_p'] = W_all[T * NN_OUT:]
    p['b_all'] = b_all

    # q_layer Linear(2z, 2z), split into mu / logvar heads.
    W_q, b_q = lin(ks[4], 2 * Z_DIM, 2 * Z_DIM)
    p['W_q_mu'], p['W_q_lv'] = W_q[:, :Z_DIM], W_q[:, Z_DIM:]
    p['b_q_mu'], p['b_q_lv'] = b_q[:, :Z_DIM], b_q[:, Z_DIM:]

    # pz_layer Linear(944, 2z), split into mu / logvar heads.
    W_pz, b_pz = lin(ks[5], PZ_IN, 2 * Z_DIM)
    p['W_pz_mu'], p['W_pz_lv'] = W_pz[:, :Z_DIM], W_pz[:, Z_DIM:]
    p['b_pz_mu'], p['b_pz_lv'] = b_pz[:, :Z_DIM], b_pz[:, Z_DIM:]

    # TrajDecoder stand-in: [past(944) || z(16)] -> traj/shot/hit heads.
    W_dec, b_dec = lin(ks[6], PZ_IN + Z_DIM, TM1 * (X_DIM + S_DIM + P_DIM))
    c1, c2 = TM1 * X_DIM, TM1 * (X_DIM + S_DIM)
    p['W_dt_p'], p['W_dt_z'], p['b_dt'] = W_dec[:PZ_IN, :c1], W_dec[PZ_IN:, :c1], b_dec[:, :c1]
    p['W_ds_p'], p['W_ds_z'], p['b_ds'] = W_dec[:PZ_IN, c1:c2], W_dec[PZ_IN:, c1:c2], b_dec[:, c1:c2]
    p['W_dh_p'], p['W_dh_z'], p['b_dh'] = W_dec[:PZ_IN, c2:], W_dec[PZ_IN:, c2:], b_dec[:, c2:]

    # constant x/y pairing matrix for ADE/FDE/MSE: (2*(T-1), T-1)
    pair = np.zeros((TM1 * X_DIM, TM1), np.float32)
    for t in range(TM1):
        pair[2 * t, t] = 1.0
        pair[2 * t + 1, t] = 1.0
    p['PAIR'] = pair

    return {k: jnp.asarray(v, jnp.float32) for k, v in p.items()}


# ------------------------------- forward pass ------------------------------

def tscvae_forward(params, traj, traj_rel, shot_type_ohe, hit_player, eps_q):
    batch, timesteps, num_agents, _ = traj.shape
    R = batch * num_agents
    T = timesteps

    def flat(x):  # (B,T,N,C) -> permute(0,2,1,3) -> (B*N, T*C) wide row layout
        return jnp.transpose(x, (0, 2, 1, 3)).reshape(R, T * x.shape[-1])

    X = flat(traj)               # (R, T*2)
    SHOT = flat(shot_type_ohe)   # (R, T*4)
    HIT = flat(hit_player)       # (R, T*2)
    REL = flat(traj_rel)         # (R, T*2)
    X_TGT = X[:, X_DIM:]         # real_traj[:, 1:]   -> (R, (T-1)*2)
    SHOT_TGT = SHOT[:, S_DIM:]   # shot_input[:, 1:]  -> (R, (T-1)*4)
    HIT_TGT = HIT[:, P_DIM:]     # hit_input[:, 1:]   -> (R, (T-1)*2)

    inputs = [X, SHOT, HIT, REL, X_TGT, SHOT_TGT, HIT_TGT, eps_q, params['PAIR']]
    inputs += [params[name] for name in WEIGHT_NAMES]

    kernel = functools.partial(_fused_kernel, batch=batch, nagents=num_agents, nsteps=T)
    out = pl.pallas_call(
        kernel,
        out_shape=jax.ShapeDtypeStruct((1, 128), jnp.float32),
        in_specs=[pl.BlockSpec(memory_space=VMEM) for _ in inputs],
        out_specs=pl.BlockSpec(memory_space=VMEM),
    )(*inputs)

    o = out[0]
    # (total_loss, loss_pred, loss_kl, loss_ade, loss_fde, loss_mse, ce_shot, ce_hit)
    return (o[0], o[1], o[2], o[3], o[4], o[5], o[6], o[7])


# ----------------------------------- main -----------------------------------

if __name__ == "__main__":
    key = jax.random.PRNGKey(0)
    ks = jax.random.split(key, 8)

    traj = jax.random.normal(ks[0], (B, T_TOTAL, N_AGENTS, X_DIM), jnp.float32)
    traj_rel = jax.random.normal(ks[1], (B, T_TOTAL, N_AGENTS, X_DIM), jnp.float32)
    shot_idx = jax.random.randint(ks[2], (B, T_TOTAL, N_AGENTS), 0, S_DIM)
    shot_type_ohe = jax.nn.one_hot(shot_idx, S_DIM, dtype=jnp.float32)
    hit_idx = jax.random.randint(ks[3], (B, T_TOTAL, N_AGENTS), 0, P_DIM)
    hit_player = jax.nn.one_hot(hit_idx, P_DIM, dtype=jnp.float32)

    # deterministic stand-in for torch.randn_like in the q rsample
    eps_q = jax.random.normal(ks[4], (B * N_AGENTS, Z_DIM), jnp.float32)

    params = init_params(ks[6])

    fwd = jax.jit(tscvae_forward)
    out = fwd(params, traj, traj_rel, shot_type_ohe, hit_player, eps_q)
    out = jax.block_until_ready(out)
    assert all(bool(jnp.isfinite(o).all()) for o in out)
    print("KERNEL_OK")
</pallas_src>

<mosaic_0001>
module attributes {stable_mosaic.version = 11 : i64} {
  func.func @_fused_kernel(%arg0: memref<4x24xf32, #tpu.memory_space<vmem>>, %arg1: memref<4x48xf32, #tpu.memory_space<vmem>>, %arg2: memref<4x24xf32, #tpu.memory_space<vmem>>, %arg3: memref<4x24xf32, #tpu.memory_space<vmem>>, %arg4: memref<4x22xf32, #tpu.memory_space<vmem>>, %arg5: memref<4x44xf32, #tpu.memory_space<vmem>>, %arg6: memref<4x22xf32, #tpu.memory_space<vmem>>, %arg7: memref<4x16xf32, #tpu.memory_space<vmem>>, %arg8: memref<22x11xf32, #tpu.memory_space<vmem>>, %arg9: memref<24x192xf32, #tpu.memory_space<vmem>>, %arg10: memref<48x192xf32, #tpu.memory_space<vmem>>, %arg11: memref<1x192xf32, #tpu.memory_space<vmem>>, %arg12: memref<24x96xf32, #tpu.memory_space<vmem>>, %arg13: memref<192x96xf32, #tpu.memory_space<vmem>>, %arg14: memref<24x96xf32, #tpu.memory_space<vmem>>, %arg15: memref<48x96xf32, #tpu.memory_space<vmem>>, %arg16: memref<24x96xf32, #tpu.memory_space<vmem>>, %arg17: memref<1x96xf32, #tpu.memory_space<vmem>>, %arg18: memref<96x944xf32, #tpu.memory_space<vmem>>, %arg19: memref<1x944xf32, #tpu.memory_space<vmem>>, %arg20: memref<96x32xf32, #tpu.memory_space<vmem>>, %arg21: memref<944x32xf32, #tpu.memory_space<vmem>>, %arg22: memref<1x32xf32, #tpu.memory_space<vmem>>, %arg23: memref<32x16xf32, #tpu.memory_space<vmem>>, %arg24: memref<32x16xf32, #tpu.memory_space<vmem>>, %arg25: memref<1x16xf32, #tpu.memory_space<vmem>>, %arg26: memref<1x16xf32, #tpu.memory_space<vmem>>, %arg27: memref<944x16xf32, #tpu.memory_space<vmem>>, %arg28: memref<944x16xf32, #tpu.memory_space<vmem>>, %arg29: memref<1x16xf32, #tpu.memory_space<vmem>>, %arg30: memref<1x16xf32, #tpu.memory_space<vmem>>, %arg31: memref<944x22xf32, #tpu.memory_space<vmem>>, %arg32: memref<16x22xf32, #tpu.memory_space<vmem>>, %arg33: memref<1x22xf32, #tpu.memory_space<vmem>>, %arg34: memref<944x44xf32, #tpu.memory_space<vmem>>, %arg35: memref<16x44xf32, #tpu.memory_space<vmem>>, %arg36: memref<1x44xf32, #tpu.memory_space<vmem>>, %arg37: memref<944x22xf32, #tpu.memory_space<vmem>>, %arg38: memref<16x22xf32, #tpu.memory_space<vmem>>, %arg39: memref<1x22xf32, #tpu.memory_space<vmem>>, %arg40: memref<1x128xf32, #tpu.memory_space<vmem>>) attributes {dimension_semantics = [], scalar_prefetch = 0 : i64, scratch_operands = 0 : i64, tpu.core_type = #tpu.core_type<tc>} {
    %c0 = arith.constant 0 : index
    %c0_0 = arith.constant 0 : index
    %0 = vector.load %arg0[%c0, %c0_0] : memref<4x24xf32, #tpu.memory_space<vmem>>, vector<4x24xf32>
    %c0_1 = arith.constant 0 : index
    %c0_2 = arith.constant 0 : index
    %1 = vector.load %arg1[%c0_1, %c0_2] : memref<4x48xf32, #tpu.memory_space<vmem>>, vector<4x48xf32>
    %c0_3 = arith.constant 0 : index
    %c0_4 = arith.constant 0 : index
    %2 = vector.load %arg2[%c0_3, %c0_4] : memref<4x24xf32, #tpu.memory_space<vmem>>, vector<4x24xf32>
    %c0_5 = arith.constant 0 : index
    %c0_6 = arith.constant 0 : index
    %3 = vector.load %arg3[%c0_5, %c0_6] : memref<4x24xf32, #tpu.memory_space<vmem>>, vector<4x24xf32>
    %c0_7 = arith.constant 0 : index
    %c0_8 = arith.constant 0 : index
    %4 = vector.load %arg9[%c0_7, %c0_8] : memref<24x192xf32, #tpu.memory_space<vmem>>, vector<24x192xf32>
    %cst = arith.constant dense<0.000000e+00> : vector<4x192xf32>
    %5 = tpu.matmul %0, %4, %cst {dimension_numbers = #tpu.dot_dimension_numbers<[1], [0], [0], [1], [0, 0, 1, 1], [], []>} : vector<4x24xf32>, vector<24x192xf32>, vector<4x192xf32> -> vector<4x192xf32>
    %c0_9 = arith.constant 0 : index
    %c0_10 = arith.constant 0 : index
    %6 = vector.load %arg10[%c0_9, %c0_10] : memref<48x192xf32, #tpu.memory_space<vmem>>, vector<48x192xf32>
    %cst_11 = arith.constant dense<0.000000e+00> : vector<4x192xf32>
    %7 = tpu.matmul %1, %6, %cst_11 {dimension_numbers = #tpu.dot_dimension_numbers<[1], [0], [0], [1], [0, 0, 1, 1], [], []>} : vector<4x48xf32>, vector<48x192xf32>, vector<4x192xf32> -> vector<4x192xf32>
    %8 = arith.addf %5, %7 : vector<4x192xf32>
    %c0_12 = arith.constant 0 : index
    %c0_13 = arith.constant 0 : index
    %9 = vector.load %arg11[%c0_12, %c0_13] : memref<1x192xf32, #tpu.memory_space<vmem>>, vector<1x192xf32>
    %10 = vector.broadcast %9 : vector<1x192xf32> to vector<4x192xf32>
    %11 = arith.addf %8, %10 : vector<4x192xf32>
    %c0_14 = arith.constant 0 : index
    %c0_15 = arith.constant 0 : index
    %12 = vector.load %arg12[%c0_14, %c0_15] : memref<24x96xf32, #tpu.memory_space<vmem>>, vector<24x96xf32>
    %cst_16 = arith.constant dense<0.000000e+00> : vector<4x96xf32>
    %13 = tpu.matmul %0, %12, %cst_16 {dimension_numbers = #tpu.dot_dimension_numbers<[1], [0], [0], [1], [0, 0, 1, 1], [], []>} : vector<4x24xf32>, vector<24x96xf32>, vector<4x96xf32> -> vector<4x96xf32>
    %c0_17 = arith.constant 0 : index
    %c0_18 = arith.constant 0 : index
    %14 = vector.load %arg13[%c0_17, %c0_18] : memref<192x96xf32, #tpu.memory_space<vmem>>, vector<192x96xf32>
    %cst_19 = arith.constant dense<0.000000e+00> : vector<4x96xf32>
    %15 = tpu.matmul %11, %14, %cst_19 {dimension_numbers = #tpu.dot_dimension_numbers<[1], [0], [0], [1], [0, 0, 1, 1], [], []>} : vector<4x192xf32>, vector<192x96xf32>, vector<4x96xf32> -> vector<4x96xf32>
    %16 = arith.addf %13, %15 : vector<4x96xf32>
    %c0_20 = arith.constant 0 : index
    %c0_21 = arith.constant 0 : index
    %17 = vector.load %arg14[%c0_20, %c0_21] : memref<24x96xf32, #tpu.memory_space<vmem>>, vector<24x96xf32>
    %cst_22 = arith.constant dense<0.000000e+00> : vector<4x96xf32>
    %18 = tpu.matmul %3, %17, %cst_22 {dimension_numbers = #tpu.dot_dimension_numbers<[1], [0], [0], [1], [0, 0, 1, 1], [], []>} : vector<4x24xf32>, vector<24x96xf32>, vector<4x96xf32> -> vector<4x96xf32>
    %19 = arith.addf %16, %18 : vector<4x96xf32>
    %c0_23 = arith.constant 0 : index
    %c0_24 = arith.constant 0 : index
    %20 = vector.load %arg15[%c0_23, %c0_24] : memref<48x96xf32, #tpu.memory_space<vmem>>, vector<48x96xf32>
    %cst_25 = arith.constant dense<0.000000e+00> : vector<4x96xf32>
    %21 = tpu.matmul %1, %20, %cst_25 {dimension_numbers = #tpu.dot_dimension_numbers<[1], [0], [0], [1], [0, 0, 1, 1], [], []>} : vector<4x48xf32>, vector<48x96xf32>, vector<4x96xf32> -> vector<4x96xf32>
    %22 = arith.addf %19, %21 : vector<4x96xf32>
    %c0_26 = arith.constant 0 : index
    %c0_27 = arith.constant 0 : index
    %23 = vector.load %arg16[%c0_26, %c0_27] : memref<24x96xf32, #tpu.memory_space<vmem>>, vector<24x96xf32>
    %cst_28 = arith.constant dense<0.000000e+00> : vector<4x96xf32>
    %24 = tpu.matmul %2, %23, %cst_28 {dimension_numbers = #tpu.dot_dimension_numbers<[1], [0], [0], [1], [0, 0, 1, 1], [], []>} : vector<4x24xf32>, vector<24x96xf32>, vector<4x96xf32> -> vector<4x96xf32>
    %25 = arith.addf %22, %24 : vector<4x96xf32>
    %c0_29 = arith.constant 0 : index
    %c0_30 = arith.constant 0 : index
    %26 = vector.load %arg17[%c0_29, %c0_30] : memref<1x96xf32, #tpu.memory_space<vmem>>, vector<1x96xf32>
    %27 = vector.broadcast %26 : vector<1x96xf32> to vector<4x96xf32>
    %28 = arith.addf %25, %27 : vector<4x96xf32>
    %c0_31 = arith.constant 0 : index
    %c0_32 = arith.constant 0 : index
    %29 = vector.load %arg18[%c0_31, %c0_32] : memref<96x944xf32, #tpu.memory_space<vmem>>, vector<96x944xf32>
    %cst_33 = arith.constant dense<0.000000e+00> : vector<4x944xf32>
    %30 = tpu.matmul %28, %29, %cst_33 {dimension_numbers = #tpu.dot_dimension_numbers<[1], [0], [0], [1], [0, 0, 1, 1], [], []>} : vector<4x96xf32>, vector<96x944xf32>, vector<4x944xf32> -> vector<4x944xf32>
    %c0_34 = arith.constant 0 : index
    %c0_35 = arith.constant 0 : index
    %31 = vector.load %arg19[%c0_34, %c0_35] : memref<1x944xf32, #tpu.memory_space<vmem>>, vector<1x944xf32>
    %32 = vector.broadcast %31 : vector<1x944xf32> to vector<4x944xf32>
    %33 = arith.addf %30, %32 : vector<4x944xf32>
    %c0_36 = arith.constant 0 : index
    %c0_37 = arith.constant 0 : index
    %34 = vector.load %arg20[%c0_36, %c0_37] : memref<96x32xf32, #tpu.memory_space<vmem>>, vector<96x32xf32>
    %cst_38 = arith.constant dense<0.000000e+00> : vector<4x32xf32>
    %35 = tpu.matmul %28, %34, %cst_38 {dimension_numbers = #tpu.dot_dimension_numbers<[1], [0], [0], [1], [0, 0, 1, 1], [], []>} : vector<4x96xf32>, vector<96x32xf32>, vector<4x32xf32> -> vector<4x32xf32>
    %c0_39 = arith.constant 0 : index
    %c0_40 = arith.constant 0 : index
    %36 = vector.load %arg21[%c0_39, %c0_40] : memref<944x32xf32, #tpu.memory_space<vmem>>, vector<944x32xf32>
    %cst_41 = arith.constant dense<0.000000e+00> : vector<4x32xf32>
    %37 = tpu.matmul %33, %36, %cst_41 {dimension_numbers = #tpu.dot_dimension_numbers<[1], [0], [0], [1], [0, 0, 1, 1], [], []>} : vector<4x944xf32>, vector<944x32xf32>, vector<4x32xf32> -> vector<4x32xf32>
    %38 = arith.addf %35, %37 : vector<4x32xf32>
    %c0_42 = arith.constant 0 : index
    %c0_43 = arith.constant 0 : index
    %39 = vector.load %arg22[%c0_42, %c0_43] : memref<1x32xf32, #tpu.memory_space<vmem>>, vector<1x32xf32>
    %40 = vector.broadcast %39 : vector<1x32xf32> to vector<4x32xf32>
    %41 = arith.addf %38, %40 : vector<4x32xf32>
    %c0_44 = arith.constant 0 : index
    %c0_45 = arith.constant 0 : index
    %42 = vector.load %arg23[%c0_44, %c0_45] : memref<32x16xf32, #tpu.memory_space<vmem>>, vector<32x16xf32>
    %cst_46 = arith.constant dense<0.000000e+00> : vector<4x16xf32>
    %43 = tpu.matmul %41, %42, %cst_46 {dimension_numbers = #tpu.dot_dimension_numbers<[1], [0], [0], [1], [0, 0, 1, 1], [], []>} : vector<4x32xf32>, vector<32x16xf32>, vector<4x16xf32> -> vector<4x16xf32>
    %c0_47 = arith.constant 0 : index
    %c0_48 = arith.constant 0 : index
    %44 = vector.load %arg25[%c0_47, %c0_48] : memref<1x16xf32, #tpu.memory_space<vmem>>, vector<1x16xf32>
    %45 = vector.broadcast %44 : vector<1x16xf32> to vector<4x16xf32>
    %46 = arith.addf %43, %45 : vector<4x16xf32>
    %c0_49 = arith.constant 0 : index
    %c0_50 = arith.constant 0 : index
    %47 = vector.load %arg24[%c0_49, %c0_50] : memref<32x16xf32, #tpu.memory_space<vmem>>, vector<32x16xf32>
    %cst_51 = arith.constant dense<0.000000e+00> : vector<4x16xf32>
    %48 = tpu.matmul %41, %47, %cst_51 {dimension_numbers = #tpu.dot_dimension_numbers<[1], [0], [0], [1], [0, 0, 1, 1], [], []>} : vector<4x32xf32>, vector<32x16xf32>, vector<4x16xf32> -> vector<4x16xf32>
    %c0_52 = arith.constant 0 : index
    %c0_53 = arith.constant 0 : index
    %49 = vector.load %arg26[%c0_52, %c0_53] : memref<1x16xf32, #tpu.memory_space<vmem>>, vector<1x16xf32>
    %50 = vector.broadcast %49 : vector<1x16xf32> to vector<4x16xf32>
    %51 = arith.addf %48, %50 : vector<4x16xf32>
    %c0_54 = arith.constant 0 : index
    %c0_55 = arith.constant 0 : index
    %52 = vector.load %arg27[%c0_54, %c0_55] : memref<944x16xf32, #tpu.memory_space<vmem>>, vector<944x16xf32>
    %cst_56 = arith.constant dense<0.000000e+00> : vector<4x16xf32>
    %53 = tpu.matmul %33, %52, %cst_56 {dimension_numbers = #tpu.dot_dimension_numbers<[1], [0], [0], [1], [0, 0, 1, 1], [], []>} : vector<4x944xf32>, vector<944x16xf32>, vector<4x16xf32> -> vector<4x16xf32>
    %c0_57 = arith.constant 0 : index
    %c0_58 = arith.constant 0 : index
    %54 = vector.load %arg29[%c0_57, %c0_58] : memref<1x16xf32, #tpu.memory_space<vmem>>, vector<1x16xf32>
    %55 = vector.broadcast %54 : vector<1x16xf32> to vector<4x16xf32>
    %56 = arith.addf %53, %55 : vector<4x16xf32>
    %c0_59 = arith.constant 0 : index
    %c0_60 = arith.constant 0 : index
    %57 = vector.load %arg28[%c0_59, %c0_60] : memref<944x16xf32, #tpu.memory_space<vmem>>, vector<944x16xf32>
    %cst_61 = arith.constant dense<0.000000e+00> : vector<4x16xf32>
    %58 = tpu.matmul %33, %57, %cst_61 {dimension_numbers = #tpu.dot_dimension_numbers<[1], [0], [0], [1], [0, 0, 1, 1], [], []>} : vector<4x944xf32>, vector<944x16xf32>, vector<4x16xf32> -> vector<4x16xf32>
    %c0_62 = arith.constant 0 : index
    %c0_63 = arith.constant 0 : index
    %59 = vector.load %arg30[%c0_62, %c0_63] : memref<1x16xf32, #tpu.memory_space<vmem>>, vector<1x16xf32>
    %60 = vector.broadcast %59 : vector<1x16xf32> to vector<4x16xf32>
    %61 = arith.addf %58, %60 : vector<4x16xf32>
    %c0_64 = arith.constant 0 : index
    %c0_65 = arith.constant 0 : index
    %62 = vector.load %arg7[%c0_64, %c0_65] : memref<4x16xf32, #tpu.memory_space<vmem>>, vector<4x16xf32>
    %cst_66 = arith.constant 5.000000e-01 : f32
    %63 = vector.broadcast %cst_66 : f32 to vector<4x16xf32>
    %64 = arith.mulf %63, %51 : vector<4x16xf32>
    %65 = math.exp %64 : vector<4x16xf32>
    %66 = arith.mulf %62, %65 : vector<4x16xf32>
    %67 = arith.addf %46, %66 : vector<4x16xf32>
    %68 = arith.subf %61, %51 : vector<4x16xf32>
    %69 = math.exp %51 : vector<4x16xf32>
    %70 = arith.subf %46, %56 : vector<4x16xf32>
    %71 = arith.mulf %70, %70 : vector<4x16xf32>
    %72 = arith.addf %69, %71 : vector<4x16xf32>
    %73 = math.exp %61 : vector<4x16xf32>
    %74 = arith.divf %72, %73 : vector<4x16xf32>
    %75 = arith.addf %68, %74 : vector<4x16xf32>
    %cst_67 = arith.constant 1.000000e+00 : f32
    %76 = vector.broadcast %cst_67 : f32 to vector<4x16xf32>
    %77 = arith.subf %75, %76 : vector<4x16xf32>
    %cst_68 = arith.constant 5.000000e-01 : f32
    %78 = vector.broadcast %cst_68 : f32 to vector<4x16xf32>
    %79 = arith.mulf %78, %77 : vector<4x16xf32>
    %80 = vector.shape_cast %79 : vector<4x16xf32> to vector<1x4x16xf32>
    %cst_69 = arith.constant dense<0.000000e+00> : vector<1xf32>
    %81 = vector.multi_reduction <add>, %80, %cst_69 [1, 2] : vector<1x4x16xf32> to vector<1xf32>
    %82 = vector.shape_cast %81 : vector<1xf32> to vector<1x1x1xf32>
    %83 = vector.extract %82[0, 0, 0] : f32 from vector<1x1x1xf32>
    %cst_70 = arith.constant 4.000000e+00 : f32
    %84 = arith.divf %83, %cst_70 : f32
    %cst_71 = arith.constant 2.000000e+00 : f32
    %85 = arith.maximumf %84, %cst_71 : f32
    %c0_72 = arith.constant 0 : index
    %c0_73 = arith.constant 0 : index
    %86 = vector.load %arg31[%c0_72, %c0_73] : memref<944x22xf32, #tpu.memory_space<vmem>>, vector<944x22xf32>
    %cst_74 = arith.constant dense<0.000000e+00> : vector<4x22xf32>
    %87 = tpu.matmul %33, %86, %cst_74 {dimension_numbers = #tpu.dot_dimension_numbers<[1], [0], [0], [1], [0, 0, 1, 1], [], []>} : vector<4x944xf32>, vector<944x22xf32>, vector<4x22xf32> -> vector<4x22xf32>
    %c0_75 = arith.constant 0 : index
    %c0_76 = arith.constant 0 : index
    %88 = vector.load %arg32[%c0_75, %c0_76] : memref<16x22xf32, #tpu.memory_space<vmem>>, vector<16x22xf32>
    %cst_77 = arith.constant dense<0.000000e+00> : vector<4x22xf32>
    %89 = tpu.matmul %67, %88, %cst_77 {dimension_numbers = #tpu.dot_dimension_numbers<[1], [0], [0], [1], [0, 0, 1, 1], [], []>} : vector<4x16xf32>, vector<16x22xf32>, vector<4x22xf32> -> vector<4x22xf32>
    %90 = arith.addf %87, %89 : vector<4x22xf32>
    %c0_78 = arith.constant 0 : index
    %c0_79 = arith.constant 0 : index
    %91 = vector.load %arg33[%c0_78, %c0_79] : memref<1x22xf32, #tpu.memory_space<vmem>>, vector<1x22xf32>
    %92 = vector.broadcast %91 : vector<1x22xf32> to vector<4x22xf32>
    %93 = arith.addf %90, %92 : vector<4x22xf32>
    %c0_80 = arith.constant 0 : index
    %c0_81 = arith.constant 0 : index
    %94 = vector.load %arg34[%c0_80, %c0_81] : memref<944x44xf32, #tpu.memory_space<vmem>>, vector<944x44xf32>
    %cst_82 = arith.constant dense<0.000000e+00> : vector<4x44xf32>
    %95 = tpu.matmul %33, %94, %cst_82 {dimension_numbers = #tpu.dot_dimension_numbers<[1], [0], [0], [1], [0, 0, 1, 1], [], []>} : vector<4x944xf32>, vector<944x44xf32>, vector<4x44xf32> -> vector<4x44xf32>
    %c0_83 = arith.constant 0 : index
    %c0_84 = arith.constant 0 : index
    %96 = vector.load %arg35[%c0_83, %c0_84] : memref<16x44xf32, #tpu.memory_space<vmem>>, vector<16x44xf32>
    %cst_85 = arith.constant dense<0.000000e+00> : vector<4x44xf32>
    %97 = tpu.matmul %67, %96, %cst_85 {dimension_numbers = #tpu.dot_dimension_numbers<[1], [0], [0], [1], [0, 0, 1, 1], [], []>} : vector<4x16xf32>, vector<16x44xf32>, vector<4x44xf32> -> vector<4x44xf32>
    %98 = arith.addf %95, %97 : vector<4x44xf32>
    %c0_86 = arith.constant 0 : index
    %c0_87 = arith.constant 0 : index
    %99 = vector.load %arg36[%c0_86, %c0_87] : memref<1x44xf32, #tpu.memory_space<vmem>>, vector<1x44xf32>
    %100 = vector.broadcast %99 : vector<1x44xf32> to vector<4x44xf32>
    %101 = arith.addf %98, %100 : vector<4x44xf32>
    %c0_88 = arith.constant 0 : index
    %c0_89 = arith.constant 0 : index
    %102 = vector.load %arg37[%c0_88, %c0_89] : memref<944x22xf32, #tpu.memory_space<vmem>>, vector<944x22xf32>
    %cst_90 = arith.constant dense<0.000000e+00> : vector<4x22xf32>
    %103 = tpu.matmul %33, %102, %cst_90 {dimension_numbers = #tpu.dot_dimension_numbers<[1], [0], [0], [1], [0, 0, 1, 1], [], []>} : vector<4x944xf32>, vector<944x22xf32>, vector<4x22xf32> -> vector<4x22xf32>
    %c0_91 = arith.constant 0 : index
    %c0_92 = arith.constant 0 : index
    %104 = vector.load %arg38[%c0_91, %c0_92] : memref<16x22xf32, #tpu.memory_space<vmem>>, vector<16x22xf32>
    %cst_93 = arith.constant dense<0.000000e+00> : vector<4x22xf32>
    %105 = tpu.matmul %67, %104, %cst_93 {dimension_numbers = #tpu.dot_dimension_numbers<[1], [0], [0], [1], [0, 0, 1, 1], [], []>} : vector<4x16xf32>, vector<16x22xf32>, vector<4x22xf32> -> vector<4x22xf32>
    %106 = arith.addf %103, %105 : vector<4x22xf32>
    %c0_94 = arith.constant 0 : index
    %c0_95 = arith.constant 0 : index
    %107 = vector.load %arg39[%c0_94, %c0_95] : memref<1x22xf32, #tpu.memory_space<vmem>>, vector<1x22xf32>
    %108 = vector.broadcast %107 : vector<1x22xf32> to vector<4x22xf32>
    %109 = arith.addf %106, %108 : vector<4x22xf32>
    %c0_96 = arith.constant 0 : index
    %c0_97 = arith.constant 0 : index
    %110 = vector.load %arg4[%c0_96, %c0_97] : memref<4x22xf32, #tpu.memory_space<vmem>>, vector<4x22xf32>
    %111 = arith.subf %110, %93 : vector<4x22xf32>
    %112 = arith.mulf %111, %111 : vector<4x22xf32>
    %113 = vector.shape_cast %112 : vector<4x22xf32> to vector<1x4x22xf32>
    %cst_98 = arith.constant dense<0.000000e+00> : vector<1xf32>
    %114 = vector.multi_reduction <add>, %113, %cst_98 [1, 2] : vector<1x4x22xf32> to vector<1xf32>
    %115 = vector.shape_cast %114 : vector<1xf32> to vector<1x1x1xf32>
    %116 = vector.extract %115[0, 0, 0] : f32 from vector<1x1x1xf32>
    %cst_99 = arith.constant 2.000000e+00 : f32
    %117 = arith.divf %116, %cst_99 : f32
    %cst_100 = arith.constant 1.100000e+01 : f32
    %118 = arith.divf %117, %cst_100 : f32
    %c0_101 = arith.constant 0 : index
    %c0_102 = arith.constant 0 : index
    %119 = vector.load %arg8[%c0_101, %c0_102] : memref<22x11xf32, #tpu.memory_space<vmem>>, vector<22x11xf32>
    %cst_103 = arith.constant dense<0.000000e+00> : vector<4x11xf32>
    %120 = tpu.matmul %112, %119, %cst_103 {dimension_numbers = #tpu.dot_dimension_numbers<[1], [0], [0], [1], [0, 0, 1, 1], [], []>} : vector<4x22xf32>, vector<22x11xf32>, vector<4x11xf32> -> vector<4x11xf32>
    %cst_104 = arith.constant 9.99999996E-13 : f32
    %121 = vector.broadcast %cst_104 : f32 to vector<4x11xf32>
    %122 = arith.addf %120, %121 : vector<4x11xf32>
    %123 = math.sqrt %122 : vector<4x11xf32>
    %124 = vector.shape_cast %123 : vector<4x11xf32> to vector<1x4x11xf32>
    %cst_105 = arith.constant dense<0.000000e+00> : vector<1xf32>
    %125 = vector.multi_reduction <add>, %124, %cst_105 [1, 2] : vector<1x4x11xf32> to vector<1xf32>
    %126 = vector.shape_cast %125 : vector<1xf32> to vector<1x1x1xf32>
    %127 = vector.extract %126[0, 0, 0] : f32 from vector<1x1x1xf32>
    %cst_106 = arith.constant 4.400000e+01 : f32
    %128 = arith.divf %127, %cst_106 : f32
    %129 = tpu.iota {dimensions = array<i32: 1>} : vector<4x11xi32>
    %c10_i32 = arith.constant 10 : i32
    %130 = vector.broadcast %c10_i32 : i32 to vector<4x11xi32>
    %131 = arith.cmpi eq, %129, %130 : vector<4x11xi32>
    %cst_107 = arith.constant 0.000000e+00 : f32
    %132 = vector.broadcast %cst_107 : f32 to vector<4x11xf32>
    %133 = arith.select %131, %123, %132 : vector<4x11xi1>, vector<4x11xf32>
    %134 = vector.shape_cast %133 : vector<4x11xf32> to vector<1x4x11xf32>
    %cst_108 = arith.constant dense<0.000000e+00> : vector<1xf32>
    %135 = vector.multi_reduction <add>, %134, %cst_108 [1, 2] : vector<1x4x11xf32> to vector<1xf32>
    %136 = vector.shape_cast %135 : vector<1xf32> to vector<1x1x1xf32>
    %137 = vector.extract %136[0, 0, 0] : f32 from vector<1x1x1xf32>
    %cst_109 = arith.constant 4.000000e+00 : f32
    %138 = arith.divf %137, %cst_109 : f32
    %139 = vector.shape_cast %120 : vector<4x11xf32> to vector<1x4x11xf32>
    %cst_110 = arith.constant dense<0.000000e+00> : vector<1xf32>
    %140 = vector.multi_reduction <add>, %139, %cst_110 [1, 2] : vector<1x4x11xf32> to vector<1xf32>
    %141 = vector.shape_cast %140 : vector<1xf32> to vector<1x1x1xf32>
    %142 = vector.extract %141[0, 0, 0] : f32 from vector<1x1x1xf32>
    %cst_111 = arith.constant 4.400000e+01 : f32
    %143 = arith.divf %142, %cst_111 : f32
    %c0_112 = arith.constant 0 : index
    %c0_113 = arith.constant 0 : index
    %144 = vector.load %arg5[%c0_112, %c0_113] : memref<4x44xf32, #tpu.memory_space<vmem>>, vector<4x44xf32>
    %cst_114 = arith.constant 0.000000e+00 : f32
    %145 = vector.broadcast %cst_114 : f32 to vector<4x44xf32>
    %146 = arith.maximumf %101, %145 : vector<4x44xf32>
    %147 = arith.mulf %101, %144 : vector<4x44xf32>
    %148 = arith.subf %146, %147 : vector<4x44xf32>
    %149 = math.absf %101 : vector<4x44xf32>
    %cst_115 = arith.constant 0.000000e+00 : f32
    %150 = vector.broadcast %cst_115 : f32 to vector<4x44xf32>
    %151 = arith.subf %150, %149 : vector<4x44xf32>
    %152 = math.exp %151 : vector<4x44xf32>
    %cst_116 = arith.constant 1.000000e+00 : f32
    %153 = vector.broadcast %cst_116 : f32 to vector<4x44xf32>
    %154 = arith.addf %153, %152 : vector<4x44xf32>
    %155 = math.log %154 : vector<4x44xf32>
    %156 = arith.addf %148, %155 : vector<4x44xf32>
    %157 = vector.shape_cast %156 : vector<4x44xf32> to vector<1x4x44xf32>
    %cst_117 = arith.constant dense<0.000000e+00> : vector<1xf32>
    %158 = vector.multi_reduction <add>, %157, %cst_117 [1, 2] : vector<1x4x44xf32> to vector<1xf32>
    %159 = vector.shape_cast %158 : vector<1xf32> to vector<1x1x1xf32>
    %160 = vector.extract %159[0, 0, 0] : f32 from vector<1x1x1xf32>
    %cst_118 = arith.constant 4.400000e+01 : f32
    %161 = arith.divf %160, %cst_118 : f32
    %c0_119 = arith.constant 0 : index
    %c0_120 = arith.constant 0 : index
    %162 = vector.load %arg6[%c0_119, %c0_120] : memref<4x22xf32, #tpu.memory_space<vmem>>, vector<4x22xf32>
    %cst_121 = arith.constant 0.000000e+00 : f32
    %163 = vector.broadcast %cst_121 : f32 to vector<4x22xf32>
    %164 = arith.maximumf %109, %163 : vector<4x22xf32>
    %165 = arith.mulf %109, %162 : vector<4x22xf32>
    %166 = arith.subf %164, %165 : vector<4x22xf32>
    %167 = math.absf %109 : vector<4x22xf32>
    %cst_122 = arith.constant 0.000000e+00 : f32
    %168 = vector.broadcast %cst_122 : f32 to vector<4x22xf32>
    %169 = arith.subf %168, %167 : vector<4x22xf32>
    %170 = math.exp %169 : vector<4x22xf32>
    %cst_123 = arith.constant 1.000000e+00 : f32
    %171 = vector.broadcast %cst_123 : f32 to vector<4x22xf32>
    %172 = arith.addf %171, %170 : vector<4x22xf32>
    %173 = math.log %172 : vector<4x22xf32>
    %174 = arith.addf %166, %173 : vector<4x22xf32>
    %175 = vector.shape_cast %174 : vector<4x22xf32> to vector<1x4x22xf32>
    %cst_124 = arith.constant dense<0.000000e+00> : vector<1xf32>
    %176 = vector.multi_reduction <add>, %175, %cst_124 [1, 2] : vector<1x4x22xf32> to vector<1xf32>
    %177 = vector.shape_cast %176 : vector<1xf32> to vector<1x1x1xf32>
    %178 = vector.extract %177[0, 0, 0] : f32 from vector<1x1x1xf32>
    %cst_125 = arith.constant 4.400000e+01 : f32
    %179 = arith.divf %178, %cst_125 : f32
    %180 = arith.addf %118, %85 : f32
    %cst_126 = arith.constant 0.00999999977 : f32
    %181 = arith.mulf %161, %cst_126 : f32
    %182 = arith.addf %180, %181 : f32
    %cst_127 = arith.constant 0.00999999977 : f32
    %183 = arith.mulf %179, %cst_127 : f32
    %184 = arith.addf %182, %183 : f32
    %185 = tpu.iota {dimensions = array<i32: 1>} : vector<1x128xi32>
    %cst_128 = arith.constant 0.000000e+00 : f32
    %186 = vector.broadcast %cst_128 : f32 to vector<1x128xf32>
    %c0_i32 = arith.constant 0 : i32
    %187 = vector.broadcast %c0_i32 : i32 to vector<1x128xi32>
    %188 = arith.cmpi eq, %185, %187 : vector<1x128xi32>
    %189 = vector.broadcast %184 : f32 to vector<1x128xf32>
    %190 = arith.select %188, %189, %186 : vector<1x128xi1>, vector<1x128xf32>
    %c1_i32 = arith.constant 1 : i32
    %191 = vector.broadcast %c1_i32 : i32 to vector<1x128xi32>
    %192 = arith.cmpi eq, %185, %191 : vector<1x128xi32>
    %193 = vector.broadcast %118 : f32 to vector<1x128xf32>
    %194 = arith.select %192, %193, %190 : vector<1x128xi1>, vector<1x128xf32>
    %c2_i32 = arith.constant 2 : i32
    %195 = vector.broadcast %c2_i32 : i32 to vector<1x128xi32>
    %196 = arith.cmpi eq, %185, %195 : vector<1x128xi32>
    %197 = vector.broadcast %85 : f32 to vector<1x128xf32>
    %198 = arith.select %196, %197, %194 : vector<1x128xi1>, vector<1x128xf32>
    %c3_i32 = arith.constant 3 : i32
    %199 = vector.broadcast %c3_i32 : i32 to vector<1x128xi32>
    %200 = arith.cmpi eq, %185, %199 : vector<1x128xi32>
    %201 = vector.broadcast %128 : f32 to vector<1x128xf32>
    %202 = arith.select %200, %201, %198 : vector<1x128xi1>, vector<1x128xf32>
    %c4_i32 = arith.constant 4 : i32
    %203 = vector.broadcast %c4_i32 : i32 to vector<1x128xi32>
    %204 = arith.cmpi eq, %185, %203 : vector<1x128xi32>
    %205 = vector.broadcast %138 : f32 to vector<1x128xf32>
    %206 = arith.select %204, %205, %202 : vector<1x128xi1>, vector<1x128xf32>
    %c5_i32 = arith.constant 5 : i32
    %207 = vector.broadcast %c5_i32 : i32 to vector<1x128xi32>
    %208 = arith.cmpi eq, %185, %207 : vector<1x128xi32>
    %209 = vector.broadcast %143 : f32 to vector<1x128xf32>
    %210 = arith.select %208, %209, %206 : vector<1x128xi1>, vector<1x128xf32>
    %c6_i32 = arith.constant 6 : i32
    %211 = vector.broadcast %c6_i32 : i32 to vector<1x128xi32>
    %212 = arith.cmpi eq, %185, %211 : vector<1x128xi32>
    %213 = vector.broadcast %161 : f32 to vector<1x128xf32>
    %214 = arith.select %212, %213, %210 : vector<1x128xi1>, vector<1x128xf32>
    %c7_i32 = arith.constant 7 : i32
    %215 = vector.broadcast %c7_i32 : i32 to vector<1x128xi32>
    %216 = arith.cmpi eq, %185, %215 : vector<1x128xi32>
    %217 = vector.broadcast %179 : f32 to vector<1x128xf32>
    %218 = arith.select %216, %217, %214 : vector<1x128xi1>, vector<1x128xf32>
    %c0_129 = arith.constant 0 : index
    %c0_130 = arith.constant 0 : index
    %219 = vector.load %arg40[%c0_129, %c0_130] : memref<1x128xf32, #tpu.memory_space<vmem>>, vector<1x128xf32>
    tpu.vector_store %arg40[%c0_129, %c0_130], %218 {strides = array<i32>} : memref<1x128xf32, #tpu.memory_space<vmem>>, vector<1x128xf32>,
    return
  }
}

</mosaic_0001>

<llo_original>
// kernel: tscvae_forward.1
$region0: #{tscvae_forward.1}
  #allocation0 [shape = 'u32[]', space=smem, size = 0x4, offset = 0x4, fixed_abs, tag = 'smem constant byte address 0x4 - core index']
  #allocation1 [shape = 'u32[144,128]{1,0:T(1,128)}', space=vmem, size = 0x12000, scoped, tag = 'internal scratch']
  %s0 = inlined_call_operand.smem [shape: u32[41], index: -1, kind: input, shape index: {}]
  %s1 = sld [smem:[%s0]]
  %s2 = scalar_lea.smem %s0, 1
  %s3 = sld [smem:[%s2]]
  %s4 = scalar_lea.smem %s0, 2
  %s5 = sld [smem:[%s4]]
  %s6 = scalar_lea.smem %s0, 3
  %s7 = sld [smem:[%s6]]
  %s8 = scalar_lea.smem %s0, 4
  %s9 = sld [smem:[%s8]]
  %s10 = scalar_lea.smem %s0, 5
  %s11 = sld [smem:[%s10]]
  %s12 = scalar_lea.smem %s0, 6
  %s13 = sld [smem:[%s12]]
  %s14 = scalar_lea.smem %s0, 7
  %s15 = sld [smem:[%s14]]
  %s16 = scalar_lea.smem %s0, 8
  %s17 = sld [smem:[%s16]]
  %s18 = scalar_lea.smem %s0, 9
  %s19 = sld [smem:[%s18]]
  %s20 = scalar_lea.smem %s0, 10
  %s21 = sld [smem:[%s20]]
  %s22 = scalar_lea.smem %s0, 11
  %s23 = sld [smem:[%s22]]
  %s24 = scalar_lea.smem %s0, 12
  %s25 = sld [smem:[%s24]]
  %s26 = scalar_lea.smem %s0, 13
  %s27 = sld [smem:[%s26]]
  %s28 = scalar_lea.smem %s0, 14
  %s29 = sld [smem:[%s28]]
  %s30 = scalar_lea.smem %s0, 15
  %s31 = sld [smem:[%s30]]
  %s32 = scalar_lea.smem %s0, 16
  %s33 = sld [smem:[%s32]]
  %s34 = scalar_lea.smem %s0, 17
  %s35 = sld [smem:[%s34]]
  %s36 = scalar_lea.smem %s0, 18
  %s37 = sld [smem:[%s36]]
  %s38 = scalar_lea.smem %s0, 19
  %s39 = sld [smem:[%s38]]
  %s40 = scalar_lea.smem %s0, 20
  %s41 = sld [smem:[%s40]]
  %s42 = scalar_lea.smem %s0, 21
  %s43 = sld [smem:[%s42]]
  %s44 = scalar_lea.smem %s0, 22
  %s45 = sld [smem:[%s44]]
  %s46 = scalar_lea.smem %s0, 23
  %s47 = sld [smem:[%s46]]
  %s48 = scalar_lea.smem %s0, 24
  %s49 = sld [smem:[%s48]]
  %s50 = scalar_lea.smem %s0, 25
  %s51 = sld [smem:[%s50]]
  %s52 = scalar_lea.smem %s0, 26
  %s53 = sld [smem:[%s52]]
  %s54 = scalar_lea.smem %s0, 27
  %s55 = sld [smem:[%s54]]
  %s56 = scalar_lea.smem %s0, 28
  %s57 = sld [smem:[%s56]]
  %s58 = scalar_lea.smem %s0, 29
  %s59 = sld [smem:[%s58]]
  %s60 = scalar_lea.smem %s0, 30
  %s61 = sld [smem:[%s60]]
  %s62 = scalar_lea.smem %s0, 31
  %s63 = sld [smem:[%s62]]
  %s64 = scalar_lea.smem %s0, 32
  %s65 = sld [smem:[%s64]]
  %s66 = scalar_lea.smem %s0, 33
  %s67 = sld [smem:[%s66]]
  %s68 = scalar_lea.smem %s0, 34
  %s69 = sld [smem:[%s68]]
  %s70 = scalar_lea.smem %s0, 35
  %s71 = sld [smem:[%s70]]
  %s72 = scalar_lea.smem %s0, 36
  %s73 = sld [smem:[%s72]]
  %s74 = scalar_lea.smem %s0, 37
  %s75 = sld [smem:[%s74]]
  %s76 = scalar_lea.smem %s0, 38
  %s77 = sld [smem:[%s76]]
  %s78 = scalar_lea.smem %s0, 39
  %s79 = sld [smem:[%s78]]
  %s80 = scalar_lea.smem %s0, 40
  %s81 = sld [smem:[%s80]]
  %s82 = sld [smem:[#allocation0]]
  $region170: #{tscvae_forward.1} parent=0
    _
  %s84 = ssub.s32 1, %s82
  %s85 = scalar_select 0, %s84, %s82
  // Predicated region
  $region2: #{tscvae_forward.1} parent=0 // pred_check
    _
  $region3: #{tscvae_forward.1} parent=0 // pred_check_branch
    %87 = sbr.rel (0) target = $region5
  $region4: #{tscvae_forward.1} parent=0 // pred_region
    _
  $region5: #{tscvae_forward.1} parent=0 // pred_fallthru
    _
  // Predicated region
  $region6: #{tscvae_forward.1} parent=0 // pred_check
    _
  $region7: #{tscvae_forward.1} parent=0 // pred_check_branch
    %89 = sbr.rel (0) target = $region9
  $region8: #{tscvae_forward.1} parent=0 // pred_region
    _
  $region9: #{tscvae_forward.1} parent=0 // pred_fallthru
    _
  // Predicated region
  $region10: #{tscvae_forward.1} parent=0 // pred_check
    _
  $region11: #{tscvae_forward.1} parent=0 // pred_check_branch
    %91 = sbr.rel (0) target = $region13
  $region12: #{tscvae_forward.1} parent=0 // pred_region
    _
  $region13: #{tscvae_forward.1} parent=0 // pred_fallthru
    _
  // Predicated region
  $region14: #{tscvae_forward.1} parent=0 // pred_check
    _
  $region15: #{tscvae_forward.1} parent=0 // pred_check_branch
    %93 = sbr.rel (0) target = $region17
  $region16: #{tscvae_forward.1} parent=0 // pred_region
    _
  $region17: #{tscvae_forward.1} parent=0 // pred_fallthru
    _
  // Predicated region
  $region18: #{tscvae_forward.1} parent=0 // pred_check
    _
  $region19: #{tscvae_forward.1} parent=0 // pred_check_branch
    %95 = sbr.rel (0) target = $region21
  $region20: #{tscvae_forward.1} parent=0 // pred_region
    _
  $region21: #{tscvae_forward.1} parent=0 // pred_fallthru
    _
  // Predicated region
  $region22: #{tscvae_forward.1} parent=0 // pred_check
    _
  $region23: #{tscvae_forward.1} parent=0 // pred_check_branch
    %97 = sbr.rel (0) target = $region25
  $region24: #{tscvae_forward.1} parent=0 // pred_region
    _
  $region25: #{tscvae_forward.1} parent=0 // pred_fallthru
    _
  // Predicated region
  $region26: #{tscvae_forward.1} parent=0 // pred_check
    _
  $region27: #{tscvae_forward.1} parent=0 // pred_check_branch
    %99 = sbr.rel (0) target = $region29
  $region28: #{tscvae_forward.1} parent=0 // pred_region
    _
  $region29: #{tscvae_forward.1} parent=0 // pred_fallthru
    _
  // Predicated region
  $region30: #{tscvae_forward.1} parent=0 // pred_check
    _
  $region31: #{tscvae_forward.1} parent=0 // pred_check_branch
    %101 = sbr.rel (0) target = $region33
  $region32: #{tscvae_forward.1} parent=0 // pred_region
    _
  $region33: #{tscvae_forward.1} parent=0 // pred_fallthru
    _
  // Predicated region
  $region34: #{tscvae_forward.1} parent=0 // pred_check
    _
  $region35: #{tscvae_forward.1} parent=0 // pred_check_branch
    %103 = sbr.rel (0) target = $region37
  $region36: #{tscvae_forward.1} parent=0 // pred_region
    _
  $region37: #{tscvae_forward.1} parent=0 // pred_fallthru
    _
  // Predicated region
  $region38: #{tscvae_forward.1} parent=0 // pred_check
    _
  $region39: #{tscvae_forward.1} parent=0 // pred_check_branch
    %105 = sbr.rel (0) target = $region41
  $region40: #{tscvae_forward.1} parent=0 // pred_region
    _
  $region41: #{tscvae_forward.1} parent=0 // pred_fallthru
    _
  // Predicated region
  $region42: #{tscvae_forward.1} parent=0 // pred_check
    _
  $region43: #{tscvae_forward.1} parent=0 // pred_check_branch
    %107 = sbr.rel (0) target = $region45
  $region44: #{tscvae_forward.1} parent=0 // pred_region
    _
  $region45: #{tscvae_forward.1} parent=0 // pred_fallthru
    _
  // Predicated region
  $region46: #{tscvae_forward.1} parent=0 // pred_check
    _
  $region47: #{tscvae_forward.1} parent=0 // pred_check_branch
    %109 = sbr.rel (0) target = $region49
  $region48: #{tscvae_forward.1} parent=0 // pred_region
    _
  $region49: #{tscvae_forward.1} parent=0 // pred_fallthru
    _
  // Predicated region
  $region50: #{tscvae_forward.1} parent=0 // pred_check
    _
  $region51: #{tscvae_forward.1} parent=0 // pred_check_branch
    %111 = sbr.rel (0) target = $region53
  $region52: #{tscvae_forward.1} parent=0 // pred_region
    _
  $region53: #{tscvae_forward.1} parent=0 // pred_fallthru
    _
  // Predicated region
  $region54: #{tscvae_forward.1} parent=0 // pred_check
    _
  $region55: #{tscvae_forward.1} parent=0 // pred_check_branch
    %113 = sbr.rel (0) target = $region57
  $region56: #{tscvae_forward.1} parent=0 // pred_region
    _
  $region57: #{tscvae_forward.1} parent=0 // pred_fallthru
    _
  // Predicated region
  $region58: #{tscvae_forward.1} parent=0 // pred_check
    _
  $region59: #{tscvae_forward.1} parent=0 // pred_check_branch
    %115 = sbr.rel (0) target = $region61
  $region60: #{tscvae_forward.1} parent=0 // pred_region
    _
  $region61: #{tscvae_forward.1} parent=0 // pred_fallthru
    _
  // Predicated region
  $region62: #{tscvae_forward.1} parent=0 // pred_check
    _
  $region63: #{tscvae_forward.1} parent=0 // pred_check_branch
    %117 = sbr.rel (0) target = $region65
  $region64: #{tscvae_forward.1} parent=0 // pred_region
    _
  $region65: #{tscvae_forward.1} parent=0 // pred_fallthru
    _
  // Predicated region
  $region66: #{tscvae_forward.1} parent=0 // pred_check
    _
  $region67: #{tscvae_forward.1} parent=0 // pred_check_branch
    %119 = sbr.rel (0) target = $region69
  $region68: #{tscvae_forward.1} parent=0 // pred_region
    _
  $region69: #{tscvae_forward.1} parent=0 // pred_fallthru
    _
  // Predicated region
  $region70: #{tscvae_forward.1} parent=0 // pred_check
    _
  $region71: #{tscvae_forward.1} parent=0 // pred_check_branch
    %121 = sbr.rel (0) target = $region73
  $region72: #{tscvae_forward.1} parent=0 // pred_region
    _
  $region73: #{tscvae_forward.1} parent=0 // pred_fallthru
    _
  // Predicated region
  $region74: #{tscvae_forward.1} parent=0 // pred_check
    _
  $region75: #{tscvae_forward.1} parent=0 // pred_check_branch
    %123 = sbr.rel (0) target = $region77
  $region76: #{tscvae_forward.1} parent=0 // pred_region
    _
  $region77: #{tscvae_forward.1} parent=0 // pred_fallthru
    _
  // Predicated region
  $region78: #{tscvae_forward.1} parent=0 // pred_check
    _
  $region79: #{tscvae_forward.1} parent=0 // pred_check_branch
    %125 = sbr.rel (0) target = $region81
  $region80: #{tscvae_forward.1} parent=0 // pred_region
    _
  $region81: #{tscvae_forward.1} parent=0 // pred_fallthru
    _
  // Predicated region
  $region82: #{tscvae_forward.1} parent=0 // pred_check
    _
  $region83: #{tscvae_forward.1} parent=0 // pred_check_branch
    %127 = sbr.rel (0) target = $region85
  $region84: #{tscvae_forward.1} parent=0 // pred_region
    _
  $region85: #{tscvae_forward.1} parent=0 // pred_fallthru
    _
  // Predicated region
  $region86: #{tscvae_forward.1} parent=0 // pred_check
    _
  $region87: #{tscvae_forward.1} parent=0 // pred_check_branch
    %129 = sbr.rel (0) target = $region89
  $region88: #{tscvae_forward.1} parent=0 // pred_region
    _
  $region89: #{tscvae_forward.1} parent=0 // pred_fallthru
    _
  // Predicated region
  $region90: #{tscvae_forward.1} parent=0 // pred_check
    _
  $region91: #{tscvae_forward.1} parent=0 // pred_check_branch
    %131 = sbr.rel (0) target = $region93
  $region92: #{tscvae_forward.1} parent=0 // pred_region
    _
  $region93: #{tscvae_forward.1} parent=0 // pred_fallthru
    _
  // Predicated region
  $region94: #{tscvae_forward.1} parent=0 // pred_check
    _
  $region95: #{tscvae_forward.1} parent=0 // pred_check_branch
    %133 = sbr.rel (0) target = $region97
  $region96: #{tscvae_forward.1} parent=0 // pred_region
    _
  $region97: #{tscvae_forward.1} parent=0 // pred_fallthru
    _
  // Predicated region
  $region98: #{tscvae_forward.1} parent=0 // pred_check
    _
  $region99: #{tscvae_forward.1} parent=0 // pred_check_branch
    %135 = sbr.rel (0) target = $region101
  $region100: #{tscvae_forward.1} parent=0 // pred_region
    _
  $region101: #{tscvae_forward.1} parent=0 // pred_fallthru
    _
  // Predicated region
  $region102: #{tscvae_forward.1} parent=0 // pred_check
    _
  $region103: #{tscvae_forward.1} parent=0 // pred_check_branch
    %137 = sbr.rel (0) target = $region105
  $region104: #{tscvae_forward.1} parent=0 // pred_region
    _
  $region105: #{tscvae_forward.1} parent=0 // pred_fallthru
    _
  // Predicated region
  $region106: #{tscvae_forward.1} parent=0 // pred_check
    _
  $region107: #{tscvae_forward.1} parent=0 // pred_check_branch
    %139 = sbr.rel (0) target = $region109
  $region108: #{tscvae_forward.1} parent=0 // pred_region
    _
  $region109: #{tscvae_forward.1} parent=0 // pred_fallthru
    _
  // Predicated region
  $region110: #{tscvae_forward.1} parent=0 // pred_check
    _
  $region111: #{tscvae_forward.1} parent=0 // pred_check_branch
    %141 = sbr.rel (0) target = $region113
  $region112: #{tscvae_forward.1} parent=0 // pred_region
    _
  $region113: #{tscvae_forward.1} parent=0 // pred_fallthru
    _
  // Predicated region
  $region114: #{tscvae_forward.1} parent=0 // pred_check
    _
  $region115: #{tscvae_forward.1} parent=0 // pred_check_branch
    %143 = sbr.rel (0) target = $region117
  $region116: #{tscvae_forward.1} parent=0 // pred_region
    _
  $region117: #{tscvae_forward.1} parent=0 // pred_fallthru
    _
  // Predicated region
  $region118: #{tscvae_forward.1} parent=0 // pred_check
    _
  $region119: #{tscvae_forward.1} parent=0 // pred_check_branch
    %145 = sbr.rel (0) target = $region121
  $region120: #{tscvae_forward.1} parent=0 // pred_region
    _
  $region121: #{tscvae_forward.1} parent=0 // pred_fallthru
    _
  // Predicated region
  $region122: #{tscvae_forward.1} parent=0 // pred_check
    _
  $region123: #{tscvae_forward.1} parent=0 // pred_check_branch
    %147 = sbr.rel (0) target = $region125
  $region124: #{tscvae_forward.1} parent=0 // pred_region
    _
  $region125: #{tscvae_forward.1} parent=0 // pred_fallthru
    _
  // Predicated region
  $region126: #{tscvae_forward.1} parent=0 // pred_check
    _
  $region127: #{tscvae_forward.1} parent=0 // pred_check_branch
    %149 = sbr.rel (0) target = $region129
  $region128: #{tscvae_forward.1} parent=0 // pred_region
    _
  $region129: #{tscvae_forward.1} parent=0 // pred_fallthru
    _
  // Predicated region
  $region130: #{tscvae_forward.1} parent=0 // pred_check
    _
  $region131: #{tscvae_forward.1} parent=0 // pred_check_branch
    %151 = sbr.rel (0) target = $region133
  $region132: #{tscvae_forward.1} parent=0 // pred_region
    _
  $region133: #{tscvae_forward.1} parent=0 // pred_fallthru
    _
  // Predicated region
  $region134: #{tscvae_forward.1} parent=0 // pred_check
    _
  $region135: #{tscvae_forward.1} parent=0 // pred_check_branch
    %153 = sbr.rel (0) target = $region137
  $region136: #{tscvae_forward.1} parent=0 // pred_region
    _
  $region137: #{tscvae_forward.1} parent=0 // pred_fallthru
    _
  // Predicated region
  $region138: #{tscvae_forward.1} parent=0 // pred_check
    _
  $region139: #{tscvae_forward.1} parent=0 // pred_check_branch
    %155 = sbr.rel (0) target = $region141
  $region140: #{tscvae_forward.1} parent=0 // pred_region
    _
  $region141: #{tscvae_forward.1} parent=0 // pred_fallthru
    _
  // Predicated region
  $region142: #{tscvae_forward.1} parent=0 // pred_check
    _
  $region143: #{tscvae_forward.1} parent=0 // pred_check_branch
    %157 = sbr.rel (0) target = $region145
  $region144: #{tscvae_forward.1} parent=0 // pred_region
    _
  $region145: #{tscvae_forward.1} parent=0 // pred_fallthru
    _
  // Predicated region
  $region146: #{tscvae_forward.1} parent=0 // pred_check
    _
  $region147: #{tscvae_forward.1} parent=0 // pred_check_branch
    %159 = sbr.rel (0) target = $region149
  $region148: #{tscvae_forward.1} parent=0 // pred_region
    _
  $region149: #{tscvae_forward.1} parent=0 // pred_fallthru
    _
  // Predicated region
  $region150: #{tscvae_forward.1} parent=0 // pred_check
    _
  $region151: #{tscvae_forward.1} parent=0 // pred_check_branch
    %161 = sbr.rel (0) target = $region153
  $region152: #{tscvae_forward.1} parent=0 // pred_region
    _
  $region153: #{tscvae_forward.1} parent=0 // pred_fallthru
    _
  // Predicated region
  $region154: #{tscvae_forward.1} parent=0 // pred_check
    _
  $region155: #{tscvae_forward.1} parent=0 // pred_check_branch
    %163 = sbr.rel (0) target = $region157
  $region156: #{tscvae_forward.1} parent=0 // pred_region
    _
  $region157: #{tscvae_forward.1} parent=0 // pred_fallthru
    _
  // Predicated region
  $region158: #{tscvae_forward.1} parent=0 // pred_check
    _
  $region159: #{tscvae_forward.1} parent=0 // pred_check_branch
    %165 = sbr.rel (0) target = $region161
  $region160: #{tscvae_forward.1} parent=0 // pred_region
    _
  $region161: #{tscvae_forward.1} parent=0 // pred_fallthru
    _
  %v166 = vld [vmem:[%s1] sm:$0xf]
  %v167 = vld [vmem:[%s3] sm:$0xf]
  %v168 = vld [vmem:[%s5] sm:$0xf]
  %v169 = vld [vmem:[%s7] sm:$0xf]
  %v170 = vld [vmem:[%s19] sm:$0xff]
  %v171 = vld [vmem:[%s19 + $0x8] sm:$0xff]
  %v172 = vld [vmem:[%s19 + $0x10] sm:$0xff]
  %v173 = vld [vmem:[%s19 + $0x18] sm:$0xff]
  %v174 = vld [vmem:[%s19 + $0x20] sm:$0xff]
  %v175 = vld [vmem:[%s19 + $0x28] sm:$0xff]
  %v176 = vld [vmem:[%s21] sm:$0xff]
  %v177 = vld [vmem:[%s21 + $0x8] sm:$0xff]
  %v178 = vld [vmem:[%s21 + $0x10] sm:$0xff]
  %v179 = vld [vmem:[%s21 + $0x18] sm:$0xff]
  %v180 = vld [vmem:[%s21 + $0x20] sm:$0xff]
  %v181 = vld [vmem:[%s21 + $0x28] sm:$0xff]
  %v182 = vld [vmem:[%s21 + $0x30] sm:$0xff]
  %v183 = vld [vmem:[%s21 + $0x38] sm:$0xff]
  %v184 = vld [vmem:[%s21 + $0x40] sm:$0xff]
  %v185 = vld [vmem:[%s21 + $0x48] sm:$0xff]
  %v186 = vld [vmem:[%s21 + $0x50] sm:$0xff]
  %v187 = vld [vmem:[%s21 + $0x58] sm:$0xff]
  %vm188 = vcmask 392192
  %v190 = vsel %vm188, %v167, 0
  %192 = vmatprep.subr.mxu0 %v177
  %193 = vmatpush1.msra.mxu0 %v176
  %194 = vmatprep.subr.mxu0 %v179
  %195 = vmatpush1.msra.mxu0 %v178
  %196 = vmatprep.subr.mxu0 %v181
  %197 = vmatpush1.msra.mxu0 %v180
  %198 = vmatprep.subr.mxu0 %v183
  %199 = vmatpush1.msra.mxu0 %v182
  %200 = vmatprep.subr.mxu0 %v185
  %201 = vmatpush1.msra.mxu0 %v184
  %202 = vmatprep.subr.mxu0 %v187
  %203 = vmatpush1.msra.mxu0 %v186
  %204 = vmatprep.subr.mxu0 0.0
  %205 = vmatpush1.msra.mxu0 0.0
  %206 = vmatprep.subr.mxu0 0.0
  %207 = vmatpush1.msra.mxu0 0.0
  %208 = vmatprep.subr.mxu0 0.0
  %209 = vmatpush1.msra.mxu0 0.0
  %210 = vmatprep.subr.mxu0 0.0
  %211 = vmatpush1.msra.mxu0 0.0
  %212 = vmatprep.subr.mxu0 0.0
  %213 = vmatpush1.msra.mxu0 0.0
  %214 = vmatprep.subr.mxu0 0.0
  %215 = vmatpush1.msra.mxu0 0.0
  %216 = vmatprep.subr.mxu0 0.0
  %217 = vmatpush1.msra.mxu0 0.0
  %218 = vmatprep.subr.mxu0 0.0
  %219 = vmatpush1.msra.mxu0 0.0
  %220 = vmatprep.subr.mxu0 0.0
  %221 = vmatpush1.msra.mxu0 0.0
  %222 = vmatprep.subr.mxu0 0.0
  %223 = vmatpush1.msra.mxu0 0.0
  %224 = vmatprep.subr.mxu0 0.0
  %225 = vmatpush1.msra.mxu0 0.0
  %226 = vmatprep.subr.mxu0 0.0
  %227 = vmatpush1.msra.mxu0 0.0
  %228 = vmatprep.subr.mxu0 0.0
  %229 = vmatpush1.msra.mxu0 0.0
  %230 = vmatprep.subr.mxu0 0.0
  %231 = vmatpush1.msra.mxu0 0.0
  %232 = vmatprep.subr.mxu0 0.0
  %233 = vmatpush1.msra.mxu0 0.0
  %234 = vmatprep.subr.mxu0 0.0
  %235 = vmatpush1.msra.mxu0 0.0
  %236 = vmatprep.subr.mxu0 0.0
  %237 = vmatpush1.msra.mxu0 0.0
  %238 = vmatprep.subr.mxu0 0.0
  %239 = vmatpush1.msra.mxu0 0.0
  %240 = vmatprep.subr.mxu0 0.0
  %241 = vmatpush1.msra.mxu0 0.0
  %242 = vmatprep.subr.mxu0 0.0
  %243 = vmatpush1.msra.mxu0 0.0
  %244 = vmatprep.subr.mxu0 0.0
  %245 = vmatpush1.msra.mxu0 0.0
  %246 = vmatprep.subr.mxu0 0.0
  %247 = vmatpush1.msra.mxu0 0.0
  %248 = vmatprep.subr.mxu0 0.0
  %249 = vmatpush1.msra.mxu0 0.0
  %250 = vmatprep.subr.mxu0 0.0
  %251 = vmatpush1.msra.mxu0 0.0
  %252 = vmatprep.subr.mxu0 0.0
  %253 = vmatpush1.msra.mxu0 0.0
  %254 = vmatprep.subr.mxu0 0.0
  %255 = vmatpush1.msra.mxu0 0.0
  %256 = vmatprep.mubr.f32.mxu0 0.0
  %257 = vmatmul.mubr.f32.gmra.mrb[0].mxu0 %v190
  %v258 = vpop.f32.mrb[0].mxu0
  %v259 = vadd.f32 0.0, %v258
  %v260 = vpop.f32.mrb[0].mxu0
  %v261 = vadd.f32 0.0, %v260
  %262 = vdwg.mxu0
  %vm263 = vcmask 195584
  %v265 = vsel %vm263, %v166, 0
  %267 = vmatprep.subr.mxu0 %v171
  %268 = vmatpush1.msra.mxu0 %v170
  %269 = vmatprep.subr.mxu0 %v173
  %270 = vmatpush1.msra.mxu0 %v172
  %271 = vmatprep.subr.mxu0 %v175
  %272 = vmatpush1.msra.mxu0 %v174
  %273 = vmatprep.subr.mxu0 0.0
  %274 = vmatpush1.msra.mxu0 0.0
  %275 = vmatprep.subr.mxu0 0.0
  %276 = vmatpush1.msra.mxu0 0.0
  %277 = vmatprep.subr.mxu0 0.0
  %278 = vmatpush1.msra.mxu0 0.0
  %279 = vmatprep.subr.mxu0 0.0
  %280 = vmatpush1.msra.mxu0 0.0
  %281 = vmatprep.subr.mxu0 0.0
  %282 = vmatpush1.msra.mxu0 0.0
  %283 = vmatprep.subr.mxu0 0.0
  %284 = vmatpush1.msra.mxu0 0.0
  %285 = vmatprep.subr.mxu0 0.0
  %286 = vmatpush1.msra.mxu0 0.0
  %287 = vmatprep.subr.mxu0 0.0
  %288 = vmatpush1.msra.mxu0 0.0
  %289 = vmatprep.subr.mxu0 0.0
  %290 = vmatpush1.msra.mxu0 0.0
  %291 = vmatprep.subr.mxu0 0.0
  %292 = vmatpush1.msra.mxu0 0.0
  %293 = vmatprep.subr.mxu0 0.0
  %294 = vmatpush1.msra.mxu0 0.0
  %295 = vmatprep.subr.mxu0 0.0
  %296 = vmatpush1.msra.mxu0 0.0
  %297 = vmatprep.subr.mxu0 0.0
  %298 = vmatpush1.msra.mxu0 0.0
  %299 = vmatprep.subr.mxu0 0.0
  %300 = vmatpush1.msra.mxu0 0.0
  %301 = vmatprep.subr.mxu0 0.0
  %302 = vmatpush1.msra.mxu0 0.0
  %303 = vmatprep.subr.mxu0 0.0
  %304 = vmatpush1.msra.mxu0 0.0
  %305 = vmatprep.subr.mxu0 0.0
  %306 = vmatpush1.msra.mxu0 0.0
  %307 = vmatprep.subr.mxu0 0.0
  %308 = vmatpush1.msra.mxu0 0.0
  %309 = vmatprep.subr.mxu0 0.0
  %310 = vmatpush1.msra.mxu0 0.0
  %311 = vmatprep.subr.mxu0 0.0
  %312 = vmatpush1.msra.mxu0 0.0
  %313 = vmatprep.subr.mxu0 0.0
  %314 = vmatpush1.msra.mxu0 0.0
  %315 = vmatprep.subr.mxu0 0.0
  %316 = vmatpush1.msra.mxu0 0.0
  %317 = vmatprep.subr.mxu0 0.0
  %318 = vmatpush1.msra.mxu0 0.0
  %319 = vmatprep.subr.mxu0 0.0
  %320 = vmatpush1.msra.mxu0 0.0
  %321 = vmatprep.subr.mxu0 0.0
  %322 = vmatpush1.msra.mxu0 0.0
  %323 = vmatprep.subr.mxu0 0.0
  %324 = vmatpush1.msra.mxu0 0.0
  %325 = vmatprep.subr.mxu0 0.0
  %326 = vmatpush1.msra.mxu0 0.0
  %327 = vmatprep.subr.mxu0 0.0
  %328 = vmatpush1.msra.mxu0 0.0
  %329 = vmatprep.subr.mxu0 0.0
  %330 = vmatpush1.msra.mxu0 0.0
  %331 = vmatprep.mubr.f32.mxu0 0.0
  %332 = vmatmul.mubr.f32.gmra.mrb[0].mxu0 %v265
  %v333 = vpop.f32.mrb[0].mxu0
  %v334 = vadd.f32 %v259, %v333
  %v335 = vpop.f32.mrb[0].mxu0
  %v336 = vadd.f32 %v261, %v335
  %337 = vdwg.mxu0
  %v338 = vld [vmem:[%s23] sm:$0x3]
  %v340 = vlaneseq
  %v341 = vshrl.u32 %v340, 7
  %v342 = vsub.s32 0, %v341
  %v343 = vrot.slane %v338, %v342
  %v344 = vlaneseq
  %v345 = vshrl.u32 %v344, 7
  %v346 = vsub.s32 1, %v345
  %v347 = vrot.slane %v338, %v346
  %v350 = vadd.f32 %v334, %v343
  %v351 = vadd.f32 %v336, %v347
  %v352 = vld [vmem:[%s25] sm:$0xff]
  %v353 = vld [vmem:[%s25 + $0x8] sm:$0xff]
  %v354 = vld [vmem:[%s25 + $0x10] sm:$0xff]
  %v355 = vld [vmem:[%s27] sm:$0xff]
  %v356 = vld [vmem:[%s27 + $0x8] sm:$0xff]
  %v357 = vld [vmem:[%s27 + $0x10] sm:$0xff]
  %v358 = vld [vmem:[%s27 + $0x18] sm:$0xff]
  %v359 = vld [vmem:[%s27 + $0x20] sm:$0xff]
  %v360 = vld [vmem:[%s27 + $0x28] sm:$0xff]
  %v361 = vld [vmem:[%s27 + $0x30] sm:$0xff]
  %v362 = vld [vmem:[%s27 + $0x38] sm:$0xff]
  %v363 = vld [vmem:[%s27 + $0x40] sm:$0xff]
  %v364 = vld [vmem:[%s27 + $0x48] sm:$0xff]
  %v365 = vld [vmem:[%s27 + $0x50] sm:$0xff]
  %v366 = vld [vmem:[%s27 + $0x58] sm:$0xff]
  %v367 = vld [vmem:[%s27 + $0x60] sm:$0xff]
  %v368 = vld [vmem:[%s27 + $0x68] sm:$0xff]
  %v369 = vld [vmem:[%s27 + $0x70] sm:$0xff]
  %v370 = vld [vmem:[%s27 + $0x78] sm:$0xff]
  %v371 = vld [vmem:[%s27 + $0x80] sm:$0xff]
  %v372 = vld [vmem:[%s27 + $0x88] sm:$0xff]
  %v373 = vld [vmem:[%s27 + $0x90] sm:$0xff]
  %v374 = vld [vmem:[%s27 + $0x98] sm:$0xff]
  %v375 = vld [vmem:[%s27 + $0xa0] sm:$0xff]
  %v376 = vld [vmem:[%s27 + $0xa8] sm:$0xff]
  %v377 = vld [vmem:[%s27 + $0xb0] sm:$0xff]
  %v378 = vld [vmem:[%s27 + $0xb8] sm:$0xff]
  %vm379 = vcmask 523264
  %v381 = vsel %vm379, %v351, 0
  %383 = vmatprep.subr.mxu0 0.0
  %384 = vmatpush1.msra.mxu0 %v355
  %385 = vmatprep.subr.mxu0 0.0
  %386 = vmatpush1.msra.mxu0 %v356
  %387 = vmatprep.subr.mxu0 0.0
  %388 = vmatpush1.msra.mxu0 %v357
  %389 = vmatprep.subr.mxu0 0.0
  %390 = vmatpush1.msra.mxu0 %v358
  %391 = vmatprep.subr.mxu0 0.0
  %392 = vmatpush1.msra.mxu0 %v359
  %393 = vmatprep.subr.mxu0 0.0
  %394 = vmatpush1.msra.mxu0 %v360
  %395 = vmatprep.subr.mxu0 0.0
  %396 = vmatpush1.msra.mxu0 %v361
  %397 = vmatprep.subr.mxu0 0.0
  %398 = vmatpush1.msra.mxu0 %v362
  %399 = vmatprep.subr.mxu0 0.0
  %400 = vmatpush1.msra.mxu0 %v363
  %401 = vmatprep.subr.mxu0 0.0
  %402 = vmatpush1.msra.mxu0 %v364
  %403 = vmatprep.subr.mxu0 0.0
  %404 = vmatpush1.msra.mxu0 %v365
  %405 = vmatprep.subr.mxu0 0.0
  %406 = vmatpush1.msra.mxu0 %v366
  %407 = vmatprep.subr.mxu0 0.0
  %408 = vmatpush1.msra.mxu0 %v367
  %409 = vmatprep.subr.mxu0 0.0
  %410 = vmatpush1.msra.mxu0 %v368
  %411 = vmatprep.subr.mxu0 0.0
  %412 = vmatpush1.msra.mxu0 %v369
  %413 = vmatprep.subr.mxu0 0.0
  %414 = vmatpush1.msra.mxu0 %v370
  %415 = vmatprep.subr.mxu0 0.0
  %416 = vmatpush1.msra.mxu0 %v371
  %417 = vmatprep.subr.mxu0 0.0
  %418 = vmatpush1.msra.mxu0 %v372
  %419 = vmatprep.subr.mxu0 0.0
  %420 = vmatpush1.msra.mxu0 %v373
  %421 = vmatprep.subr.mxu0 0.0
  %422 = vmatpush1.msra.mxu0 %v374
  %423 = vmatprep.subr.mxu0 0.0
  %424 = vmatpush1.msra.mxu0 %v375
  %425 = vmatprep.subr.mxu0 0.0
  %426 = vmatpush1.msra.mxu0 %v376
  %427 = vmatprep.subr.mxu0 0.0
  %428 = vmatpush1.msra.mxu0 %v377
  %429 = vmatprep.subr.mxu0 0.0
  %430 = vmatpush1.msra.mxu0 %v378
  %431 = vmatprep.subr.mxu0 0.0
  %432 = vmatpush1.msra.mxu0 0.0
  %433 = vmatprep.subr.mxu0 0.0
  %434 = vmatpush1.msra.mxu0 0.0
  %435 = vmatprep.subr.mxu0 0.0
  %436 = vmatpush1.msra.mxu0 0.0
  %437 = vmatprep.subr.mxu0 0.0
  %438 = vmatpush1.msra.mxu0 0.0
  %439 = vmatprep.subr.mxu0 0.0
  %440 = vmatpush1.msra.mxu0 0.0
  %441 = vmatprep.subr.mxu0 0.0
  %442 = vmatpush1.msra.mxu0 0.0
  %443 = vmatprep.subr.mxu0 0.0
  %444 = vmatpush1.msra.mxu0 0.0
  %445 = vmatprep.subr.mxu0 0.0
  %446 = vmatpush1.msra.mxu0 0.0
  %447 = vmatprep.mubr.f32.mxu0 %v381
  %448 = vmatmul.mubr.f32.gmra.mrb[0].mxu0 %v350
  %v449 = vpop.f32.mrb[0].mxu0
  %v450 = vadd.f32 0.0, %v449
  %v451 = vpop.f32.mrb[0].mxu0
  %452 = vdwg.mxu0
  %453 = vmatprep.subr.mxu0 0.0
  %454 = vmatpush1.msra.mxu0 %v352
  %455 = vmatprep.subr.mxu0 0.0
  %456 = vmatpush1.msra.mxu0 %v353
  %457 = vmatprep.subr.mxu0 0.0
  %458 = vmatpush1.msra.mxu0 %v354
  %459 = vmatprep.subr.mxu0 0.0
  %460 = vmatpush1.msra.mxu0 0.0
  %461 = vmatprep.subr.mxu0 0.0
  %462 = vmatpush1.msra.mxu0 0.0
  %463 = vmatprep.subr.mxu0 0.0
  %464 = vmatpush1.msra.mxu0 0.0
  %465 = vmatprep.subr.mxu0 0.0
  %466 = vmatpush1.msra.mxu0 0.0
  %467 = vmatprep.subr.mxu0 0.0
  %468 = vmatpush1.msra.mxu0 0.0
  %469 = vmatprep.subr.mxu0 0.0
  %470 = vmatpush1.msra.mxu0 0.0
  %471 = vmatprep.subr.mxu0 0.0
  %472 = vmatpush1.msra.mxu0 0.0
  %473 = vmatprep.subr.mxu0 0.0
  %474 = vmatpush1.msra.mxu0 0.0
  %475 = vmatprep.subr.mxu0 0.0
  %476 = vmatpush1.msra.mxu0 0.0
  %477 = vmatprep.subr.mxu0 0.0
  %478 = vmatpush1.msra.mxu0 0.0
  %479 = vmatprep.subr.mxu0 0.0
  %480 = vmatpush1.msra.mxu0 0.0
  %481 = vmatprep.subr.mxu0 0.0
  %482 = vmatpush1.msra.mxu0 0.0
  %483 = vmatprep.subr.mxu0 0.0
  %484 = vmatpush1.msra.mxu0 0.0
  %485 = vmatprep.subr.mxu0 0.0
  %486 = vmatpush1.msra.mxu0 0.0
  %487 = vmatprep.subr.mxu0 0.0
  %488 = vmatpush1.msra.mxu0 0.0
  %489 = vmatprep.subr.mxu0 0.0
  %490 = vmatpush1.msra.mxu0 0.0
  %491 = vmatprep.subr.mxu0 0.0
  %492 = vmatpush1.msra.mxu0 0.0
  %493 = vmatprep.subr.mxu0 0.0
  %494 = vmatpush1.msra.mxu0 0.0
  %495 = vmatprep.subr.mxu0 0.0
  %496 = vmatpush1.msra.mxu0 0.0
  %497 = vmatprep.subr.mxu0 0.0
  %498 = vmatpush1.msra.mxu0 0.0
  %499 = vmatprep.subr.mxu0 0.0
  %500 = vmatpush1.msra.mxu0 0.0
  %501 = vmatprep.subr.mxu0 0.0
  %502 = vmatpush1.msra.mxu0 0.0
  %503 = vmatprep.subr.mxu0 0.0
  %504 = vmatpush1.msra.mxu0 0.0
  %505 = vmatprep.subr.mxu0 0.0
  %506 = vmatpush1.msra.mxu0 0.0
  %507 = vmatprep.subr.mxu0 0.0
  %508 = vmatpush1.msra.mxu0 0.0
  %509 = vmatprep.subr.mxu0 0.0
  %510 = vmatpush1.msra.mxu0 0.0
  %511 = vmatprep.subr.mxu0 0.0
  %512 = vmatpush1.msra.mxu0 0.0
  %513 = vmatprep.subr.mxu0 0.0
  %514 = vmatpush1.msra.mxu0 0.0
  %515 = vmatprep.subr.mxu0 0.0
  %516 = vmatpush1.msra.mxu0 0.0
  %517 = vmatprep.mubr.f32.mxu0 0.0
  %518 = vmatmul.mubr.f32.gmra.mrb[0].mxu0 %v265
  %v519 = vpop.f32.mrb[0].mxu0
  %v520 = vadd.f32 %v450, %v519
  %v521 = vpop.f32.mrb[0].mxu0
  %522 = vdwg.mxu0
  %v523 = vld [vmem:[%s29] sm:$0xff]
  %v524 = vld [vmem:[%s29 + $0x8] sm:$0xff]
  %v525 = vld [vmem:[%s29 + $0x10] sm:$0xff]
  %v527 = vsel %vm263, %v169, 0
  %529 = vmatprep.subr.mxu0 0.0
  %530 = vmatpush1.msra.mxu0 %v523
  %531 = vmatprep.subr.mxu0 0.0
  %532 = vmatpush1.msra.mxu0 %v524
  %533 = vmatprep.subr.mxu0 0.0
  %534 = vmatpush1.msra.mxu0 %v525
  %535 = vmatprep.subr.mxu0 0.0
  %536 = vmatpush1.msra.mxu0 0.0
  %537 = vmatprep.subr.mxu0 0.0
  %538 = vmatpush1.msra.mxu0 0.0
  %539 = vmatprep.subr.mxu0 0.0
  %540 = vmatpush1.msra.mxu0 0.0
  %541 = vmatprep.subr.mxu0 0.0
  %542 = vmatpush1.msra.mxu0 0.0
  %543 = vmatprep.subr.mxu0 0.0
  %544 = vmatpush1.msra.mxu0 0.0
  %545 = vmatprep.subr.mxu0 0.0
  %546 = vmatpush1.msra.mxu0 0.0
  %547 = vmatprep.subr.mxu0 0.0
  %548 = vmatpush1.msra.mxu0 0.0
  %549 = vmatprep.subr.mxu0 0.0
  %550 = vmatpush1.msra.mxu0 0.0
  %551 = vmatprep.subr.mxu0 0.0
  %552 = vmatpush1.msra.mxu0 0.0
  %553 = vmatprep.subr.mxu0 0.0
  %554 = vmatpush1.msra.mxu0 0.0
  %555 = vmatprep.subr.mxu0 0.0
  %556 = vmatpush1.msra.mxu0 0.0
  %557 = vmatprep.subr.mxu0 0.0
  %558 = vmatpush1.msra.mxu0 0.0
  %559 = vmatprep.subr.mxu0 0.0
  %560 = vmatpush1.msra.mxu0 0.0
  %561 = vmatprep.subr.mxu0 0.0
  %562 = vmatpush1.msra.mxu0 0.0
  %563 = vmatprep.subr.mxu0 0.0
  %564 = vmatpush1.msra.mxu0 0.0
  %565 = vmatprep.subr.mxu0 0.0
  %566 = vmatpush1.msra.mxu0 0.0
  %567 = vmatprep.subr.mxu0 0.0
  %568 = vmatpush1.msra.mxu0 0.0
  %569 = vmatprep.subr.mxu0 0.0
  %570 = vmatpush1.msra.mxu0 0.0
  %571 = vmatprep.subr.mxu0 0.0
  %572 = vmatpush1.msra.mxu0 0.0
  %573 = vmatprep.subr.mxu0 0.0
  %574 = vmatpush1.msra.mxu0 0.0
  %575 = vmatprep.subr.mxu0 0.0
  %576 = vmatpush1.msra.mxu0 0.0
  %577 = vmatprep.subr.mxu0 0.0
  %578 = vmatpush1.msra.mxu0 0.0
  %579 = vmatprep.subr.mxu0 0.0
  %580 = vmatpush1.msra.mxu0 0.0
  %581 = vmatprep.subr.mxu0 0.0
  %582 = vmatpush1.msra.mxu0 0.0
  %583 = vmatprep.subr.mxu0 0.0
  %584 = vmatpush1.msra.mxu0 0.0
  %585 = vmatprep.subr.mxu0 0.0
  %586 = vmatpush1.msra.mxu0 0.0
  %587 = vmatprep.subr.mxu0 0.0
  %588 = vmatpush1.msra.mxu0 0.0
  %589 = vmatprep.subr.mxu0 0.0
  %590 = vmatpush1.msra.mxu0 0.0
  %591 = vmatprep.subr.mxu0 0.0
  %592 = vmatpush1.msra.mxu0 0.0
  %593 = vmatprep.mubr.f32.mxu0 0.0
  %594 = vmatmul.mubr.f32.gmra.mrb[0].mxu0 %v527
  %v595 = vpop.f32.mrb[0].mxu0
  %v596 = vadd.f32 0.0, %v595
  %v597 = vpop.f32.mrb[0].mxu0
  %598 = vdwg.mxu0
  %v599 = vadd.f32 %v520, %v596
  %v600 = vld [vmem:[%s31] sm:$0xff]
  %v601 = vld [vmem:[%s31 + $0x8] sm:$0xff]
  %v602 = vld [vmem:[%s31 + $0x10] sm:$0xff]
  %v603 = vld [vmem:[%s31 + $0x18] sm:$0xff]
  %v604 = vld [vmem:[%s31 + $0x20] sm:$0xff]
  %v605 = vld [vmem:[%s31 + $0x28] sm:$0xff]
  %606 = vmatprep.subr.mxu0 0.0
  %607 = vmatpush1.msra.mxu0 %v600
  %608 = vmatprep.subr.mxu0 0.0
  %609 = vmatpush1.msra.mxu0 %v601
  %610 = vmatprep.subr.mxu0 0.0
  %611 = vmatpush1.msra.mxu0 %v602
  %612 = vmatprep.subr.mxu0 0.0
  %613 = vmatpush1.msra.mxu0 %v603
  %614 = vmatprep.subr.mxu0 0.0
  %615 = vmatpush1.msra.mxu0 %v604
  %616 = vmatprep.subr.mxu0 0.0
  %617 = vmatpush1.msra.mxu0 %v605
  %618 = vmatprep.subr.mxu0 0.0
  %619 = vmatpush1.msra.mxu0 0.0
  %620 = vmatprep.subr.mxu0 0.0
  %621 = vmatpush1.msra.mxu0 0.0
  %622 = vmatprep.subr.mxu0 0.0
  %623 = vmatpush1.msra.mxu0 0.0
  %624 = vmatprep.subr.mxu0 0.0
  %625 = vmatpush1.msra.mxu0 0.0
  %626 = vmatprep.subr.mxu0 0.0
  %627 = vmatpush1.msra.mxu0 0.0
  %628 = vmatprep.subr.mxu0 0.0
  %629 = vmatpush1.msra.mxu0 0.0
  %630 = vmatprep.subr.mxu0 0.0
  %631 = vmatpush1.msra.mxu0 0.0
  %632 = vmatprep.subr.mxu0 0.0
  %633 = vmatpush1.msra.mxu0 0.0
  %634 = vmatprep.subr.mxu0 0.0
  %635 = vmatpush1.msra.mxu0 0.0
  %636 = vmatprep.subr.mxu0 0.0
  %637 = vmatpush1.msra.mxu0 0.0
  %638 = vmatprep.subr.mxu0 0.0
  %639 = vmatpush1.msra.mxu0 0.0
  %640 = vmatprep.subr.mxu0 0.0
  %641 = vmatpush1.msra.mxu0 0.0
  %642 = vmatprep.subr.mxu0 0.0
  %643 = vmatpush1.msra.mxu0 0.0
  %644 = vmatprep.subr.mxu0 0.0
  %645 = vmatpush1.msra.mxu0 0.0
  %646 = vmatprep.subr.mxu0 0.0
  %647 = vmatpush1.msra.mxu0 0.0
  %648 = vmatprep.subr.mxu0 0.0
  %649 = vmatpush1.msra.mxu0 0.0
  %650 = vmatprep.subr.mxu0 0.0
  %651 = vmatpush1.msra.mxu0 0.0
  %652 = vmatprep.subr.mxu0 0.0
  %653 = vmatpush1.msra.mxu0 0.0
  %654 = vmatprep.subr.mxu0 0.0
  %655 = vmatpush1.msra.mxu0 0.0
  %656 = vmatprep.subr.mxu0 0.0
  %657 = vmatpush1.msra.mxu0 0.0
  %658 = vmatprep.subr.mxu0 0.0
  %659 = vmatpush1.msra.mxu0 0.0
  %660 = vmatprep.subr.mxu0 0.0
  %661 = vmatpush1.msra.mxu0 0.0
  %662 = vmatprep.subr.mxu0 0.0
  %663 = vmatpush1.msra.mxu0 0.0
  %664 = vmatprep.subr.mxu0 0.0
  %665 = vmatpush1.msra.mxu0 0.0
  %666 = vmatprep.subr.mxu0 0.0
  %667 = vmatpush1.msra.mxu0 0.0
  %668 = vmatprep.subr.mxu0 0.0
  %669 = vmatpush1.msra.mxu0 0.0
  %670 = vmatprep.mubr.f32.mxu0 0.0
  %671 = vmatmul.mubr.f32.gmra.mrb[0].mxu0 %v190
  %v672 = vpop.f32.mrb[0].mxu0
  %v673 = vadd.f32 0.0, %v672
  %v674 = vpop.f32.mrb[0].mxu0
  %675 = vdwg.mxu0
  %v676 = vadd.f32 %v599, %v673
  %v677 = vld [vmem:[%s33] sm:$0xff]
  %v678 = vld [vmem:[%s33 + $0x8] sm:$0xff]
  %v679 = vld [vmem:[%s33 + $0x10] sm:$0xff]
  %v681 = vsel %vm263, %v168, 0
  %683 = vmatprep.subr.mxu0 0.0
  %684 = vmatpush1.msra.mxu0 %v677
  %685 = vmatprep.subr.mxu0 0.0
  %686 = vmatpush1.msra.mxu0 %v678
  %687 = vmatprep.subr.mxu0 0.0
  %688 = vmatpush1.msra.mxu0 %v679
  %689 = vmatprep.subr.mxu0 0.0
  %690 = vmatpush1.msra.mxu0 0.0
  %691 = vmatprep.subr.mxu0 0.0
  %692 = vmatpush1.msra.mxu0 0.0
  %693 = vmatprep.subr.mxu0 0.0
  %694 = vmatpush1.msra.mxu0 0.0
  %695 = vmatprep.subr.mxu0 0.0
  %696 = vmatpush1.msra.mxu0 0.0
  %697 = vmatprep.subr.mxu0 0.0
  %698 = vmatpush1.msra.mxu0 0.0
  %699 = vmatprep.subr.mxu0 0.0
  %700 = vmatpush1.msra.mxu0 0.0
  %701 = vmatprep.subr.mxu0 0.0
  %702 = vmatpush1.msra.mxu0 0.0
  %703 = vmatprep.subr.mxu0 0.0
  %704 = vmatpush1.msra.mxu0 0.0
  %705 = vmatprep.subr.mxu0 0.0
  %706 = vmatpush1.msra.mxu0 0.0
  %707 = vmatprep.subr.mxu0 0.0
  %708 = vmatpush1.msra.mxu0 0.0
  %709 = vmatprep.subr.mxu0 0.0
  %710 = vmatpush1.msra.mxu0 0.0
  %711 = vmatprep.subr.mxu0 0.0
  %712 = vmatpush1.msra.mxu0 0.0
  %713 = vmatprep.subr.mxu0 0.0
  %714 = vmatpush1.msra.mxu0 0.0
  %715 = vmatprep.subr.mxu0 0.0
  %716 = vmatpush1.msra.mxu0 0.0
  %717 = vmatprep.subr.mxu0 0.0
  %718 = vmatpush1.msra.mxu0 0.0
  %719 = vmatprep.subr.mxu0 0.0
  %720 = vmatpush1.msra.mxu0 0.0
  %721 = vmatprep.subr.mxu0 0.0
  %722 = vmatpush1.msra.mxu0 0.0
  %723 = vmatprep.subr.mxu0 0.0
  %724 = vmatpush1.msra.mxu0 0.0
  %725 = vmatprep.subr.mxu0 0.0
  %726 = vmatpush1.msra.mxu0 0.0
  %727 = vmatprep.subr.mxu0 0.0
  %728 = vmatpush1.msra.mxu0 0.0
  %729 = vmatprep.subr.mxu0 0.0
  %730 = vmatpush1.msra.mxu0 0.0
  %731 = vmatprep.subr.mxu0 0.0
  %732 = vmatpush1.msra.mxu0 0.0
  %733 = vmatprep.subr.mxu0 0.0
  %734 = vmatpush1.msra.mxu0 0.0
  %735 = vmatprep.subr.mxu0 0.0
  %736 = vmatpush1.msra.mxu0 0.0
  %737 = vmatprep.subr.mxu0 0.0
  %738 = vmatpush1.msra.mxu0 0.0
  %739 = vmatprep.subr.mxu0 0.0
  %740 = vmatpush1.msra.mxu0 0.0
  %741 = vmatprep.subr.mxu0 0.0
  %742 = vmatpush1.msra.mxu0 0.0
  %743 = vmatprep.subr.mxu0 0.0
  %744 = vmatpush1.msra.mxu0 0.0
  %745 = vmatprep.subr.mxu0 0.0
  %746 = vmatpush1.msra.mxu0 0.0
  %747 = vmatprep.mubr.f32.mxu0 0.0
  %748 = vmatmul.mubr.f32.gmra.mrb[0].mxu0 %v681
  %v749 = vpop.f32.mrb[0].mxu0
  %v750 = vadd.f32 0.0, %v749
  %v751 = vpop.f32.mrb[0].mxu0
  %752 = vdwg.mxu0
  %v753 = vadd.f32 %v676, %v750
  %v754 = vld [vmem:[%s35] sm:$0x1]
  %v756 = vlaneseq
  %v757 = vshrl.u32 %v756, 7
  %v758 = vsub.s32 0, %v757
  %v759 = vrot.slane %v754, %v758
  %v761 = vadd.f32 %v753, %v759
  %v762 = vld [vmem:[%s37] sm:$0xff]
  %v763 = vld [vmem:[%s37 + $0x8] sm:$0xff]
  %v764 = vld [vmem:[%s37 + $0x10] sm:$0xff]
  %v765 = vld [vmem:[%s37 + $0x18] sm:$0xff]
  %v766 = vld [vmem:[%s37 + $0x20] sm:$0xff]
  %v767 = vld [vmem:[%s37 + $0x28] sm:$0xff]
  %v768 = vld [vmem:[%s37 + $0x30] sm:$0xff]
  %v769 = vld [vmem:[%s37 + $0x38] sm:$0xff]
  %v770 = vld [vmem:[%s37 + $0x40] sm:$0xff]
  %v771 = vld [vmem:[%s37 + $0x48] sm:$0xff]
  %v772 = vld [vmem:[%s37 + $0x50] sm:$0xff]
  %v773 = vld [vmem:[%s37 + $0x58] sm:$0xff]
  %v774 = vld [vmem:[%s37 + $0x60] sm:$0xff]
  %v775 = vld [vmem:[%s37 + $0x68] sm:$0xff]
  %v776 = vld [vmem:[%s37 + $0x70] sm:$0xff]
  %v777 = vld [vmem:[%s37 + $0x78] sm:$0xff]
  %v778 = vld [vmem:[%s37 + $0x80] sm:$0xff]
  %v779 = vld [vmem:[%s37 + $0x88] sm:$0xff]
  %v780 = vld [vmem:[%s37 + $0x90] sm:$0xff]
  %v781 = vld [vmem:[%s37 + $0x98] sm:$0xff]
  %v782 = vld [vmem:[%s37 + $0xa0] sm:$0xff]
  %v783 = vld [vmem:[%s37 + $0xa8] sm:$0xff]
  %v784 = vld [vmem:[%s37 + $0xb0] sm:$0xff]
  %v785 = vld [vmem:[%s37 + $0xb8] sm:$0xff]
  %v786 = vld [vmem:[%s37 + $0xc0] sm:$0xff]
  %v787 = vld [vmem:[%s37 + $0xc8] sm:$0xff]
  %v788 = vld [vmem:[%s37 + $0xd0] sm:$0xff]
  %v789 = vld [vmem:[%s37 + $0xd8] sm:$0xff]
  %v790 = vld [vmem:[%s37 + $0xe0] sm:$0xff]
  %v791 = vld [vmem:[%s37 + $0xe8] sm:$0xff]
  %v792 = vld [vmem:[%s37 + $0xf0] sm:$0xff]
  %v793 = vld [vmem:[%s37 + $0xf8] sm:$0xff]
  %v794 = vld [vmem:[%s37 + $0x100] sm:$0xff]
  %v795 = vld [vmem:[%s37 + $0x108] sm:$0xff]
  %v796 = vld [vmem:[%s37 + $0x110] sm:$0xff]
  %v797 = vld [vmem:[%s37 + $0x118] sm:$0xff]
  %v798 = vld [vmem:[%s37 + $0x120] sm:$0xff]
  %v799 = vld [vmem:[%s37 + $0x128] sm:$0xff]
  %v800 = vld [vmem:[%s37 + $0x130] sm:$0xff]
  %v801 = vld [vmem:[%s37 + $0x138] sm:$0xff]
  %v802 = vld [vmem:[%s37 + $0x140] sm:$0xff]
  %v803 = vld [vmem:[%s37 + $0x148] sm:$0xff]
  %v804 = vld [vmem:[%s37 + $0x150] sm:$0xff]
  %v805 = vld [vmem:[%s37 + $0x158] sm:$0xff]
  %v806 = vld [vmem:[%s37 + $0x160] sm:$0xff]
  %v807 = vld [vmem:[%s37 + $0x168] sm:$0xff]
  %v808 = vld [vmem:[%s37 + $0x170] sm:$0xff]
  %v809 = vld [vmem:[%s37 + $0x178] sm:$0xff]
  %v810 = vld [vmem:[%s37 + $0x180] sm:$0xff]
  %v811 = vld [vmem:[%s37 + $0x188] sm:$0xff]
  %v812 = vld [vmem:[%s37 + $0x190] sm:$0xff]
  %v813 = vld [vmem:[%s37 + $0x198] sm:$0xff]
  %v814 = vld [vmem:[%s37 + $0x1a0] sm:$0xff]
  %v815 = vld [vmem:[%s37 + $0x1a8] sm:$0xff]
  %v816 = vld [vmem:[%s37 + $0x1b0] sm:$0xff]
  %v817 = vld [vmem:[%s37 + $0x1b8] sm:$0xff]
  %v818 = vld [vmem:[%s37 + $0x1c0] sm:$0xff]
  %v819 = vld [vmem:[%s37 + $0x1c8] sm:$0xff]
  %v820 = vld [vmem:[%s37 + $0x1d0] sm:$0xff]
  %v821 = vld [vmem:[%s37 + $0x1d8] sm:$0xff]
  %v822 = vld [vmem:[%s37 + $0x1e0] sm:$0xff]
  %v823 = vld [vmem:[%s37 + $0x1e8] sm:$0xff]
  %v824 = vld [vmem:[%s37 + $0x1f0] sm:$0xff]
  %v825 = vld [vmem:[%s37 + $0x1f8] sm:$0xff]
  %v826 = vld [vmem:[%s37 + $0x200] sm:$0xff]
  %v827 = vld [vmem:[%s37 + $0x208] sm:$0xff]
  %v828 = vld [vmem:[%s37 + $0x210] sm:$0xff]
  %v829 = vld [vmem:[%s37 + $0x218] sm:$0xff]
  %v830 = vld [vmem:[%s37 + $0x220] sm:$0xff]
  %v831 = vld [vmem:[%s37 + $0x228] sm:$0xff]
  %v832 = vld [vmem:[%s37 + $0x230] sm:$0xff]
  %v833 = vld [vmem:[%s37 + $0x238] sm:$0xff]
  %v834 = vld [vmem:[%s37 + $0x240] sm:$0xff]
  %v835 = vld [vmem:[%s37 + $0x248] sm:$0xff]
  %v836 = vld [vmem:[%s37 + $0x250] sm:$0xff]
  %v837 = vld [vmem:[%s37 + $0x258] sm:$0xff]
  %v838 = vld [vmem:[%s37 + $0x260] sm:$0xff]
  %v839 = vld [vmem:[%s37 + $0x268] sm:$0xff]
  %v840 = vld [vmem:[%s37 + $0x270] sm:$0xff]
  %v841 = vld [vmem:[%s37 + $0x278] sm:$0xff]
  %v842 = vld [vmem:[%s37 + $0x280] sm:$0xff]
  %v843 = vld [vmem:[%s37 + $0x288] sm:$0xff]
  %v844 = vld [vmem:[%s37 + $0x290] sm:$0xff]
  %v845 = vld [vmem:[%s37 + $0x298] sm:$0xff]
  %v846 = vld [vmem:[%s37 + $0x2a0] sm:$0xff]
  %v847 = vld [vmem:[%s37 + $0x2a8] sm:$0xff]
  %v848 = vld [vmem:[%s37 + $0x2b0] sm:$0xff]
  %v849 = vld [vmem:[%s37 + $0x2b8] sm:$0xff]
  %v850 = vld [vmem:[%s37 + $0x2c0] sm:$0xff]
  %v851 = vld [vmem:[%s37 + $0x2c8] sm:$0xff]
  %v852 = vld [vmem:[%s37 + $0x2d0] sm:$0xff]
  %v853 = vld [vmem:[%s37 + $0x2d8] sm:$0xff]
  %v854 = vld [vmem:[%s37 + $0x2e0] sm:$0xff]
  %v855 = vld [vmem:[%s37 + $0x2e8] sm:$0xff]
  %v856 = vld [vmem:[%s37 + $0x2f0] sm:$0xff]
  %v857 = vld [vmem:[%s37 + $0x2f8] sm:$0xff]
  %v858 = vld [vmem:[%s39] sm:$0xff]
  %v860 = vlaneseq
  %v861 = vshrl.u32 %v860, 7
  %v862 = vsub.s32 0, %v861
  %v863 = vrot.slane %v858, %v862
  %v864 = vlaneseq
  %v865 = vshrl.u32 %v864, 7
  %v866 = vsub.s32 1, %v865
  %v867 = vrot.slane %v858, %v866
  %v868 = vlaneseq
  %v869 = vshrl.u32 %v868, 7
  %v870 = vsub.s32 2, %v869
  %v871 = vrot.slane %v858, %v870
  %v872 = vlaneseq
  %v873 = vshrl.u32 %v872, 7
  %v874 = vsub.s32 3, %v873
  %v875 = vrot.slane %v858, %v874
  %v876 = vlaneseq
  %v877 = vshrl.u32 %v876, 7
  %v878 = vsub.s32 4, %v877
  %v879 = vrot.slane %v858, %v878
  %v880 = vlaneseq
  %v881 = vshrl.u32 %v880, 7
  %v882 = vsub.s32 5, %v881
  %v883 = vrot.slane %v858, %v882
  %v884 = vlaneseq
  %v885 = vshrl.u32 %v884, 7
  %v886 = vsub.s32 6, %v885
  %v887 = vrot.slane %v858, %v886
  %v888 = vlaneseq
  %v889 = vshrl.u32 %v888, 7
  %v890 = vsub.s32 7, %v889
  %v891 = vrot.slane %v858, %v890
  %vm900 = vcmask 785408
  %v902 = vsel %vm900, %v761, 0
  %904 = vmatprep.subr.mxu0 %v763
  %905 = vmatpush1.msra.mxu0 %v762
  %906 = vmatprep.subr.mxu0 %v771
  %907 = vmatpush1.msra.mxu0 %v770
  %908 = vmatprep.subr.mxu0 %v779
  %909 = vmatpush1.msra.mxu0 %v778
  %910 = vmatprep.subr.mxu0 %v787
  %911 = vmatpush1.msra.mxu0 %v786
  %912 = vmatprep.subr.mxu0 %v795
  %913 = vmatpush1.msra.mxu0 %v794
  %914 = vmatprep.subr.mxu0 %v803
  %915 = vmatpush1.msra.mxu0 %v802
  %916 = vmatprep.subr.mxu0 %v811
  %917 = vmatpush1.msra.mxu0 %v810
  %918 = vmatprep.subr.mxu0 %v819
  %919 = vmatpush1.msra.mxu0 %v818
  %920 = vmatprep.subr.mxu0 %v827
  %921 = vmatpush1.msra.mxu0 %v826
  %922 = vmatprep.subr.mxu0 %v835
  %923 = vmatpush1.msra.mxu0 %v834
  %924 = vmatprep.subr.mxu0 %v843
  %925 = vmatpush1.msra.mxu0 %v842
  %926 = vmatprep.subr.mxu0 %v851
  %927 = vmatpush1.msra.mxu0 %v850
  %928 = vmatprep.subr.mxu0 0.0
  %929 = vmatpush1.msra.mxu0 0.0
  %930 = vmatprep.subr.mxu0 0.0
  %931 = vmatpush1.msra.mxu0 0.0
  %932 = vmatprep.subr.mxu0 0.0
  %933 = vmatpush1.msra.mxu0 0.0
  %934 = vmatprep.subr.mxu0 0.0
  %935 = vmatpush1.msra.mxu0 0.0
  %936 = vmatprep.subr.mxu0 0.0
  %937 = vmatpush1.msra.mxu0 0.0
  %938 = vmatprep.subr.mxu0 0.0
  %939 = vmatpush1.msra.mxu0 0.0
  %940 = vmatprep.subr.mxu0 0.0
  %941 = vmatpush1.msra.mxu0 0.0
  %942 = vmatprep.subr.mxu0 0.0
  %943 = vmatpush1.msra.mxu0 0.0
  %944 = vmatprep.subr.mxu0 0.0
  %945 = vmatpush1.msra.mxu0 0.0
  %946 = vmatprep.subr.mxu0 0.0
  %947 = vmatpush1.msra.mxu0 0.0
  %948 = vmatprep.subr.mxu0 0.0
  %949 = vmatpush1.msra.mxu0 0.0
  %950 = vmatprep.subr.mxu0 0.0
  %951 = vmatpush1.msra.mxu0 0.0
  %952 = vmatprep.subr.mxu0 0.0
  %953 = vmatpush1.msra.mxu0 0.0
  %954 = vmatprep.subr.mxu0 0.0
  %955 = vmatpush1.msra.mxu0 0.0
  %956 = vmatprep.subr.mxu0 0.0
  %957 = vmatpush1.msra.mxu0 0.0
  %958 = vmatprep.subr.mxu0 0.0
  %959 = vmatpush1.msra.mxu0 0.0
  %960 = vmatprep.subr.mxu0 0.0
  %961 = vmatpush1.msra.mxu0 0.0
  %962 = vmatprep.subr.mxu0 0.0
  %963 = vmatpush1.msra.mxu0 0.0
  %964 = vmatprep.subr.mxu0 0.0
  %965 = vmatpush1.msra.mxu0 0.0
  %966 = vmatprep.subr.mxu0 0.0
  %967 = vmatpush1.msra.mxu0 0.0
  %968 = vmatprep.mubr.f32.mxu0 0.0
  %969 = vmatmul.mubr.f32.gmra.mrb[0].mxu0 %v902
  %v970 = vpop.f32.mrb[0].mxu0
  %v971 = vadd.f32 %v863, %v970
  %v972 = vpop.f32.mrb[0].mxu0
  %v973 = vadd.f32 %v867, %v972
  %974 = vdwg.mxu0
  %975 = vmatprep.subr.mxu0 %v765
  %976 = vmatpush1.msra.mxu0 %v764
  %977 = vmatprep.subr.mxu0 %v773
  %978 = vmatpush1.msra.mxu0 %v772
  %979 = vmatprep.subr.mxu0 %v781
  %980 = vmatpush1.msra.mxu0 %v780
  %981 = vmatprep.subr.mxu0 %v789
  %982 = vmatpush1.msra.mxu0 %v788
  %983 = vmatprep.subr.mxu0 %v797
  %984 = vmatpush1.msra.mxu0 %v796
  %985 = vmatprep.subr.mxu0 %v805
  %986 = vmatpush1.msra.mxu0 %v804
  %987 = vmatprep.subr.mxu0 %v813
  %988 = vmatpush1.msra.mxu0 %v812
  %989 = vmatprep.subr.mxu0 %v821
  %990 = vmatpush1.msra.mxu0 %v820
  %991 = vmatprep.subr.mxu0 %v829
  %992 = vmatpush1.msra.mxu0 %v828
  %993 = vmatprep.subr.mxu0 %v837
  %994 = vmatpush1.msra.mxu0 %v836
  %995 = vmatprep.subr.mxu0 %v845
  %996 = vmatpush1.msra.mxu0 %v844
  %997 = vmatprep.subr.mxu0 %v853
  %998 = vmatpush1.msra.mxu0 %v852
  %999 = vmatprep.subr.mxu0 0.0
  %1000 = vmatpush1.msra.mxu0 0.0
  %1001 = vmatprep.subr.mxu0 0.0
  %1002 = vmatpush1.msra.mxu0 0.0
  %1003 = vmatprep.subr.mxu0 0.0
  %1004 = vmatpush1.msra.mxu0 0.0
  %1005 = vmatprep.subr.mxu0 0.0
  %1006 = vmatpush1.msra.mxu0 0.0
  %1007 = vmatprep.subr.mxu0 0.0
  %1008 = vmatpush1.msra.mxu0 0.0
  %1009 = vmatprep.subr.mxu0 0.0
  %1010 = vmatpush1.msra.mxu0 0.0
  %1011 = vmatprep.subr.mxu0 0.0
  %1012 = vmatpush1.msra.mxu0 0.0
  %1013 = vmatprep.subr.mxu0 0.0
  %1014 = vmatpush1.msra.mxu0 0.0
  %1015 = vmatprep.subr.mxu0 0.0
  %1016 = vmatpush1.msra.mxu0 0.0
  %1017 = vmatprep.subr.mxu0 0.0
  %1018 = vmatpush1.msra.mxu0 0.0
  %1019 = vmatprep.subr.mxu0 0.0
  %1020 = vmatpush1.msra.mxu0 0.0
  %1021 = vmatprep.subr.mxu0 0.0
  %1022 = vmatpush1.msra.mxu0 0.0
  %1023 = vmatprep.subr.mxu0 0.0
  %1024 = vmatpush1.msra.mxu0 0.0
  %1025 = vmatprep.subr.mxu0 0.0
  %1026 = vmatpush1.msra.mxu0 0.0
  %1027 = vmatprep.subr.mxu0 0.0
  %1028 = vmatpush1.msra.mxu0 0.0
  %1029 = vmatprep.subr.mxu0 0.0
  %1030 = vmatpush1.msra.mxu0 0.0
  %1031 = vmatprep.subr.mxu0 0.0
  %1032 = vmatpush1.msra.mxu0 0.0
  %1033 = vmatprep.subr.mxu0 0.0
  %1034 = vmatpush1.msra.mxu0 0.0
  %1035 = vmatprep.subr.mxu0 0.0
  %1036 = vmatpush1.msra.mxu0 0.0
  %1037 = vmatprep.subr.mxu0 0.0
  %1038 = vmatpush1.msra.mxu0 0.0
  %1039 = vmatprep.mubr.f32.mxu0 0.0
  %1040 = vmatmul.mubr.f32.gmra.mrb[0].mxu0 %v902
  %v1041 = vpop.f32.mrb[0].mxu0
  %v1042 = vadd.f32 %v871, %v1041
  %v1043 = vpop.f32.mrb[0].mxu0
  %v1044 = vadd.f32 %v875, %v1043
  %1045 = vdwg.mxu0
  %1046 = vmatprep.subr.mxu0 %v767
  %1047 = vmatpush1.msra.mxu0 %v766
  %1048 = vmatprep.subr.mxu0 %v775
  %1049 = vmatpush1.msra.mxu0 %v774
  %1050 = vmatprep.subr.mxu0 %v783
  %1051 = vmatpush1.msra.mxu0 %v782
  %1052 = vmatprep.subr.mxu0 %v791
  %1053 = vmatpush1.msra.mxu0 %v790
  %1054 = vmatprep.subr.mxu0 %v799
  %1055 = vmatpush1.msra.mxu0 %v798
  %1056 = vmatprep.subr.mxu0 %v807
  %1057 = vmatpush1.msra.mxu0 %v806
  %1058 = vmatprep.subr.mxu0 %v815
  %1059 = vmatpush1.msra.mxu0 %v814
  %1060 = vmatprep.subr.mxu0 %v823
  %1061 = vmatpush1.msra.mxu0 %v822
  %1062 = vmatprep.subr.mxu0 %v831
  %1063 = vmatpush1.msra.mxu0 %v830
  %1064 = vmatprep.subr.mxu0 %v839
  %1065 = vmatpush1.msra.mxu0 %v838
  %1066 = vmatprep.subr.mxu0 %v847
  %1067 = vmatpush1.msra.mxu0 %v846
  %1068 = vmatprep.subr.mxu0 %v855
  %1069 = vmatpush1.msra.mxu0 %v854
  %1070 = vmatprep.subr.mxu0 0.0
  %1071 = vmatpush1.msra.mxu0 0.0
  %1072 = vmatprep.subr.mxu0 0.0
  %1073 = vmatpush1.msra.mxu0 0.0
  %1074 = vmatprep.subr.mxu0 0.0
  %1075 = vmatpush1.msra.mxu0 0.0
  %1076 = vmatprep.subr.mxu0 0.0
  %1077 = vmatpush1.msra.mxu0 0.0
  %1078 = vmatprep.subr.mxu0 0.0
  %1079 = vmatpush1.msra.mxu0 0.0
  %1080 = vmatprep.subr.mxu0 0.0
  %1081 = vmatpush1.msra.mxu0 0.0
  %1082 = vmatprep.subr.mxu0 0.0
  %1083 = vmatpush1.msra.mxu0 0.0
  %1084 = vmatprep.subr.mxu0 0.0
  %1085 = vmatpush1.msra.mxu0 0.0
  %1086 = vmatprep.subr.mxu0 0.0
  %1087 = vmatpush1.msra.mxu0 0.0
  %1088 = vmatprep.subr.mxu0 0.0
  %1089 = vmatpush1.msra.mxu0 0.0
  %1090 = vmatprep.subr.mxu0 0.0
  %1091 = vmatpush1.msra.mxu0 0.0
  %1092 = vmatprep.subr.mxu0 0.0
  %1093 = vmatpush1.msra.mxu0 0.0
  %1094 = vmatprep.subr.mxu0 0.0
  %1095 = vmatpush1.msra.mxu0 0.0
  %1096 = vmatprep.subr.mxu0 0.0
  %1097 = vmatpush1.msra.mxu0 0.0
  %1098 = vmatprep.subr.mxu0 0.0
  %1099 = vmatpush1.msra.mxu0 0.0
  %1100 = vmatprep.subr.mxu0 0.0
  %1101 = vmatpush1.msra.mxu0 0.0
  %1102 = vmatprep.subr.mxu0 0.0
  %1103 = vmatpush1.msra.mxu0 0.0
  %1104 = vmatprep.subr.mxu0 0.0
  %1105 = vmatpush1.msra.mxu0 0.0
  %1106 = vmatprep.subr.mxu0 0.0
  %1107 = vmatpush1.msra.mxu0 0.0
  %1108 = vmatprep.subr.mxu0 0.0
  %1109 = vmatpush1.msra.mxu0 0.0
  %1110 = vmatprep.mubr.f32.mxu0 0.0
  %1111 = vmatmul.mubr.f32.gmra.mrb[0].mxu0 %v902
  %v1112 = vpop.f32.mrb[0].mxu0
  %v1113 = vadd.f32 %v879, %v1112
  %v1114 = vpop.f32.mrb[0].mxu0
  %v1115 = vadd.f32 %v883, %v1114
  %1116 = vdwg.mxu0
  %1117 = vmatprep.subr.mxu0 %v769
  %1118 = vmatpush1.msra.mxu0 %v768
  %1119 = vmatprep.subr.mxu0 %v777
  %1120 = vmatpush1.msra.mxu0 %v776
  %1121 = vmatprep.subr.mxu0 %v785
  %1122 = vmatpush1.msra.mxu0 %v784
  %1123 = vmatprep.subr.mxu0 %v793
  %1124 = vmatpush1.msra.mxu0 %v792
  %1125 = vmatprep.subr.mxu0 %v801
  %1126 = vmatpush1.msra.mxu0 %v800
  %1127 = vmatprep.subr.mxu0 %v809
  %1128 = vmatpush1.msra.mxu0 %v808
  %1129 = vmatprep.subr.mxu0 %v817
  %1130 = vmatpush1.msra.mxu0 %v816
  %1131 = vmatprep.subr.mxu0 %v825
  %1132 = vmatpush1.msra.mxu0 %v824
  %1133 = vmatprep.subr.mxu0 %v833
  %1134 = vmatpush1.msra.mxu0 %v832
  %1135 = vmatprep.subr.mxu0 %v841
  %1136 = vmatpush1.msra.mxu0 %v840
  %1137 = vmatprep.subr.mxu0 %v849
  %1138 = vmatpush1.msra.mxu0 %v848
  %1139 = vmatprep.subr.mxu0 %v857
  %1140 = vmatpush1.msra.mxu0 %v856
  %1141 = vmatprep.subr.mxu0 0.0
  %1142 = vmatpush1.msra.mxu0 0.0
  %1143 = vmatprep.subr.mxu0 0.0
  %1144 = vmatpush1.msra.mxu0 0.0
  %1145 = vmatprep.subr.mxu0 0.0
  %1146 = vmatpush1.msra.mxu0 0.0
  %1147 = vmatprep.subr.mxu0 0.0
  %1148 = vmatpush1.msra.mxu0 0.0
  %1149 = vmatprep.subr.mxu0 0.0
  %1150 = vmatpush1.msra.mxu0 0.0
  %1151 = vmatprep.subr.mxu0 0.0
  %1152 = vmatpush1.msra.mxu0 0.0
  %1153 = vmatprep.subr.mxu0 0.0
  %1154 = vmatpush1.msra.mxu0 0.0
  %1155 = vmatprep.subr.mxu0 0.0
  %1156 = vmatpush1.msra.mxu0 0.0
  %1157 = vmatprep.subr.mxu0 0.0
  %1158 = vmatpush1.msra.mxu0 0.0
  %1159 = vmatprep.subr.mxu0 0.0
  %1160 = vmatpush1.msra.mxu0 0.0
  %1161 = vmatprep.subr.mxu0 0.0
  %1162 = vmatpush1.msra.mxu0 0.0
  %1163 = vmatprep.subr.mxu0 0.0
  %1164 = vmatpush1.msra.mxu0 0.0
  %1165 = vmatprep.subr.mxu0 0.0
  %1166 = vmatpush1.msra.mxu0 0.0
  %1167 = vmatprep.subr.mxu0 0.0
  %1168 = vmatpush1.msra.mxu0 0.0
  %1169 = vmatprep.subr.mxu0 0.0
  %1170 = vmatpush1.msra.mxu0 0.0
  %1171 = vmatprep.subr.mxu0 0.0
  %1172 = vmatpush1.msra.mxu0 0.0
  %1173 = vmatprep.subr.mxu0 0.0
  %1174 = vmatpush1.msra.mxu0 0.0
  %1175 = vmatprep.subr.mxu0 0.0
  %1176 = vmatpush1.msra.mxu0 0.0
  %1177 = vmatprep.subr.mxu0 0.0
  %1178 = vmatpush1.msra.mxu0 0.0
  %1179 = vmatprep.subr.mxu0 0.0
  %1180 = vmatpush1.msra.mxu0 0.0
  %1181 = vmatprep.mubr.f32.mxu0 0.0
  %1182 = vmatmul.mubr.f32.gmra.mrb[0].mxu0 %v902
  %v1183 = vpop.f32.mrb[0].mxu0
  %v1184 = vadd.f32 %v887, %v1183
  %v1185 = vpop.f32.mrb[0].mxu0
  %v1186 = vadd.f32 %v891, %v1185
  %1187 = vdwg.mxu0
  %v1188 = vld [vmem:[%s41] sm:$0xff]
  %v1189 = vld [vmem:[%s41 + $0x8] sm:$0xff]
  %v1190 = vld [vmem:[%s41 + $0x10] sm:$0xff]
  %v1191 = vld [vmem:[%s41 + $0x18] sm:$0xff]
  %v1192 = vld [vmem:[%s41 + $0x20] sm:$0xff]
  %v1193 = vld [vmem:[%s41 + $0x28] sm:$0xff]
  %v1194 = vld [vmem:[%s41 + $0x30] sm:$0xff]
  %v1195 = vld [vmem:[%s41 + $0x38] sm:$0xff]
  %v1196 = vld [vmem:[%s41 + $0x40] sm:$0xff]
  %v1197 = vld [vmem:[%s41 + $0x48] sm:$0xff]
  %v1198 = vld [vmem:[%s41 + $0x50] sm:$0xff]
  %v1199 = vld [vmem:[%s41 + $0x58] sm:$0xff]
  %v1200 = vld [vmem:[%s43] sm:$0xff]
  %v1201 = vld [vmem:[%s43 + $0x8] sm:$0xff]
  %v1202 = vld [vmem:[%s43 + $0x10] sm:$0xff]
  %v1203 = vld [vmem:[%s43 + $0x18] sm:$0xff]
  %v1204 = vld [vmem:[%s43 + $0x20] sm:$0xff]
  %v1205 = vld [vmem:[%s43 + $0x28] sm:$0xff]
  %v1206 = vld [vmem:[%s43 + $0x30] sm:$0xff]
  %v1207 = vld [vmem:[%s43 + $0x38] sm:$0xff]
  %v1208 = vld [vmem:[%s43 + $0x40] sm:$0xff]
  %v1209 = vld [vmem:[%s43 + $0x48] sm:$0xff]
  %v1210 = vld [vmem:[%s43 + $0x50] sm:$0xff]
  %v1211 = vld [vmem:[%s43 + $0x58] sm:$0xff]
  %v1212 = vld [vmem:[%s43 + $0x60] sm:$0xff]
  %v1213 = vld [vmem:[%s43 + $0x68] sm:$0xff]
  %v1214 = vld [vmem:[%s43 + $0x70] sm:$0xff]
  %v1215 = vld [vmem:[%s43 + $0x78] sm:$0xff]
  %v1216 = vld [vmem:[%s43 + $0x80] sm:$0xff]
  %v1217 = vld [vmem:[%s43 + $0x88] sm:$0xff]
  %v1218 = vld [vmem:[%s43 + $0x90] sm:$0xff]
  %v1219 = vld [vmem:[%s43 + $0x98] sm:$0xff]
  %v1220 = vld [vmem:[%s43 + $0xa0] sm:$0xff]
  %v1221 = vld [vmem:[%s43 + $0xa8] sm:$0xff]
  %v1222 = vld [vmem:[%s43 + $0xb0] sm:$0xff]
  %v1223 = vld [vmem:[%s43 + $0xb8] sm:$0xff]
  %v1224 = vld [vmem:[%s43 + $0xc0] sm:$0xff]
  %v1225 = vld [vmem:[%s43 + $0xc8] sm:$0xff]
  %v1226 = vld [vmem:[%s43 + $0xd0] sm:$0xff]
  %v1227 = vld [vmem:[%s43 + $0xd8] sm:$0xff]
  %v1228 = vld [vmem:[%s43 + $0xe0] sm:$0xff]
  %v1229 = vld [vmem:[%s43 + $0xe8] sm:$0xff]
  %v1230 = vld [vmem:[%s43 + $0xf0] sm:$0xff]
  %v1231 = vld [vmem:[%s43 + $0xf8] sm:$0xff]
  %v1232 = vld [vmem:[%s43 + $0x100] sm:$0xff]
  %v1233 = vld [vmem:[%s43 + $0x108] sm:$0xff]
  %v1234 = vld [vmem:[%s43 + $0x110] sm:$0xff]
  %v1235 = vld [vmem:[%s43 + $0x118] sm:$0xff]
  %v1236 = vld [vmem:[%s43 + $0x120] sm:$0xff]
  %v1237 = vld [vmem:[%s43 + $0x128] sm:$0xff]
  %v1238 = vld [vmem:[%s43 + $0x130] sm:$0xff]
  %v1239 = vld [vmem:[%s43 + $0x138] sm:$0xff]
  %v1240 = vld [vmem:[%s43 + $0x140] sm:$0xff]
  %v1241 = vld [vmem:[%s43 + $0x148] sm:$0xff]
  %v1242 = vld [vmem:[%s43 + $0x150] sm:$0xff]
  %v1243 = vld [vmem:[%s43 + $0x158] sm:$0xff]
  %v1244 = vld [vmem:[%s43 + $0x160] sm:$0xff]
  %v1245 = vld [vmem:[%s43 + $0x168] sm:$0xff]
  %v1246 = vld [vmem:[%s43 + $0x170] sm:$0xff]
  %v1247 = vld [vmem:[%s43 + $0x178] sm:$0xff]
  %v1248 = vld [vmem:[%s43 + $0x180] sm:$0xff]
  %v1249 = vld [vmem:[%s43 + $0x188] sm:$0xff]
  %v1250 = vld [vmem:[%s43 + $0x190] sm:$0xff]
  %v1251 = vld [vmem:[%s43 + $0x198] sm:$0xff]
  %v1252 = vld [vmem:[%s43 + $0x1a0] sm:$0xff]
  %v1253 = vld [vmem:[%s43 + $0x1a8] sm:$0xff]
  %v1254 = vld [vmem:[%s43 + $0x1b0] sm:$0xff]
  %v1255 = vld [vmem:[%s43 + $0x1b8] sm:$0xff]
  %v1256 = vld [vmem:[%s43 + $0x1c0] sm:$0xff]
  %v1257 = vld [vmem:[%s43 + $0x1c8] sm:$0xff]
  %v1258 = vld [vmem:[%s43 + $0x1d0] sm:$0xff]
  %v1259 = vld [vmem:[%s43 + $0x1d8] sm:$0xff]
  %v1260 = vld [vmem:[%s43 + $0x1e0] sm:$0xff]
  %v1261 = vld [vmem:[%s43 + $0x1e8] sm:$0xff]
  %v1262 = vld [vmem:[%s43 + $0x1f0] sm:$0xff]
  %v1263 = vld [vmem:[%s43 + $0x1f8] sm:$0xff]
  %v1264 = vld [vmem:[%s43 + $0x200] sm:$0xff]
  %v1265 = vld [vmem:[%s43 + $0x208] sm:$0xff]
  %v1266 = vld [vmem:[%s43 + $0x210] sm:$0xff]
  %v1267 = vld [vmem:[%s43 + $0x218] sm:$0xff]
  %v1268 = vld [vmem:[%s43 + $0x220] sm:$0xff]
  %v1269 = vld [vmem:[%s43 + $0x228] sm:$0xff]
  %v1270 = vld [vmem:[%s43 + $0x230] sm:$0xff]
  %v1271 = vld [vmem:[%s43 + $0x238] sm:$0xff]
  %v1272 = vld [vmem:[%s43 + $0x240] sm:$0xff]
  %v1273 = vld [vmem:[%s43 + $0x248] sm:$0xff]
  %v1274 = vld [vmem:[%s43 + $0x250] sm:$0xff]
  %v1275 = vld [vmem:[%s43 + $0x258] sm:$0xff]
  %v1276 = vld [vmem:[%s43 + $0x260] sm:$0xff]
  %v1277 = vld [vmem:[%s43 + $0x268] sm:$0xff]
  %v1278 = vld [vmem:[%s43 + $0x270] sm:$0xff]
  %v1279 = vld [vmem:[%s43 + $0x278] sm:$0xff]
  %v1280 = vld [vmem:[%s43 + $0x280] sm:$0xff]
  %v1281 = vld [vmem:[%s43 + $0x288] sm:$0xff]
  %v1282 = vld [vmem:[%s43 + $0x290] sm:$0xff]
  %v1283 = vld [vmem:[%s43 + $0x298] sm:$0xff]
  %v1284 = vld [vmem:[%s43 + $0x2a0] sm:$0xff]
  %v1285 = vld [vmem:[%s43 + $0x2a8] sm:$0xff]
  %v1286 = vld [vmem:[%s43 + $0x2b0] sm:$0xff]
  %v1287 = vld [vmem:[%s43 + $0x2b8] sm:$0xff]
  %v1288 = vld [vmem:[%s43 + $0x2c0] sm:$0xff]
  %v1289 = vld [vmem:[%s43 + $0x2c8] sm:$0xff]
  %v1290 = vld [vmem:[%s43 + $0x2d0] sm:$0xff]
  %v1291 = vld [vmem:[%s43 + $0x2d8] sm:$0xff]
  %v1292 = vld [vmem:[%s43 + $0x2e0] sm:$0xff]
  %v1293 = vld [vmem:[%s43 + $0x2e8] sm:$0xff]
  %v1294 = vld [vmem:[%s43 + $0x2f0] sm:$0xff]
  %v1295 = vld [vmem:[%s43 + $0x2f8] sm:$0xff]
  %v1296 = vld [vmem:[%s43 + $0x300] sm:$0xff]
  %v1297 = vld [vmem:[%s43 + $0x308] sm:$0xff]
  %v1298 = vld [vmem:[%s43 + $0x310] sm:$0xff]
  %v1299 = vld [vmem:[%s43 + $0x318] sm:$0xff]
  %v1300 = vld [vmem:[%s43 + $0x320] sm:$0xff]
  %v1301 = vld [vmem:[%s43 + $0x328] sm:$0xff]
  %v1302 = vld [vmem:[%s43 + $0x330] sm:$0xff]
  %v1303 = vld [vmem:[%s43 + $0x338] sm:$0xff]
  %v1304 = vld [vmem:[%s43 + $0x340] sm:$0xff]
  %v1305 = vld [vmem:[%s43 + $0x348] sm:$0xff]
  %v1306 = vld [vmem:[%s43 + $0x350] sm:$0xff]
  %v1307 = vld [vmem:[%s43 + $0x358] sm:$0xff]
  %v1308 = vld [vmem:[%s43 + $0x360] sm:$0xff]
  %v1309 = vld [vmem:[%s43 + $0x368] sm:$0xff]
  %v1310 = vld [vmem:[%s43 + $0x370] sm:$0xff]
  %v1311 = vld [vmem:[%s43 + $0x378] sm:$0xff]
  %v1312 = vld [vmem:[%s43 + $0x380] sm:$0xff]
  %v1313 = vld [vmem:[%s43 + $0x388] sm:$0xff]
  %v1314 = vld [vmem:[%s43 + $0x390] sm:$0xff]
  %v1315 = vld [vmem:[%s43 + $0x398] sm:$0xff]
  %v1316 = vld [vmem:[%s43 + $0x3a0] sm:$0xff]
  %v1317 = vld [vmem:[%s43 + $0x3a8] sm:$0xff]
  %v1319 = vsel %vm188, %v1186, 0
  %1321 = vmatprep.subr.mxu0 0.0
  %1322 = vmatpush1.msra.mxu0 %v1200
  %1323 = vmatprep.subr.mxu0 0.0
  %1324 = vmatpush1.msra.mxu0 %v1201
  %1325 = vmatprep.subr.mxu0 0.0
  %1326 = vmatpush1.msra.mxu0 %v1202
  %1327 = vmatprep.subr.mxu0 0.0
  %1328 = vmatpush1.msra.mxu0 %v1203
  %1329 = vmatprep.subr.mxu0 0.0
  %1330 = vmatpush1.msra.mxu0 %v1204
  %1331 = vmatprep.subr.mxu0 0.0
  %1332 = vmatpush1.msra.mxu0 %v1205
  %1333 = vmatprep.subr.mxu0 0.0
  %1334 = vmatpush1.msra.mxu0 %v1206
  %1335 = vmatprep.subr.mxu0 0.0
  %1336 = vmatpush1.msra.mxu0 %v1207
  %1337 = vmatprep.subr.mxu0 0.0
  %1338 = vmatpush1.msra.mxu0 %v1208
  %1339 = vmatprep.subr.mxu0 0.0
  %1340 = vmatpush1.msra.mxu0 %v1209
  %1341 = vmatprep.subr.mxu0 0.0
  %1342 = vmatpush1.msra.mxu0 %v1210
  %1343 = vmatprep.subr.mxu0 0.0
  %1344 = vmatpush1.msra.mxu0 %v1211
  %1345 = vmatprep.subr.mxu0 0.0
  %1346 = vmatpush1.msra.mxu0 %v1212
  %1347 = vmatprep.subr.mxu0 0.0
  %1348 = vmatpush1.msra.mxu0 %v1213
  %1349 = vmatprep.subr.mxu0 0.0
  %1350 = vmatpush1.msra.mxu0 %v1214
  %1351 = vmatprep.subr.mxu0 0.0
  %1352 = vmatpush1.msra.mxu0 %v1215
  %1353 = vmatprep.subr.mxu0 0.0
  %1354 = vmatpush1.msra.mxu0 %v1216
  %1355 = vmatprep.subr.mxu0 0.0
  %1356 = vmatpush1.msra.mxu0 %v1217
  %1357 = vmatprep.subr.mxu0 0.0
  %1358 = vmatpush1.msra.mxu0 %v1218
  %1359 = vmatprep.subr.mxu0 0.0
  %1360 = vmatpush1.msra.mxu0 %v1219
  %1361 = vmatprep.subr.mxu0 0.0
  %1362 = vmatpush1.msra.mxu0 %v1220
  %1363 = vmatprep.subr.mxu0 0.0
  %1364 = vmatpush1.msra.mxu0 %v1221
  %1365 = vmatprep.subr.mxu0 0.0
  %1366 = vmatpush1.msra.mxu0 %v1222
  %1367 = vmatprep.subr.mxu0 0.0
  %1368 = vmatpush1.msra.mxu0 %v1223
  %1369 = vmatprep.subr.mxu0 0.0
  %1370 = vmatpush1.msra.mxu0 %v1224
  %1371 = vmatprep.subr.mxu0 0.0
  %1372 = vmatpush1.msra.mxu0 %v1225
  %1373 = vmatprep.subr.mxu0 0.0
  %1374 = vmatpush1.msra.mxu0 %v1226
  %1375 = vmatprep.subr.mxu0 0.0
  %1376 = vmatpush1.msra.mxu0 %v1227
  %1377 = vmatprep.subr.mxu0 0.0
  %1378 = vmatpush1.msra.mxu0 %v1228
  %1379 = vmatprep.subr.mxu0 0.0
  %1380 = vmatpush1.msra.mxu0 %v1229
  %1381 = vmatprep.subr.mxu0 0.0
  %1382 = vmatpush1.msra.mxu0 %v1230
  %1383 = vmatprep.subr.mxu0 0.0
  %1384 = vmatpush1.msra.mxu0 %v1231
  %1385 = vmatprep.mubr.f32.mxu0 %v973
  %1386 = vmatmul.mubr.f32.gmra.mrb[0].mxu0 %v971
  %v1387 = vpop.f32.mrb[0].mxu0
  %v1388 = vadd.f32 0.0, %v1387
  %v1389 = vpop.f32.mrb[0].mxu0
  %1390 = vdwg.mxu0
  %1391 = vmatprep.subr.mxu0 0.0
  %1392 = vmatpush1.msra.mxu0 %v1232
  %1393 = vmatprep.subr.mxu0 0.0
  %1394 = vmatpush1.msra.mxu0 %v1233
  %1395 = vmatprep.subr.mxu0 0.0
  %1396 = vmatpush1.msra.mxu0 %v1234
  %1397 = vmatprep.subr.mxu0 0.0
  %1398 = vmatpush1.msra.mxu0 %v1235
  %1399 = vmatprep.subr.mxu0 0.0
  %1400 = vmatpush1.msra.mxu0 %v1236
  %1401 = vmatprep.subr.mxu0 0.0
  %1402 = vmatpush1.msra.mxu0 %v1237
  %1403 = vmatprep.subr.mxu0 0.0
  %1404 = vmatpush1.msra.mxu0 %v1238
  %1405 = vmatprep.subr.mxu0 0.0
  %1406 = vmatpush1.msra.mxu0 %v1239
  %1407 = vmatprep.subr.mxu0 0.0
  %1408 = vmatpush1.msra.mxu0 %v1240
  %1409 = vmatprep.subr.mxu0 0.0
  %1410 = vmatpush1.msra.mxu0 %v1241
  %1411 = vmatprep.subr.mxu0 0.0
  %1412 = vmatpush1.msra.mxu0 %v1242
  %1413 = vmatprep.subr.mxu0 0.0
  %1414 = vmatpush1.msra.mxu0 %v1243
  %1415 = vmatprep.subr.mxu0 0.0
  %1416 = vmatpush1.msra.mxu0 %v1244
  %1417 = vmatprep.subr.mxu0 0.0
  %1418 = vmatpush1.msra.mxu0 %v1245
  %1419 = vmatprep.subr.mxu0 0.0
  %1420 = vmatpush1.msra.mxu0 %v1246
  %1421 = vmatprep.subr.mxu0 0.0
  %1422 = vmatpush1.msra.mxu0 %v1247
  %1423 = vmatprep.subr.mxu0 0.0
  %1424 = vmatpush1.msra.mxu0 %v1248
  %1425 = vmatprep.subr.mxu0 0.0
  %1426 = vmatpush1.msra.mxu0 %v1249
  %1427 = vmatprep.subr.mxu0 0.0
  %1428 = vmatpush1.msra.mxu0 %v1250
  %1429 = vmatprep.subr.mxu0 0.0
  %1430 = vmatpush1.msra.mxu0 %v1251
  %1431 = vmatprep.subr.mxu0 0.0
  %1432 = vmatpush1.msra.mxu0 %v1252
  %1433 = vmatprep.subr.mxu0 0.0
  %1434 = vmatpush1.msra.mxu0 %v1253
  %1435 = vmatprep.subr.mxu0 0.0
  %1436 = vmatpush1.msra.mxu0 %v1254
  %1437 = vmatprep.subr.mxu0 0.0
  %1438 = vmatpush1.msra.mxu0 %v1255
  %1439 = vmatprep.subr.mxu0 0.0
  %1440 = vmatpush1.msra.mxu0 %v1256
  %1441 = vmatprep.subr.mxu0 0.0
  %1442 = vmatpush1.msra.mxu0 %v1257
  %1443 = vmatprep.subr.mxu0 0.0
  %1444 = vmatpush1.msra.mxu0 %v1258
  %1445 = vmatprep.subr.mxu0 0.0
  %1446 = vmatpush1.msra.mxu0 %v1259
  %1447 = vmatprep.subr.mxu0 0.0
  %1448 = vmatpush1.msra.mxu0 %v1260
  %1449 = vmatprep.subr.mxu0 0.0
  %1450 = vmatpush1.msra.mxu0 %v1261
  %1451 = vmatprep.subr.mxu0 0.0
  %1452 = vmatpush1.msra.mxu0 %v1262
  %1453 = vmatprep.subr.mxu0 0.0
  %1454 = vmatpush1.msra.mxu0 %v1263
  %1455 = vmatprep.mubr.f32.mxu0 %v1044
  %1456 = vmatmul.mubr.f32.gmra.mrb[0].mxu0 %v1042
  %v1457 = vpop.f32.mrb[0].mxu0
  %v1458 = vadd.f32 %v1388, %v1457
  %v1459 = vpop.f32.mrb[0].mxu0
  %1460 = vdwg.mxu0
  %1461 = vmatprep.subr.mxu0 0.0
  %1462 = vmatpush1.msra.mxu0 %v1264
  %1463 = vmatprep.subr.mxu0 0.0
  %1464 = vmatpush1.msra.mxu0 %v1265
  %1465 = vmatprep.subr.mxu0 0.0
  %1466 = vmatpush1.msra.mxu0 %v1266
  %1467 = vmatprep.subr.mxu0 0.0
  %1468 = vmatpush1.msra.mxu0 %v1267
  %1469 = vmatprep.subr.mxu0 0.0
  %1470 = vmatpush1.msra.mxu0 %v1268
  %1471 = vmatprep.subr.mxu0 0.0
  %1472 = vmatpush1.msra.mxu0 %v1269
  %1473 = vmatprep.subr.mxu0 0.0
  %1474 = vmatpush1.msra.mxu0 %v1270
  %1475 = vmatprep.subr.mxu0 0.0
  %1476 = vmatpush1.msra.mxu0 %v1271
  %1477 = vmatprep.subr.mxu0 0.0
  %1478 = vmatpush1.msra.mxu0 %v1272
  %1479 = vmatprep.subr.mxu0 0.0
  %1480 = vmatpush1.msra.mxu0 %v1273
  %1481 = vmatprep.subr.mxu0 0.0
  %1482 = vmatpush1.msra.mxu0 %v1274
  %1483 = vmatprep.subr.mxu0 0.0
  %1484 = vmatpush1.msra.mxu0 %v1275
  %1485 = vmatprep.subr.mxu0 0.0
  %1486 = vmatpush1.msra.mxu0 %v1276
  %1487 = vmatprep.subr.mxu0 0.0
  %1488 = vmatpush1.msra.mxu0 %v1277
  %1489 = vmatprep.subr.mxu0 0.0
  %1490 = vmatpush1.msra.mxu0 %v1278
  %1491 = vmatprep.subr.mxu0 0.0
  %1492 = vmatpush1.msra.mxu0 %v1279
  %1493 = vmatprep.subr.mxu0 0.0
  %1494 = vmatpush1.msra.mxu0 %v1280
  %1495 = vmatprep.subr.mxu0 0.0
  %1496 = vmatpush1.msra.mxu0 %v1281
  %1497 = vmatprep.subr.mxu0 0.0
  %1498 = vmatpush1.msra.mxu0 %v1282
  %1499 = vmatprep.subr.mxu0 0.0
  %1500 = vmatpush1.msra.mxu0 %v1283
  %1501 = vmatprep.subr.mxu0 0.0
  %1502 = vmatpush1.msra.mxu0 %v1284
  %1503 = vmatprep.subr.mxu0 0.0
  %1504 = vmatpush1.msra.mxu0 %v1285
  %1505 = vmatprep.subr.mxu0 0.0
  %1506 = vmatpush1.msra.mxu0 %v1286
  %1507 = vmatprep.subr.mxu0 0.0
  %1508 = vmatpush1.msra.mxu0 %v1287
  %1509 = vmatprep.subr.mxu0 0.0
  %1510 = vmatpush1.msra.mxu0 %v1288
  %1511 = vmatprep.subr.mxu0 0.0
  %1512 = vmatpush1.msra.mxu0 %v1289
  %1513 = vmatprep.subr.mxu0 0.0
  %1514 = vmatpush1.msra.mxu0 %v1290
  %1515 = vmatprep.subr.mxu0 0.0
  %1516 = vmatpush1.msra.mxu0 %v1291
  %1517 = vmatprep.subr.mxu0 0.0
  %1518 = vmatpush1.msra.mxu0 %v1292
  %1519 = vmatprep.subr.mxu0 0.0
  %1520 = vmatpush1.msra.mxu0 %v1293
  %1521 = vmatprep.subr.mxu0 0.0
  %1522 = vmatpush1.msra.mxu0 %v1294
  %1523 = vmatprep.subr.mxu0 0.0
  %1524 = vmatpush1.msra.mxu0 %v1295
  %1525 = vmatprep.mubr.f32.mxu0 %v1115
  %1526 = vmatmul.mubr.f32.gmra.mrb[0].mxu0 %v1113
  %v1527 = vpop.f32.mrb[0].mxu0
  %v1528 = vadd.f32 %v1458, %v1527
  %v1529 = vpop.f32.mrb[0].mxu0
  %1530 = vdwg.mxu0
  %1531 = vmatprep.subr.mxu0 0.0
  %1532 = vmatpush1.msra.mxu0 %v1296
  %1533 = vmatprep.subr.mxu0 0.0
  %1534 = vmatpush1.msra.mxu0 %v1297
  %1535 = vmatprep.subr.mxu0 0.0
  %1536 = vmatpush1.msra.mxu0 %v1298
  %1537 = vmatprep.subr.mxu0 0.0
  %1538 = vmatpush1.msra.mxu0 %v1299
  %1539 = vmatprep.subr.mxu0 0.0
  %1540 = vmatpush1.msra.mxu0 %v1300
  %1541 = vmatprep.subr.mxu0 0.0
  %1542 = vmatpush1.msra.mxu0 %v1301
  %1543 = vmatprep.subr.mxu0 0.0
  %1544 = vmatpush1.msra.mxu0 %v1302
  %1545 = vmatprep.subr.mxu0 0.0
  %1546 = vmatpush1.msra.mxu0 %v1303
  %1547 = vmatprep.subr.mxu0 0.0
  %1548 = vmatpush1.msra.mxu0 %v1304
  %1549 = vmatprep.subr.mxu0 0.0
  %1550 = vmatpush1.msra.mxu0 %v1305
  %1551 = vmatprep.subr.mxu0 0.0
  %1552 = vmatpush1.msra.mxu0 %v1306
  %1553 = vmatprep.subr.mxu0 0.0
  %1554 = vmatpush1.msra.mxu0 %v1307
  %1555 = vmatprep.subr.mxu0 0.0
  %1556 = vmatpush1.msra.mxu0 %v1308
  %1557 = vmatprep.subr.mxu0 0.0
  %1558 = vmatpush1.msra.mxu0 %v1309
  %1559 = vmatprep.subr.mxu0 0.0
  %1560 = vmatpush1.msra.mxu0 %v1310
  %1561 = vmatprep.subr.mxu0 0.0
  %1562 = vmatpush1.msra.mxu0 %v1311
  %1563 = vmatprep.subr.mxu0 0.0
  %1564 = vmatpush1.msra.mxu0 %v1312
  %1565 = vmatprep.subr.mxu0 0.0
  %1566 = vmatpush1.msra.mxu0 %v1313
  %1567 = vmatprep.subr.mxu0 0.0
  %1568 = vmatpush1.msra.mxu0 %v1314
  %1569 = vmatprep.subr.mxu0 0.0
  %1570 = vmatpush1.msra.mxu0 %v1315
  %1571 = vmatprep.subr.mxu0 0.0
  %1572 = vmatpush1.msra.mxu0 %v1316
  %1573 = vmatprep.subr.mxu0 0.0
  %1574 = vmatpush1.msra.mxu0 %v1317
  %1575 = vmatprep.subr.mxu0 0.0
  %1576 = vmatpush1.msra.mxu0 0.0
  %1577 = vmatprep.subr.mxu0 0.0
  %1578 = vmatpush1.msra.mxu0 0.0
  %1579 = vmatprep.subr.mxu0 0.0
  %1580 = vmatpush1.msra.mxu0 0.0
  %1581 = vmatprep.subr.mxu0 0.0
  %1582 = vmatpush1.msra.mxu0 0.0
  %1583 = vmatprep.subr.mxu0 0.0
  %1584 = vmatpush1.msra.mxu0 0.0
  %1585 = vmatprep.subr.mxu0 0.0
  %1586 = vmatpush1.msra.mxu0 0.0
  %1587 = vmatprep.subr.mxu0 0.0
  %1588 = vmatpush1.msra.mxu0 0.0
  %1589 = vmatprep.subr.mxu0 0.0
  %1590 = vmatpush1.msra.mxu0 0.0
  %1591 = vmatprep.subr.mxu0 0.0
  %1592 = vmatpush1.msra.mxu0 0.0
  %1593 = vmatprep.subr.mxu0 0.0
  %1594 = vmatpush1.msra.mxu0 0.0
  %1595 = vmatprep.mubr.f32.mxu0 %v1319
  %1596 = vmatmul.mubr.f32.gmra.mrb[0].mxu0 %v1184
  %v1597 = vpop.f32.mrb[0].mxu0
  %v1598 = vadd.f32 %v1528, %v1597
  %v1599 = vpop.f32.mrb[0].mxu0
  %1600 = vdwg.mxu0
  %1601 = vmatprep.subr.mxu0 0.0
  %1602 = vmatpush1.msra.mxu0 %v1188
  %1603 = vmatprep.subr.mxu0 0.0
  %1604 = vmatpush1.msra.mxu0 %v1189
  %1605 = vmatprep.subr.mxu0 0.0
  %1606 = vmatpush1.msra.mxu0 %v1190
  %1607 = vmatprep.subr.mxu0 0.0
  %1608 = vmatpush1.msra.mxu0 %v1191
  %1609 = vmatprep.subr.mxu0 0.0
  %1610 = vmatpush1.msra.mxu0 %v1192
  %1611 = vmatprep.subr.mxu0 0.0
  %1612 = vmatpush1.msra.mxu0 %v1193
  %1613 = vmatprep.subr.mxu0 0.0
  %1614 = vmatpush1.msra.mxu0 %v1194
  %1615 = vmatprep.subr.mxu0 0.0
  %1616 = vmatpush1.msra.mxu0 %v1195
  %1617 = vmatprep.subr.mxu0 0.0
  %1618 = vmatpush1.msra.mxu0 %v1196
  %1619 = vmatprep.subr.mxu0 0.0
  %1620 = vmatpush1.msra.mxu0 %v1197
  %1621 = vmatprep.subr.mxu0 0.0
  %1622 = vmatpush1.msra.mxu0 %v1198
  %1623 = vmatprep.subr.mxu0 0.0
  %1624 = vmatpush1.msra.mxu0 %v1199
  %1625 = vmatprep.subr.mxu0 0.0
  %1626 = vmatpush1.msra.mxu0 0.0
  %1627 = vmatprep.subr.mxu0 0.0
  %1628 = vmatpush1.msra.mxu0 0.0
  %1629 = vmatprep.subr.mxu0 0.0
  %1630 = vmatpush1.msra.mxu0 0.0
  %1631 = vmatprep.subr.mxu0 0.0
  %1632 = vmatpush1.msra.mxu0 0.0
  %1633 = vmatprep.subr.mxu0 0.0
  %1634 = vmatpush1.msra.mxu0 0.0
  %1635 = vmatprep.subr.mxu0 0.0
  %1636 = vmatpush1.msra.mxu0 0.0
  %1637 = vmatprep.subr.mxu0 0.0
  %1638 = vmatpush1.msra.mxu0 0.0
  %1639 = vmatprep.subr.mxu0 0.0
  %1640 = vmatpush1.msra.mxu0 0.0
  %1641 = vmatprep.subr.mxu0 0.0
  %1642 = vmatpush1.msra.mxu0 0.0
  %1643 = vmatprep.subr.mxu0 0.0
  %1644 = vmatpush1.msra.mxu0 0.0
  %1645 = vmatprep.subr.mxu0 0.0
  %1646 = vmatpush1.msra.mxu0 0.0
  %1647 = vmatprep.subr.mxu0 0.0
  %1648 = vmatpush1.msra.mxu0 0.0
  %1649 = vmatprep.subr.mxu0 0.0
  %1650 = vmatpush1.msra.mxu0 0.0
  %1651 = vmatprep.subr.mxu0 0.0
  %1652 = vmatpush1.msra.mxu0 0.0
  %1653 = vmatprep.subr.mxu0 0.0
  %1654 = vmatpush1.msra.mxu0 0.0
  %1655 = vmatprep.subr.mxu0 0.0
  %1656 = vmatpush1.msra.mxu0 0.0
  %1657 = vmatprep.subr.mxu0 0.0
  %1658 = vmatpush1.msra.mxu0 0.0
  %1659 = vmatprep.subr.mxu0 0.0
  %1660 = vmatpush1.msra.mxu0 0.0
  %1661 = vmatprep.subr.mxu0 0.0
  %1662 = vmatpush1.msra.mxu0 0.0
  %1663 = vmatprep.subr.mxu0 0.0
  %1664 = vmatpush1.msra.mxu0 0.0
  %1665 = vmatprep.mubr.f32.mxu0 0.0
  %1666 = vmatmul.mubr.f32.gmra.mrb[0].mxu0 %v902
  %v1667 = vpop.f32.mrb[0].mxu0
  %v1668 = vadd.f32 %v1598, %v1667
  %v1669 = vpop.f32.mrb[0].mxu0
  %1670 = vdwg.mxu0
  %v1671 = vld [vmem:[%s45] sm:$0x1]
  %v1673 = vlaneseq
  %v1674 = vshrl.u32 %v1673, 7
  %v1675 = vsub.s32 0, %v1674
  %v1676 = vrot.slane %v1671, %v1675
  %v1678 = vadd.f32 %v1668, %v1676
  %v1679 = vld [vmem:[%s47] sm:$0xff]
  %v1680 = vld [vmem:[%s47 + $0x8] sm:$0xff]
  %v1681 = vld [vmem:[%s47 + $0x10] sm:$0xff]
  %v1682 = vld [vmem:[%s47 + $0x18] sm:$0xff]
  %v1683 = vld [vmem:[%s51] sm:$0x1]
  %v1685 = vlaneseq
  %v1686 = vshrl.u32 %v1685, 7
  %v1687 = vsub.s32 0, %v1686
  %v1688 = vrot.slane %v1683, %v1687
  %vm1690 = vcmask 261120
  %v1692 = vsel %vm1690, %v1678, 0
  %1694 = vmatprep.subr.mxu0 0.0
  %1695 = vmatpush1.msra.mxu0 %v1679
  %1696 = vmatprep.subr.mxu0 0.0
  %1697 = vmatpush1.msra.mxu0 %v1680
  %1698 = vmatprep.subr.mxu0 0.0
  %1699 = vmatpush1.msra.mxu0 %v1681
  %1700 = vmatprep.subr.mxu0 0.0
  %1701 = vmatpush1.msra.mxu0 %v1682
  %1702 = vmatprep.subr.mxu0 0.0
  %1703 = vmatpush1.msra.mxu0 0.0
  %1704 = vmatprep.subr.mxu0 0.0
  %1705 = vmatpush1.msra.mxu0 0.0
  %1706 = vmatprep.subr.mxu0 0.0
  %1707 = vmatpush1.msra.mxu0 0.0
  %1708 = vmatprep.subr.mxu0 0.0
  %1709 = vmatpush1.msra.mxu0 0.0
  %1710 = vmatprep.subr.mxu0 0.0
  %1711 = vmatpush1.msra.mxu0 0.0
  %1712 = vmatprep.subr.mxu0 0.0
  %1713 = vmatpush1.msra.mxu0 0.0
  %1714 = vmatprep.subr.mxu0 0.0
  %1715 = vmatpush1.msra.mxu0 0.0
  %1716 = vmatprep.subr.mxu0 0.0
  %1717 = vmatpush1.msra.mxu0 0.0
  %1718 = vmatprep.subr.mxu0 0.0
  %1719 = vmatpush1.msra.mxu0 0.0
  %1720 = vmatprep.subr.mxu0 0.0
  %1721 = vmatpush1.msra.mxu0 0.0
  %1722 = vmatprep.subr.mxu0 0.0
  %1723 = vmatpush1.msra.mxu0 0.0
  %1724 = vmatprep.subr.mxu0 0.0
  %1725 = vmatpush1.msra.mxu0 0.0
  %1726 = vmatprep.subr.mxu0 0.0
  %1727 = vmatpush1.msra.mxu0 0.0
  %1728 = vmatprep.subr.mxu0 0.0
  %1729 = vmatpush1.msra.mxu0 0.0
  %1730 = vmatprep.subr.mxu0 0.0
  %1731 = vmatpush1.msra.mxu0 0.0
  %1732 = vmatprep.subr.mxu0 0.0
  %1733 = vmatpush1.msra.mxu0 0.0
  %1734 = vmatprep.subr.mxu0 0.0
  %1735 = vmatpush1.msra.mxu0 0.0
  %1736 = vmatprep.subr.mxu0 0.0
  %1737 = vmatpush1.msra.mxu0 0.0
  %1738 = vmatprep.subr.mxu0 0.0
  %1739 = vmatpush1.msra.mxu0 0.0
  %1740 = vmatprep.subr.mxu0 0.0
  %1741 = vmatpush1.msra.mxu0 0.0
  %1742 = vmatprep.subr.mxu0 0.0
  %1743 = vmatpush1.msra.mxu0 0.0
  %1744 = vmatprep.subr.mxu0 0.0
  %1745 = vmatpush1.msra.mxu0 0.0
  %1746 = vmatprep.subr.mxu0 0.0
  %1747 = vmatpush1.msra.mxu0 0.0
  %1748 = vmatprep.subr.mxu0 0.0
  %1749 = vmatpush1.msra.mxu0 0.0
  %1750 = vmatprep.subr.mxu0 0.0
  %1751 = vmatpush1.msra.mxu0 0.0
  %1752 = vmatprep.subr.mxu0 0.0
  %1753 = vmatpush1.msra.mxu0 0.0
  %1754 = vmatprep.subr.mxu0 0.0
  %1755 = vmatpush1.msra.mxu0 0.0
  %1756 = vmatprep.subr.mxu0 0.0
  %1757 = vmatpush1.msra.mxu0 0.0
  %1758 = vmatprep.mubr.f32.mxu0 0.0
  %1759 = vmatmul.mubr.f32.gmra.mrb[0].mxu0 %v1692
  %v1760 = vpop.f32.mrb[0].mxu0
  %v1761 = vadd.f32 %v1688, %v1760
  %v1762 = vpop.f32.mrb[0].mxu0
  %1763 = vdwg.mxu0
  %v1764 = vld [vmem:[%s49] sm:$0xff]
  %v1765 = vld [vmem:[%s49 + $0x8] sm:$0xff]
  %v1766 = vld [vmem:[%s49 + $0x10] sm:$0xff]
  %v1767 = vld [vmem:[%s49 + $0x18] sm:$0xff]
  %v1768 = vld [vmem:[%s53] sm:$0x1]
  %v1770 = vlaneseq
  %v1771 = vshrl.u32 %v1770, 7
  %v1772 = vsub.s32 0, %v1771
  %v1773 = vrot.slane %v1768, %v1772
  %1775 = vmatprep.subr.mxu0 0.0
  %1776 = vmatpush1.msra.mxu0 %v1764
  %1777 = vmatprep.subr.mxu0 0.0
  %1778 = vmatpush1.msra.mxu0 %v1765
  %1779 = vmatprep.subr.mxu0 0.0
  %1780 = vmatpush1.msra.mxu0 %v1766
  %1781 = vmatprep.subr.mxu0 0.0
  %1782 = vmatpush1.msra.mxu0 %v1767
  %1783 = vmatprep.subr.mxu0 0.0
  %1784 = vmatpush1.msra.mxu0 0.0
  %1785 = vmatprep.subr.mxu0 0.0
  %1786 = vmatpush1.msra.mxu0 0.0
  %1787 = vmatprep.subr.mxu0 0.0
  %1788 = vmatpush1.msra.mxu0 0.0
  %1789 = vmatprep.subr.mxu0 0.0
  %1790 = vmatpush1.msra.mxu0 0.0
  %1791 = vmatprep.subr.mxu0 0.0
  %1792 = vmatpush1.msra.mxu0 0.0
  %1793 = vmatprep.subr.mxu0 0.0
  %1794 = vmatpush1.msra.mxu0 0.0
  %1795 = vmatprep.subr.mxu0 0.0
  %1796 = vmatpush1.msra.mxu0 0.0
  %1797 = vmatprep.subr.mxu0 0.0
  %1798 = vmatpush1.msra.mxu0 0.0
  %1799 = vmatprep.subr.mxu0 0.0
  %1800 = vmatpush1.msra.mxu0 0.0
  %1801 = vmatprep.subr.mxu0 0.0
  %1802 = vmatpush1.msra.mxu0 0.0
  %1803 = vmatprep.subr.mxu0 0.0
  %1804 = vmatpush1.msra.mxu0 0.0
  %1805 = vmatprep.subr.mxu0 0.0
  %1806 = vmatpush1.msra.mxu0 0.0
  %1807 = vmatprep.subr.mxu0 0.0
  %1808 = vmatpush1.msra.mxu0 0.0
  %1809 = vmatprep.subr.mxu0 0.0
  %1810 = vmatpush1.msra.mxu0 0.0
  %1811 = vmatprep.subr.mxu0 0.0
  %1812 = vmatpush1.msra.mxu0 0.0
  %1813 = vmatprep.subr.mxu0 0.0
  %1814 = vmatpush1.msra.mxu0 0.0
  %1815 = vmatprep.subr.mxu0 0.0
  %1816 = vmatpush1.msra.mxu0 0.0
  %1817 = vmatprep.subr.mxu0 0.0
  %1818 = vmatpush1.msra.mxu0 0.0
  %1819 = vmatprep.subr.mxu0 0.0
  %1820 = vmatpush1.msra.mxu0 0.0
  %1821 = vmatprep.subr.mxu0 0.0
  %1822 = vmatpush1.msra.mxu0 0.0
  %1823 = vmatprep.subr.mxu0 0.0
  %1824 = vmatpush1.msra.mxu0 0.0
  %1825 = vmatprep.subr.mxu0 0.0
  %1826 = vmatpush1.msra.mxu0 0.0
  %1827 = vmatprep.subr.mxu0 0.0
  %1828 = vmatpush1.msra.mxu0 0.0
  %1829 = vmatprep.subr.mxu0 0.0
  %1830 = vmatpush1.msra.mxu0 0.0
  %1831 = vmatprep.subr.mxu0 0.0
  %1832 = vmatpush1.msra.mxu0 0.0
  %1833 = vmatprep.subr.mxu0 0.0
  %1834 = vmatpush1.msra.mxu0 0.0
  %1835 = vmatprep.subr.mxu0 0.0
  %1836 = vmatpush1.msra.mxu0 0.0
  %1837 = vmatprep.subr.mxu0 0.0
  %1838 = vmatpush1.msra.mxu0 0.0
  %1839 = vmatprep.mubr.f32.mxu0 0.0
  %1840 = vmatmul.mubr.f32.gmra.mrb[0].mxu0 %v1692
  %v1841 = vpop.f32.mrb[0].mxu0
  %v1842 = vadd.f32 %v1773, %v1841
  %v1843 = vpop.f32.mrb[0].mxu0
  %1844 = vdwg.mxu0
  %v1845 = vld [vmem:[%s55] sm:$0xff]
  %v1846 = vld [vmem:[%s55 + $0x8] sm:$0xff]
  %v1847 = vld [vmem:[%s55 + $0x10] sm:$0xff]
  %v1848 = vld [vmem:[%s55 + $0x18] sm:$0xff]
  %v1849 = vld [vmem:[%s55 + $0x20] sm:$0xff]
  %v1850 = vld [vmem:[%s55 + $0x28] sm:$0xff]
  %v1851 = vld [vmem:[%s55 + $0x30] sm:$0xff]
  %v1852 = vld [vmem:[%s55 + $0x38] sm:$0xff]
  %v1853 = vld [vmem:[%s55 + $0x40] sm:$0xff]
  %v1854 = vld [vmem:[%s55 + $0x48] sm:$0xff]
  %v1855 = vld [vmem:[%s55 + $0x50] sm:$0xff]
  %v1856 = vld [vmem:[%s55 + $0x58] sm:$0xff]
  %v1857 = vld [vmem:[%s55 + $0x60] sm:$0xff]
  %v1858 = vld [vmem:[%s55 + $0x68] sm:$0xff]
  %v1859 = vld [vmem:[%s55 + $0x70] sm:$0xff]
  %v1860 = vld [vmem:[%s55 + $0x78] sm:$0xff]
  %v1861 = vld [vmem:[%s55 + $0x80] sm:$0xff]
  %v1862 = vld [vmem:[%s55 + $0x88] sm:$0xff]
  %v1863 = vld [vmem:[%s55 + $0x90] sm:$0xff]
  %v1864 = vld [vmem:[%s55 + $0x98] sm:$0xff]
  %v1865 = vld [vmem:[%s55 + $0xa0] sm:$0xff]
  %v1866 = vld [vmem:[%s55 + $0xa8] sm:$0xff]
  %v1867 = vld [vmem:[%s55 + $0xb0] sm:$0xff]
  %v1868 = vld [vmem:[%s55 + $0xb8] sm:$0xff]
  %v1869 = vld [vmem:[%s55 + $0xc0] sm:$0xff]
  %v1870 = vld [vmem:[%s55 + $0xc8] sm:$0xff]
  %v1871 = vld [vmem:[%s55 + $0xd0] sm:$0xff]
  %v1872 = vld [vmem:[%s55 + $0xd8] sm:$0xff]
  %v1873 = vld [vmem:[%s55 + $0xe0] sm:$0xff]
  %v1874 = vld [vmem:[%s55 + $0xe8] sm:$0xff]
  %v1875 = vld [vmem:[%s55 + $0xf0] sm:$0xff]
  %v1876 = vld [vmem:[%s55 + $0xf8] sm:$0xff]
  %v1877 = vld [vmem:[%s55 + $0x100] sm:$0xff]
  %v1878 = vld [vmem:[%s55 + $0x108] sm:$0xff]
  %v1879 = vld [vmem:[%s55 + $0x110] sm:$0xff]
  %v1880 = vld [vmem:[%s55 + $0x118] sm:$0xff]
  %v1881 = vld [vmem:[%s55 + $0x120] sm:$0xff]
  %v1882 = vld [vmem:[%s55 + $0x128] sm:$0xff]
  %v1883 = vld [vmem:[%s55 + $0x130] sm:$0xff]
  %v1884 = vld [vmem:[%s55 + $0x138] sm:$0xff]
  %v1885 = vld [vmem:[%s55 + $0x140] sm:$0xff]
  %v1886 = vld [vmem:[%s55 + $0x148] sm:$0xff]
  %v1887 = vld [vmem:[%s55 + $0x150] sm:$0xff]
  %v1888 = vld [vmem:[%s55 + $0x158] sm:$0xff]
  %v1889 = vld [vmem:[%s55 + $0x160] sm:$0xff]
  %v1890 = vld [vmem:[%s55 + $0x168] sm:$0xff]
  %v1891 = vld [vmem:[%s55 + $0x170] sm:$0xff]
  %v1892 = vld [vmem:[%s55 + $0x178] sm:$0xff]
  %v1893 = vld [vmem:[%s55 + $0x180] sm:$0xff]
  %v1894 = vld [vmem:[%s55 + $0x188] sm:$0xff]
  %v1895 = vld [vmem:[%s55 + $0x190] sm:$0xff]
  %v1896 = vld [vmem:[%s55 + $0x198] sm:$0xff]
  %v1897 = vld [vmem:[%s55 + $0x1a0] sm:$0xff]
  %v1898 = vld [vmem:[%s55 + $0x1a8] sm:$0xff]
  %v1899 = vld [vmem:[%s55 + $0x1b0] sm:$0xff]
  %v1900 = vld [vmem:[%s55 + $0x1b8] sm:$0xff]
  %v1901 = vld [vmem:[%s55 + $0x1c0] sm:$0xff]
  %v1902 = vld [vmem:[%s55 + $0x1c8] sm:$0xff]
  %v1903 = vld [vmem:[%s55 + $0x1d0] sm:$0xff]
  %v1904 = vld [vmem:[%s55 + $0x1d8] sm:$0xff]
  %v1905 = vld [vmem:[%s55 + $0x1e0] sm:$0xff]
  %v1906 = vld [vmem:[%s55 + $0x1e8] sm:$0xff]
  %v1907 = vld [vmem:[%s55 + $0x1f0] sm:$0xff]
  %v1908 = vld [vmem:[%s55 + $0x1f8] sm:$0xff]
  %v1909 = vld [vmem:[%s55 + $0x200] sm:$0xff]
  %v1910 = vld [vmem:[%s55 + $0x208] sm:$0xff]
  %v1911 = vld [vmem:[%s55 + $0x210] sm:$0xff]
  %v1912 = vld [vmem:[%s55 + $0x218] sm:$0xff]
  %v1913 = vld [vmem:[%s55 + $0x220] sm:$0xff]
  %v1914 = vld [vmem:[%s55 + $0x228] sm:$0xff]
  %v1915 = vld [vmem:[%s55 + $0x230] sm:$0xff]
  %v1916 = vld [vmem:[%s55 + $0x238] sm:$0xff]
  %v1917 = vld [vmem:[%s55 + $0x240] sm:$0xff]
  %v1918 = vld [vmem:[%s55 + $0x248] sm:$0xff]
  %v1919 = vld [vmem:[%s55 + $0x250] sm:$0xff]
  %v1920 = vld [vmem:[%s55 + $0x258] sm:$0xff]
  %v1921 = vld [vmem:[%s55 + $0x260] sm:$0xff]
  %v1922 = vld [vmem:[%s55 + $0x268] sm:$0xff]
  %v1923 = vld [vmem:[%s55 + $0x270] sm:$0xff]
  %v1924 = vld [vmem:[%s55 + $0x278] sm:$0xff]
  %v1925 = vld [vmem:[%s55 + $0x280] sm:$0xff]
  %v1926 = vld [vmem:[%s55 + $0x288] sm:$0xff]
  %v1927 = vld [vmem:[%s55 + $0x290] sm:$0xff]
  %v1928 = vld [vmem:[%s55 + $0x298] sm:$0xff]
  %v1929 = vld [vmem:[%s55 + $0x2a0] sm:$0xff]
  %v1930 = vld [vmem:[%s55 + $0x2a8] sm:$0xff]
  %v1931 = vld [vmem:[%s55 + $0x2b0] sm:$0xff]
  %v1932 = vld [vmem:[%s55 + $0x2b8] sm:$0xff]
  %v1933 = vld [vmem:[%s55 + $0x2c0] sm:$0xff]
  %v1934 = vld [vmem:[%s55 + $0x2c8] sm:$0xff]
  %v1935 = vld [vmem:[%s55 + $0x2d0] sm:$0xff]
  %v1936 = vld [vmem:[%s55 + $0x2d8] sm:$0xff]
  %v1937 = vld [vmem:[%s55 + $0x2e0] sm:$0xff]
  %v1938 = vld [vmem:[%s55 + $0x2e8] sm:$0xff]
  %v1939 = vld [vmem:[%s55 + $0x2f0] sm:$0xff]
  %v1940 = vld [vmem:[%s55 + $0x2f8] sm:$0xff]
  %v1941 = vld [vmem:[%s55 + $0x300] sm:$0xff]
  %v1942 = vld [vmem:[%s55 + $0x308] sm:$0xff]
  %v1943 = vld [vmem:[%s55 + $0x310] sm:$0xff]
  %v1944 = vld [vmem:[%s55 + $0x318] sm:$0xff]
  %v1945 = vld [vmem:[%s55 + $0x320] sm:$0xff]
  %v1946 = vld [vmem:[%s55 + $0x328] sm:$0xff]
  %v1947 = vld [vmem:[%s55 + $0x330] sm:$0xff]
  %v1948 = vld [vmem:[%s55 + $0x338] sm:$0xff]
  %v1949 = vld [vmem:[%s55 + $0x340] sm:$0xff]
  %v1950 = vld [vmem:[%s55 + $0x348] sm:$0xff]
  %v1951 = vld [vmem:[%s55 + $0x350] sm:$0xff]
  %v1952 = vld [vmem:[%s55 + $0x358] sm:$0xff]
  %v1953 = vld [vmem:[%s55 + $0x360] sm:$0xff]
  %v1954 = vld [vmem:[%s55 + $0x368] sm:$0xff]
  %v1955 = vld [vmem:[%s55 + $0x370] sm:$0xff]
  %v1956 = vld [vmem:[%s55 + $0x378] sm:$0xff]
  %v1957 = vld [vmem:[%s55 + $0x380] sm:$0xff]
  %v1958 = vld [vmem:[%s55 + $0x388] sm:$0xff]
  %v1959 = vld [vmem:[%s55 + $0x390] sm:$0xff]
  %v1960 = vld [vmem:[%s55 + $0x398] sm:$0xff]
  %v1961 = vld [vmem:[%s55 + $0x3a0] sm:$0xff]
  %v1962 = vld [vmem:[%s55 + $0x3a8] sm:$0xff]
  %v1963 = vld [vmem:[%s59] sm:$0x1]
  %v1965 = vlaneseq
  %v1966 = vshrl.u32 %v1965, 7
  %v1967 = vsub.s32 0, %v1966
  %v1968 = vrot.slane %v1963, %v1967
  %1970 = vmatprep.subr.mxu0 0.0
  %1971 = vmatpush1.msra.mxu0 %v1845
  %1972 = vmatprep.subr.mxu0 0.0
  %1973 = vmatpush1.msra.mxu0 %v1846
  %1974 = vmatprep.subr.mxu0 0.0
  %1975 = vmatpush1.msra.mxu0 %v1847
  %1976 = vmatprep.subr.mxu0 0.0
  %1977 = vmatpush1.msra.mxu0 %v1848
  %1978 = vmatprep.subr.mxu0 0.0
  %1979 = vmatpush1.msra.mxu0 %v1849
  %1980 = vmatprep.subr.mxu0 0.0
  %1981 = vmatpush1.msra.mxu0 %v1850
  %1982 = vmatprep.subr.mxu0 0.0
  %1983 = vmatpush1.msra.mxu0 %v1851
  %1984 = vmatprep.subr.mxu0 0.0
  %1985 = vmatpush1.msra.mxu0 %v1852
  %1986 = vmatprep.subr.mxu0 0.0
  %1987 = vmatpush1.msra.mxu0 %v1853
  %1988 = vmatprep.subr.mxu0 0.0
  %1989 = vmatpush1.msra.mxu0 %v1854
  %1990 = vmatprep.subr.mxu0 0.0
  %1991 = vmatpush1.msra.mxu0 %v1855
  %1992 = vmatprep.subr.mxu0 0.0
  %1993 = vmatpush1.msra.mxu0 %v1856
  %1994 = vmatprep.subr.mxu0 0.0
  %1995 = vmatpush1.msra.mxu0 %v1857
  %1996 = vmatprep.subr.mxu0 0.0
  %1997 = vmatpush1.msra.mxu0 %v1858
  %1998 = vmatprep.subr.mxu0 0.0
  %1999 = vmatpush1.msra.mxu0 %v1859
  %2000 = vmatprep.subr.mxu0 0.0
  %2001 = vmatpush1.msra.mxu0 %v1860
  %2002 = vmatprep.subr.mxu0 0.0
  %2003 = vmatpush1.msra.mxu0 %v1861
  %2004 = vmatprep.subr.mxu0 0.0
  %2005 = vmatpush1.msra.mxu0 %v1862
  %2006 = vmatprep.subr.mxu0 0.0
  %2007 = vmatpush1.msra.mxu0 %v1863
  %2008 = vmatprep.subr.mxu0 0.0
  %2009 = vmatpush1.msra.mxu0 %v1864
  %2010 = vmatprep.subr.mxu0 0.0
  %2011 = vmatpush1.msra.mxu0 %v1865
  %2012 = vmatprep.subr.mxu0 0.0
  %2013 = vmatpush1.msra.mxu0 %v1866
  %2014 = vmatprep.subr.mxu0 0.0
  %2015 = vmatpush1.msra.mxu0 %v1867
  %2016 = vmatprep.subr.mxu0 0.0
  %2017 = vmatpush1.msra.mxu0 %v1868
  %2018 = vmatprep.subr.mxu0 0.0
  %2019 = vmatpush1.msra.mxu0 %v1869
  %2020 = vmatprep.subr.mxu0 0.0
  %2021 = vmatpush1.msra.mxu0 %v1870
  %2022 = vmatprep.subr.mxu0 0.0
  %2023 = vmatpush1.msra.mxu0 %v1871
  %2024 = vmatprep.subr.mxu0 0.0
  %2025 = vmatpush1.msra.mxu0 %v1872
  %2026 = vmatprep.subr.mxu0 0.0
  %2027 = vmatpush1.msra.mxu0 %v1873
  %2028 = vmatprep.subr.mxu0 0.0
  %2029 = vmatpush1.msra.mxu0 %v1874
  %2030 = vmatprep.subr.mxu0 0.0
  %2031 = vmatpush1.msra.mxu0 %v1875
  %2032 = vmatprep.subr.mxu0 0.0
  %2033 = vmatpush1.msra.mxu0 %v1876
  %2034 = vmatprep.mubr.f32.mxu0 %v973
  %2035 = vmatmul.mubr.f32.gmra.mrb[0].mxu0 %v971
  %v2036 = vpop.f32.mrb[0].mxu0
  %v2037 = vadd.f32 %v1968, %v2036
  %v2038 = vpop.f32.mrb[0].mxu0
  %2039 = vdwg.mxu0
  %2040 = vmatprep.subr.mxu0 0.0
  %2041 = vmatpush1.msra.mxu0 %v1877
  %2042 = vmatprep.subr.mxu0 0.0
  %2043 = vmatpush1.msra.mxu0 %v1878
  %2044 = vmatprep.subr.mxu0 0.0
  %2045 = vmatpush1.msra.mxu0 %v1879
  %2046 = vmatprep.subr.mxu0 0.0
  %2047 = vmatpush1.msra.mxu0 %v1880
  %2048 = vmatprep.subr.mxu0 0.0
  %2049 = vmatpush1.msra.mxu0 %v1881
  %2050 = vmatprep.subr.mxu0 0.0
  %2051 = vmatpush1.msra.mxu0 %v1882
  %2052 = vmatprep.subr.mxu0 0.0
  %2053 = vmatpush1.msra.mxu0 %v1883
  %2054 = vmatprep.subr.mxu0 0.0
  %2055 = vmatpush1.msra.mxu0 %v1884
  %2056 = vmatprep.subr.mxu0 0.0
  %2057 = vmatpush1.msra.mxu0 %v1885
  %2058 = vmatprep.subr.mxu0 0.0
  %2059 = vmatpush1.msra.mxu0 %v1886
  %2060 = vmatprep.subr.mxu0 0.0
  %2061 = vmatpush1.msra.mxu0 %v1887
  %2062 = vmatprep.subr.mxu0 0.0
  %2063 = vmatpush1.msra.mxu0 %v1888
  %2064 = vmatprep.subr.mxu0 0.0
  %2065 = vmatpush1.msra.mxu0 %v1889
  %2066 = vmatprep.subr.mxu0 0.0
  %2067 = vmatpush1.msra.mxu0 %v1890
  %2068 = vmatprep.subr.mxu0 0.0
  %2069 = vmatpush1.msra.mxu0 %v1891
  %2070 = vmatprep.subr.mxu0 0.0
  %2071 = vmatpush1.msra.mxu0 %v1892
  %2072 = vmatprep.subr.mxu0 0.0
  %2073 = vmatpush1.msra.mxu0 %v1893
  %2074 = vmatprep.subr.mxu0 0.0
  %2075 = vmatpush1.msra.mxu0 %v1894
  %2076 = vmatprep.subr.mxu0 0.0
  %2077 = vmatpush1.msra.mxu0 %v1895
  %2078 = vmatprep.subr.mxu0 0.0
  %2079 = vmatpush1.msra.mxu0 %v1896
  %2080 = vmatprep.subr.mxu0 0.0
  %2081 = vmatpush1.msra.mxu0 %v1897
  %2082 = vmatprep.subr.mxu0 0.0
  %2083 = vmatpush1.msra.mxu0 %v1898
  %2084 = vmatprep.subr.mxu0 0.0
  %2085 = vmatpush1.msra.mxu0 %v1899
  %2086 = vmatprep.subr.mxu0 0.0
  %2087 = vmatpush1.msra.mxu0 %v1900
  %2088 = vmatprep.subr.mxu0 0.0
  %2089 = vmatpush1.msra.mxu0 %v1901
  %2090 = vmatprep.subr.mxu0 0.0
  %2091 = vmatpush1.msra.mxu0 %v1902
  %2092 = vmatprep.subr.mxu0 0.0
  %2093 = vmatpush1.msra.mxu0 %v1903
  %2094 = vmatprep.subr.mxu0 0.0
  %2095 = vmatpush1.msra.mxu0 %v1904
  %2096 = vmatprep.subr.mxu0 0.0
  %2097 = vmatpush1.msra.mxu0 %v1905
  %2098 = vmatprep.subr.mxu0 0.0
  %2099 = vmatpush1.msra.mxu0 %v1906
  %2100 = vmatprep.subr.mxu0 0.0
  %2101 = vmatpush1.msra.mxu0 %v1907
  %2102 = vmatprep.subr.mxu0 0.0
  %2103 = vmatpush1.msra.mxu0 %v1908
  %2104 = vmatprep.mubr.f32.mxu0 %v1044
  %2105 = vmatmul.mubr.f32.gmra.mrb[0].mxu0 %v1042
  %v2106 = vpop.f32.mrb[0].mxu0
  %v2107 = vadd.f32 %v2037, %v2106
  %v2108 = vpop.f32.mrb[0].mxu0
  %2109 = vdwg.mxu0
  %2110 = vmatprep.subr.mxu0 0.0
  %2111 = vmatpush1.msra.mxu0 %v1909
  %2112 = vmatprep.subr.mxu0 0.0
  %2113 = vmatpush1.msra.mxu0 %v1910
  %2114 = vmatprep.subr.mxu0 0.0
  %2115 = vmatpush1.msra.mxu0 %v1911
  %2116 = vmatprep.subr.mxu0 0.0
  %2117 = vmatpush1.msra.mxu0 %v1912
  %2118 = vmatprep.subr.mxu0 0.0
  %2119 = vmatpush1.msra.mxu0 %v1913
  %2120 = vmatprep.subr.mxu0 0.0
  %2121 = vmatpush1.msra.mxu0 %v1914
  %2122 = vmatprep.subr.mxu0 0.0
  %2123 = vmatpush1.msra.mxu0 %v1915
  %2124 = vmatprep.subr.mxu0 0.0
  %2125 = vmatpush1.msra.mxu0 %v1916
  %2126 = vmatprep.subr.mxu0 0.0
  %2127 = vmatpush1.msra.mxu0 %v1917
  %2128 = vmatprep.subr.mxu0 0.0
  %2129 = vmatpush1.msra.mxu0 %v1918
  %2130 = vmatprep.subr.mxu0 0.0
  %2131 = vmatpush1.msra.mxu0 %v1919
  %2132 = vmatprep.subr.mxu0 0.0
  %2133 = vmatpush1.msra.mxu0 %v1920
  %2134 = vmatprep.subr.mxu0 0.0
  %2135 = vmatpush1.msra.mxu0 %v1921
  %2136 = vmatprep.subr.mxu0 0.0
  %2137 = vmatpush1.msra.mxu0 %v1922
  %2138 = vmatprep.subr.mxu0 0.0
  %2139 = vmatpush1.msra.mxu0 %v1923
  %2140 = vmatprep.subr.mxu0 0.0
  %2141 = vmatpush1.msra.mxu0 %v1924
  %2142 = vmatprep.subr.mxu0 0.0
  %2143 = vmatpush1.msra.mxu0 %v1925
  %2144 = vmatprep.subr.mxu0 0.0
  %2145 = vmatpush1.msra.mxu0 %v1926
  %2146 = vmatprep.subr.mxu0 0.0
  %2147 = vmatpush1.msra.mxu0 %v1927
  %2148 = vmatprep.subr.mxu0 0.0
  %2149 = vmatpush1.msra.mxu0 %v1928
  %2150 = vmatprep.subr.mxu0 0.0
  %2151 = vmatpush1.msra.mxu0 %v1929
  %2152 = vmatprep.subr.mxu0 0.0
  %2153 = vmatpush1.msra.mxu0 %v1930
  %2154 = vmatprep.subr.mxu0 0.0
  %2155 = vmatpush1.msra.mxu0 %v1931
  %2156 = vmatprep.subr.mxu0 0.0
  %2157 = vmatpush1.msra.mxu0 %v1932
  %2158 = vmatprep.subr.mxu0 0.0
  %2159 = vmatpush1.msra.mxu0 %v1933
  %2160 = vmatprep.subr.mxu0 0.0
  %2161 = vmatpush1.msra.mxu0 %v1934
  %2162 = vmatprep.subr.mxu0 0.0
  %2163 = vmatpush1.msra.mxu0 %v1935
  %2164 = vmatprep.subr.mxu0 0.0
  %2165 = vmatpush1.msra.mxu0 %v1936
  %2166 = vmatprep.subr.mxu0 0.0
  %2167 = vmatpush1.msra.mxu0 %v1937
  %2168 = vmatprep.subr.mxu0 0.0
  %2169 = vmatpush1.msra.mxu0 %v1938
  %2170 = vmatprep.subr.mxu0 0.0
  %2171 = vmatpush1.msra.mxu0 %v1939
  %2172 = vmatprep.subr.mxu0 0.0
  %2173 = vmatpush1.msra.mxu0 %v1940
  %2174 = vmatprep.mubr.f32.mxu0 %v1115
  %2175 = vmatmul.mubr.f32.gmra.mrb[0].mxu0 %v1113
  %v2176 = vpop.f32.mrb[0].mxu0
  %v2177 = vadd.f32 %v2107, %v2176
  %v2178 = vpop.f32.mrb[0].mxu0
  %2179 = vdwg.mxu0
  %2180 = vmatprep.subr.mxu0 0.0
  %2181 = vmatpush1.msra.mxu0 %v1941
  %2182 = vmatprep.subr.mxu0 0.0
  %2183 = vmatpush1.msra.mxu0 %v1942
  %2184 = vmatprep.subr.mxu0 0.0
  %2185 = vmatpush1.msra.mxu0 %v1943
  %2186 = vmatprep.subr.mxu0 0.0
  %2187 = vmatpush1.msra.mxu0 %v1944
  %2188 = vmatprep.subr.mxu0 0.0
  %2189 = vmatpush1.msra.mxu0 %v1945
  %2190 = vmatprep.subr.mxu0 0.0
  %2191 = vmatpush1.msra.mxu0 %v1946
  %2192 = vmatprep.subr.mxu0 0.0
  %2193 = vmatpush1.msra.mxu0 %v1947
  %2194 = vmatprep.subr.mxu0 0.0
  %2195 = vmatpush1.msra.mxu0 %v1948
  %2196 = vmatprep.subr.mxu0 0.0
  %2197 = vmatpush1.msra.mxu0 %v1949
  %2198 = vmatprep.subr.mxu0 0.0
  %2199 = vmatpush1.msra.mxu0 %v1950
  %2200 = vmatprep.subr.mxu0 0.0
  %2201 = vmatpush1.msra.mxu0 %v1951
  %2202 = vmatprep.subr.mxu0 0.0
  %2203 = vmatpush1.msra.mxu0 %v1952
  %2204 = vmatprep.subr.mxu0 0.0
  %2205 = vmatpush1.msra.mxu0 %v1953
  %2206 = vmatprep.subr.mxu0 0.0
  %2207 = vmatpush1.msra.mxu0 %v1954
  %2208 = vmatprep.subr.mxu0 0.0
  %2209 = vmatpush1.msra.mxu0 %v1955
  %2210 = vmatprep.subr.mxu0 0.0
  %2211 = vmatpush1.msra.mxu0 %v1956
  %2212 = vmatprep.subr.mxu0 0.0
  %2213 = vmatpush1.msra.mxu0 %v1957
  %2214 = vmatprep.subr.mxu0 0.0
  %2215 = vmatpush1.msra.mxu0 %v1958
  %2216 = vmatprep.subr.mxu0 0.0
  %2217 = vmatpush1.msra.mxu0 %v1959
  %2218 = vmatprep.subr.mxu0 0.0
  %2219 = vmatpush1.msra.mxu0 %v1960
  %2220 = vmatprep.subr.mxu0 0.0
  %2221 = vmatpush1.msra.mxu0 %v1961
  %2222 = vmatprep.subr.mxu0 0.0
  %2223 = vmatpush1.msra.mxu0 %v1962
  %2224 = vmatprep.subr.mxu0 0.0
  %2225 = vmatpush1.msra.mxu0 0.0
  %2226 = vmatprep.subr.mxu0 0.0
  %2227 = vmatpush1.msra.mxu0 0.0
  %2228 = vmatprep.subr.mxu0 0.0
  %2229 = vmatpush1.msra.mxu0 0.0
  %2230 = vmatprep.subr.mxu0 0.0
  %2231 = vmatpush1.msra.mxu0 0.0
  %2232 = vmatprep.subr.mxu0 0.0
  %2233 = vmatpush1.msra.mxu0 0.0
  %2234 = vmatprep.subr.mxu0 0.0
  %2235 = vmatpush1.msra.mxu0 0.0
  %2236 = vmatprep.subr.mxu0 0.0
  %2237 = vmatpush1.msra.mxu0 0.0
  %2238 = vmatprep.subr.mxu0 0.0
  %2239 = vmatpush1.msra.mxu0 0.0
  %2240 = vmatprep.subr.mxu0 0.0
  %2241 = vmatpush1.msra.mxu0 0.0
  %2242 = vmatprep.subr.mxu0 0.0
  %2243 = vmatpush1.msra.mxu0 0.0
  %2244 = vmatprep.mubr.f32.mxu0 %v1319
  %2245 = vmatmul.mubr.f32.gmra.mrb[0].mxu0 %v1184
  %v2246 = vpop.f32.mrb[0].mxu0
  %v2247 = vadd.f32 %v2177, %v2246
  %v2248 = vpop.f32.mrb[0].mxu0
  %2249 = vdwg.mxu0
  %v2250 = vld [vmem:[%s57] sm:$0xff]
  %v2251 = vld [vmem:[%s57 + $0x8] sm:$0xff]
  %v2252 = vld [vmem:[%s57 + $0x10] sm:$0xff]
  %v2253 = vld [vmem:[%s57 + $0x18] sm:$0xff]
  %v2254 = vld [vmem:[%s57 + $0x20] sm:$0xff]
  %v2255 = vld [vmem:[%s57 + $0x28] sm:$0xff]
  %v2256 = vld [vmem:[%s57 + $0x30] sm:$0xff]
  %v2257 = vld [vmem:[%s57 + $0x38] sm:$0xff]
  %v2258 = vld [vmem:[%s57 + $0x40] sm:$0xff]
  %v2259 = vld [vmem:[%s57 + $0x48] sm:$0xff]
  %v2260 = vld [vmem:[%s57 + $0x50] sm:$0xff]
  %v2261 = vld [vmem:[%s57 + $0x58] sm:$0xff]
  %v2262 = vld [vmem:[%s57 + $0x60] sm:$0xff]
  %v2263 = vld [vmem:[%s57 + $0x68] sm:$0xff]
  %v2264 = vld [vmem:[%s57 + $0x70] sm:$0xff]
  %v2265 = vld [vmem:[%s57 + $0x78] sm:$0xff]
  %v2266 = vld [vmem:[%s57 + $0x80] sm:$0xff]
  %v2267 = vld [vmem:[%s57 + $0x88] sm:$0xff]
  %v2268 = vld [vmem:[%s57 + $0x90] sm:$0xff]
  %v2269 = vld [vmem:[%s57 + $0x98] sm:$0xff]
  %v2270 = vld [vmem:[%s57 + $0xa0] sm:$0xff]
  %v2271 = vld [vmem:[%s57 + $0xa8] sm:$0xff]
  %v2272 = vld [vmem:[%s57 + $0xb0] sm:$0xff]
  %v2273 = vld [vmem:[%s57 + $0xb8] sm:$0xff]
  %v2274 = vld [vmem:[%s57 + $0xc0] sm:$0xff]
  %v2275 = vld [vmem:[%s57 + $0xc8] sm:$0xff]
  %v2276 = vld [vmem:[%s57 + $0xd0] sm:$0xff]
  %v2277 = vld [vmem:[%s57 + $0xd8] sm:$0xff]
  %v2278 = vld [vmem:[%s57 + $0xe0] sm:$0xff]
  %v2279 = vld [vmem:[%s57 + $0xe8] sm:$0xff]
  %v2280 = vld [vmem:[%s57 + $0xf0] sm:$0xff]
  %v2281 = vld [vmem:[%s57 + $0xf8] sm:$0xff]
  %v2282 = vld [vmem:[%s57 + $0x100] sm:$0xff]
  %v2283 = vld [vmem:[%s57 + $0x108] sm:$0xff]
  %v2284 = vld [vmem:[%s57 + $0x110] sm:$0xff]
  %v2285 = vld [vmem:[%s57 + $0x118] sm:$0xff]
  %v2286 = vld [vmem:[%s57 + $0x120] sm:$0xff]
  %v2287 = vld [vmem:[%s57 + $0x128] sm:$0xff]
  %v2288 = vld [vmem:[%s57 + $0x130] sm:$0xff]
  %v2289 = vld [vmem:[%s57 + $0x138] sm:$0xff]
  %v2290 = vld [vmem:[%s57 + $0x140] sm:$0xff]
  %v2291 = vld [vmem:[%s57 + $0x148] sm:$0xff]
  %v2292 = vld [vmem:[%s57 + $0x150] sm:$0xff]
  %v2293 = vld [vmem:[%s57 + $0x158] sm:$0xff]
  %v2294 = vld [vmem:[%s57 + $0x160] sm:$0xff]
  %v2295 = vld [vmem:[%s57 + $0x168] sm:$0xff]
  %v2296 = vld [vmem:[%s57 + $0x170] sm:$0xff]
  %v2297 = vld [vmem:[%s57 + $0x178] sm:$0xff]
  %v2298 = vld [vmem:[%s57 + $0x180] sm:$0xff]
  %v2299 = vld [vmem:[%s57 + $0x188] sm:$0xff]
  %v2300 = vld [vmem:[%s57 + $0x190] sm:$0xff]
  %v2301 = vld [vmem:[%s57 + $0x198] sm:$0xff]
  %v2302 = vld [vmem:[%s57 + $0x1a0] sm:$0xff]
  %v2303 = vld [vmem:[%s57 + $0x1a8] sm:$0xff]
  %v2304 = vld [vmem:[%s57 + $0x1b0] sm:$0xff]
  %v2305 = vld [vmem:[%s57 + $0x1b8] sm:$0xff]
  %v2306 = vld [vmem:[%s57 + $0x1c0] sm:$0xff]
  %v2307 = vld [vmem:[%s57 + $0x1c8] sm:$0xff]
  %v2308 = vld [vmem:[%s57 + $0x1d0] sm:$0xff]
  %v2309 = vld [vmem:[%s57 + $0x1d8] sm:$0xff]
  %v2310 = vld [vmem:[%s57 + $0x1e0] sm:$0xff]
  %v2311 = vld [vmem:[%s57 + $0x1e8] sm:$0xff]
  %v2312 = vld [vmem:[%s57 + $0x1f0] sm:$0xff]
  %v2313 = vld [vmem:[%s57 + $0x1f8] sm:$0xff]
  %v2314 = vld [vmem:[%s57 + $0x200] sm:$0xff]
  %v2315 = vld [vmem:[%s57 + $0x208] sm:$0xff]
  %v2316 = vld [vmem:[%s57 + $0x210] sm:$0xff]
  %v2317 = vld [vmem:[%s57 + $0x218] sm:$0xff]
  %v2318 = vld [vmem:[%s57 + $0x220] sm:$0xff]
  %v2319 = vld [vmem:[%s57 + $0x228] sm:$0xff]
  %v2320 = vld [vmem:[%s57 + $0x230] sm:$0xff]
  %v2321 = vld [vmem:[%s57 + $0x238] sm:$0xff]
  %v2322 = vld [vmem:[%s57 + $0x240] sm:$0xff]
  %v2323 = vld [vmem:[%s57 + $0x248] sm:$0xff]
  %v2324 = vld [vmem:[%s57 + $0x250] sm:$0xff]
  %v2325 = vld [vmem:[%s57 + $0x258] sm:$0xff]
  %v2326 = vld [vmem:[%s57 + $0x260] sm:$0xff]
  %v2327 = vld [vmem:[%s57 + $0x268] sm:$0xff]
  %v2328 = vld [vmem:[%s57 + $0x270] sm:$0xff]
  %v2329 = vld [vmem:[%s57 + $0x278] sm:$0xff]
  %v2330 = vld [vmem:[%s57 + $0x280] sm:$0xff]
  %v2331 = vld [vmem:[%s57 + $0x288] sm:$0xff]
  %v2332 = vld [vmem:[%s57 + $0x290] sm:$0xff]
  %v2333 = vld [vmem:[%s57 + $0x298] sm:$0xff]
  %v2334 = vld [vmem:[%s57 + $0x2a0] sm:$0xff]
  %v2335 = vld [vmem:[%s57 + $0x2a8] sm:$0xff]
  %v2336 = vld [vmem:[%s57 + $0x2b0] sm:$0xff]
  %v2337 = vld [vmem:[%s57 + $0x2b8] sm:$0xff]
  %v2338 = vld [vmem:[%s57 + $0x2c0] sm:$0xff]
  %v2339 = vld [vmem:[%s57 + $0x2c8] sm:$0xff]
  %v2340 = vld [vmem:[%s57 + $0x2d0] sm:$0xff]
  %v2341 = vld [vmem:[%s57 + $0x2d8] sm:$0xff]
  %v2342 = vld [vmem:[%s57 + $0x2e0] sm:$0xff]
  %v2343 = vld [vmem:[%s57 + $0x2e8] sm:$0xff]
  %v2344 = vld [vmem:[%s57 + $0x2f0] sm:$0xff]
  %v2345 = vld [vmem:[%s57 + $0x2f8] sm:$0xff]
  %v2346 = vld [vmem:[%s57 + $0x300] sm:$0xff]
  %v2347 = vld [vmem:[%s57 + $0x308] sm:$0xff]
  %v2348 = vld [vmem:[%s57 + $0x310] sm:$0xff]
  %v2349 = vld [vmem:[%s57 + $0x318] sm:$0xff]
  %v2350 = vld [vmem:[%s57 + $0x320] sm:$0xff]
  %v2351 = vld [vmem:[%s57 + $0x328] sm:$0xff]
  %v2352 = vld [vmem:[%s57 + $0x330] sm:$0xff]
  %v2353 = vld [vmem:[%s57 + $0x338] sm:$0xff]
  %v2354 = vld [vmem:[%s57 + $0x340] sm:$0xff]
  %v2355 = vld [vmem:[%s57 + $0x348] sm:$0xff]
  %v2356 = vld [vmem:[%s57 + $0x350] sm:$0xff]
  %v2357 = vld [vmem:[%s57 + $0x358] sm:$0xff]
  %v2358 = vld [vmem:[%s57 + $0x360] sm:$0xff]
  %v2359 = vld [vmem:[%s57 + $0x368] sm:$0xff]
  %v2360 = vld [vmem:[%s57 + $0x370] sm:$0xff]
  %v2361 = vld [vmem:[%s57 + $0x378] sm:$0xff]
  %v2362 = vld [vmem:[%s57 + $0x380] sm:$0xff]
  %v2363 = vld [vmem:[%s57 + $0x388] sm:$0xff]
  %v2364 = vld [vmem:[%s57 + $0x390] sm:$0xff]
  %v2365 = vld [vmem:[%s57 + $0x398] sm:$0xff]
  %v2366 = vld [vmem:[%s57 + $0x3a0] sm:$0xff]
  %v2367 = vld [vmem:[%s57 + $0x3a8] sm:$0xff]
  %v2368 = vld [vmem:[%s61] sm:$0x1]
  %v2370 = vlaneseq
  %v2371 = vshrl.u32 %v2370, 7
  %v2372 = vsub.s32 0, %v2371
  %v2373 = vrot.slane %v2368, %v2372
  %2375 = vmatprep.subr.mxu0 0.0
  %2376 = vmatpush1.msra.mxu0 %v2250
  %2377 = vmatprep.subr.mxu0 0.0
  %2378 = vmatpush1.msra.mxu0 %v2251
  %2379 = vmatprep.subr.mxu0 0.0
  %2380 = vmatpush1.msra.mxu0 %v2252
  %2381 = vmatprep.subr.mxu0 0.0
  %2382 = vmatpush1.msra.mxu0 %v2253
  %2383 = vmatprep.subr.mxu0 0.0
  %2384 = vmatpush1.msra.mxu0 %v2254
  %2385 = vmatprep.subr.mxu0 0.0
  %2386 = vmatpush1.msra.mxu0 %v2255
  %2387 = vmatprep.subr.mxu0 0.0
  %2388 = vmatpush1.msra.mxu0 %v2256
  %2389 = vmatprep.subr.mxu0 0.0
  %2390 = vmatpush1.msra.mxu0 %v2257
  %2391 = vmatprep.subr.mxu0 0.0
  %2392 = vmatpush1.msra.mxu0 %v2258
  %2393 = vmatprep.subr.mxu0 0.0
  %2394 = vmatpush1.msra.mxu0 %v2259
  %2395 = vmatprep.subr.mxu0 0.0
  %2396 = vmatpush1.msra.mxu0 %v2260
  %2397 = vmatprep.subr.mxu0 0.0
  %2398 = vmatpush1.msra.mxu0 %v2261
  %2399 = vmatprep.subr.mxu0 0.0
  %2400 = vmatpush1.msra.mxu0 %v2262
  %2401 = vmatprep.subr.mxu0 0.0
  %2402 = vmatpush1.msra.mxu0 %v2263
  %2403 = vmatprep.subr.mxu0 0.0
  %2404 = vmatpush1.msra.mxu0 %v2264
  %2405 = vmatprep.subr.mxu0 0.0
  %2406 = vmatpush1.msra.mxu0 %v2265
  %2407 = vmatprep.subr.mxu0 0.0
  %2408 = vmatpush1.msra.mxu0 %v2266
  %2409 = vmatprep.subr.mxu0 0.0
  %2410 = vmatpush1.msra.mxu0 %v2267
  %2411 = vmatprep.subr.mxu0 0.0
  %2412 = vmatpush1.msra.mxu0 %v2268
  %2413 = vmatprep.subr.mxu0 0.0
  %2414 = vmatpush1.msra.mxu0 %v2269
  %2415 = vmatprep.subr.mxu0 0.0
  %2416 = vmatpush1.msra.mxu0 %v2270
  %2417 = vmatprep.subr.mxu0 0.0
  %2418 = vmatpush1.msra.mxu0 %v2271
  %2419 = vmatprep.subr.mxu0 0.0
  %2420 = vmatpush1.msra.mxu0 %v2272
  %2421 = vmatprep.subr.mxu0 0.0
  %2422 = vmatpush1.msra.mxu0 %v2273
  %2423 = vmatprep.subr.mxu0 0.0
  %2424 = vmatpush1.msra.mxu0 %v2274
  %2425 = vmatprep.subr.mxu0 0.0
  %2426 = vmatpush1.msra.mxu0 %v2275
  %2427 = vmatprep.subr.mxu0 0.0
  %2428 = vmatpush1.msra.mxu0 %v2276
  %2429 = vmatprep.subr.mxu0 0.0
  %2430 = vmatpush1.msra.mxu0 %v2277
  %2431 = vmatprep.subr.mxu0 0.0
  %2432 = vmatpush1.msra.mxu0 %v2278
  %2433 = vmatprep.subr.mxu0 0.0
  %2434 = vmatpush1.msra.mxu0 %v2279
  %2435 = vmatprep.subr.mxu0 0.0
  %2436 = vmatpush1.msra.mxu0 %v2280
  %2437 = vmatprep.subr.mxu0 0.0
  %2438 = vmatpush1.msra.mxu0 %v2281
  %2439 = vmatprep.mubr.f32.mxu0 %v973
  %2440 = vmatmul.mubr.f32.gmra.mrb[0].mxu0 %v971
  %v2441 = vpop.f32.mrb[0].mxu0
  %v2442 = vadd.f32 %v2373, %v2441
  %v2443 = vpop.f32.mrb[0].mxu0
  %2444 = vdwg.mxu0
  %2445 = vmatprep.subr.mxu0 0.0
  %2446 = vmatpush1.msra.mxu0 %v2282
  %2447 = vmatprep.subr.mxu0 0.0
  %2448 = vmatpush1.msra.mxu0 %v2283
  %2449 = vmatprep.subr.mxu0 0.0
  %2450 = vmatpush1.msra.mxu0 %v2284
  %2451 = vmatprep.subr.mxu0 0.0
  %2452 = vmatpush1.msra.mxu0 %v2285
  %2453 = vmatprep.subr.mxu0 0.0
  %2454 = vmatpush1.msra.mxu0 %v2286
  %2455 = vmatprep.subr.mxu0 0.0
  %2456 = vmatpush1.msra.mxu0 %v2287
  %2457 = vmatprep.subr.mxu0 0.0
  %2458 = vmatpush1.msra.mxu0 %v2288
  %2459 = vmatprep.subr.mxu0 0.0
  %2460 = vmatpush1.msra.mxu0 %v2289
  %2461 = vmatprep.subr.mxu0 0.0
  %2462 = vmatpush1.msra.mxu0 %v2290
  %2463 = vmatprep.subr.mxu0 0.0
  %2464 = vmatpush1.msra.mxu0 %v2291
  %2465 = vmatprep.subr.mxu0 0.0
  %2466 = vmatpush1.msra.mxu0 %v2292
  %2467 = vmatprep.subr.mxu0 0.0
  %2468 = vmatpush1.msra.mxu0 %v2293
  %2469 = vmatprep.subr.mxu0 0.0
  %2470 = vmatpush1.msra.mxu0 %v2294
  %2471 = vmatprep.subr.mxu0 0.0
  %2472 = vmatpush1.msra.mxu0 %v2295
  %2473 = vmatprep.subr.mxu0 0.0
  %2474 = vmatpush1.msra.mxu0 %v2296
  %2475 = vmatprep.subr.mxu0 0.0
  %2476 = vmatpush1.msra.mxu0 %v2297
  %2477 = vmatprep.subr.mxu0 0.0
  %2478 = vmatpush1.msra.mxu0 %v2298
  %2479 = vmatprep.subr.mxu0 0.0
  %2480 = vmatpush1.msra.mxu0 %v2299
  %2481 = vmatprep.subr.mxu0 0.0
  %2482 = vmatpush1.msra.mxu0 %v2300
  %2483 = vmatprep.subr.mxu0 0.0
  %2484 = vmatpush1.msra.mxu0 %v2301
  %2485 = vmatprep.subr.mxu0 0.0
  %2486 = vmatpush1.msra.mxu0 %v2302
  %2487 = vmatprep.subr.mxu0 0.0
  %2488 = vmatpush1.msra.mxu0 %v2303
  %2489 = vmatprep.subr.mxu0 0.0
  %2490 = vmatpush1.msra.mxu0 %v2304
  %2491 = vmatprep.subr.mxu0 0.0
  %2492 = vmatpush1.msra.mxu0 %v2305
  %2493 = vmatprep.subr.mxu0 0.0
  %2494 = vmatpush1.msra.mxu0 %v2306
  %2495 = vmatprep.subr.mxu0 0.0
  %2496 = vmatpush1.msra.mxu0 %v2307
  %2497 = vmatprep.subr.mxu0 0.0
  %2498 = vmatpush1.msra.mxu0 %v2308
  %2499 = vmatprep.subr.mxu0 0.0
  %2500 = vmatpush1.msra.mxu0 %v2309
  %2501 = vmatprep.subr.mxu0 0.0
  %2502 = vmatpush1.msra.mxu0 %v2310
  %2503 = vmatprep.subr.mxu0 0.0
  %2504 = vmatpush1.msra.mxu0 %v2311
  %2505 = vmatprep.subr.mxu0 0.0
  %2506 = vmatpush1.msra.mxu0 %v2312
  %2507 = vmatprep.subr.mxu0 0.0
  %2508 = vmatpush1.msra.mxu0 %v2313
  %2509 = vmatprep.mubr.f32.mxu0 %v1044
  %2510 = vmatmul.mubr.f32.gmra.mrb[0].mxu0 %v1042
  %v2511 = vpop.f32.mrb[0].mxu0
  %v2512 = vadd.f32 %v2442, %v2511
  %v2513 = vpop.f32.mrb[0].mxu0
  %2514 = vdwg.mxu0
  %2515 = vmatprep.subr.mxu0 0.0
  %2516 = vmatpush1.msra.mxu0 %v2314
  %2517 = vmatprep.subr.mxu0 0.0
  %2518 = vmatpush1.msra.mxu0 %v2315
  %2519 = vmatprep.subr.mxu0 0.0
  %2520 = vmatpush1.msra.mxu0 %v2316
  %2521 = vmatprep.subr.mxu0 0.0
  %2522 = vmatpush1.msra.mxu0 %v2317
  %2523 = vmatprep.subr.mxu0 0.0
  %2524 = vmatpush1.msra.mxu0 %v2318
  %2525 = vmatprep.subr.mxu0 0.0
  %2526 = vmatpush1.msra.mxu0 %v2319
  %2527 = vmatprep.subr.mxu0 0.0
  %2528 = vmatpush1.msra.mxu0 %v2320
  %2529 = vmatprep.subr.mxu0 0.0
  %2530 = vmatpush1.msra.mxu0 %v2321
  %2531 = vmatprep.subr.mxu0 0.0
  %2532 = vmatpush1.msra.mxu0 %v2322
  %2533 = vmatprep.subr.mxu0 0.0
  %2534 = vmatpush1.msra.mxu0 %v2323
  %2535 = vmatprep.subr.mxu0 0.0
  %2536 = vmatpush1.msra.mxu0 %v2324
  %2537 = vmatprep.subr.mxu0 0.0
  %2538 = vmatpush1.msra.mxu0 %v2325
  %2539 = vmatprep.subr.mxu0 0.0
  %2540 = vmatpush1.msra.mxu0 %v2326
  %2541 = vmatprep.subr.mxu0 0.0
  %2542 = vmatpush1.msra.mxu0 %v2327
  %2543 = vmatprep.subr.mxu0 0.0
  %2544 = vmatpush1.msra.mxu0 %v2328
  %2545 = vmatprep.subr.mxu0 0.0
  %2546 = vmatpush1.msra.mxu0 %v2329
  %2547 = vmatprep.subr.mxu0 0.0
  %2548 = vmatpush1.msra.mxu0 %v2330
  %2549 = vmatprep.subr.mxu0 0.0
  %2550 = vmatpush1.msra.mxu0 %v2331
  %2551 = vmatprep.subr.mxu0 0.0
  %2552 = vmatpush1.msra.mxu0 %v2332
  %2553 = vmatprep.subr.mxu0 0.0
  %2554 = vmatpush1.msra.mxu0 %v2333
  %2555 = vmatprep.subr.mxu0 0.0
  %2556 = vmatpush1.msra.mxu0 %v2334
  %2557 = vmatprep.subr.mxu0 0.0
  %2558 = vmatpush1.msra.mxu0 %v2335
  %2559 = vmatprep.subr.mxu0 0.0
  %2560 = vmatpush1.msra.mxu0 %v2336
  %2561 = vmatprep.subr.mxu0 0.0
  %2562 = vmatpush1.msra.mxu0 %v2337
  %2563 = vmatprep.subr.mxu0 0.0
  %2564 = vmatpush1.msra.mxu0 %v2338
  %2565 = vmatprep.subr.mxu0 0.0
  %2566 = vmatpush1.msra.mxu0 %v2339
  %2567 = vmatprep.subr.mxu0 0.0
  %2568 = vmatpush1.msra.mxu0 %v2340
  %2569 = vmatprep.subr.mxu0 0.0
  %2570 = vmatpush1.msra.mxu0 %v2341
  %2571 = vmatprep.subr.mxu0 0.0
  %2572 = vmatpush1.msra.mxu0 %v2342
  %2573 = vmatprep.subr.mxu0 0.0
  %2574 = vmatpush1.msra.mxu0 %v2343
  %2575 = vmatprep.subr.mxu0 0.0
  %2576 = vmatpush1.msra.mxu0 %v2344
  %2577 = vmatprep.subr.mxu0 0.0
  %2578 = vmatpush1.msra.mxu0 %v2345
  %2579 = vmatprep.mubr.f32.mxu0 %v1115
  %2580 = vmatmul.mubr.f32.gmra.mrb[0].mxu0 %v1113
  %v2581 = vpop.f32.mrb[0].mxu0
  %v2582 = vadd.f32 %v2512, %v2581
  %v2583 = vpop.f32.mrb[0].mxu0
  %2584 = vdwg.mxu0
  %2585 = vmatprep.subr.mxu0 0.0
  %2586 = vmatpush1.msra.mxu0 %v2346
  %2587 = vmatprep.subr.mxu0 0.0
  %2588 = vmatpush1.msra.mxu0 %v2347
  %2589 = vmatprep.subr.mxu0 0.0
  %2590 = vmatpush1.msra.mxu0 %v2348
  %2591 = vmatprep.subr.mxu0 0.0
  %2592 = vmatpush1.msra.mxu0 %v2349
  %2593 = vmatprep.subr.mxu0 0.0
  %2594 = vmatpush1.msra.mxu0 %v2350
  %2595 = vmatprep.subr.mxu0 0.0
  %2596 = vmatpush1.msra.mxu0 %v2351
  %2597 = vmatprep.subr.mxu0 0.0
  %2598 = vmatpush1.msra.mxu0 %v2352
  %2599 = vmatprep.subr.mxu0 0.0
  %2600 = vmatpush1.msra.mxu0 %v2353
  %2601 = vmatprep.subr.mxu0 0.0
  %2602 = vmatpush1.msra.mxu0 %v2354
  %2603 = vmatprep.subr.mxu0 0.0
  %2604 = vmatpush1.msra.mxu0 %v2355
  %2605 = vmatprep.subr.mxu0 0.0
  %2606 = vmatpush1.msra.mxu0 %v2356
  %2607 = vmatprep.subr.mxu0 0.0
  %2608 = vmatpush1.msra.mxu0 %v2357
  %2609 = vmatprep.subr.mxu0 0.0
  %2610 = vmatpush1.msra.mxu0 %v2358
  %2611 = vmatprep.subr.mxu0 0.0
  %2612 = vmatpush1.msra.mxu0 %v2359
  %2613 = vmatprep.subr.mxu0 0.0
  %2614 = vmatpush1.msra.mxu0 %v2360
  %2615 = vmatprep.subr.mxu0 0.0
  %2616 = vmatpush1.msra.mxu0 %v2361
  %2617 = vmatprep.subr.mxu0 0.0
  %2618 = vmatpush1.msra.mxu0 %v2362
  %2619 = vmatprep.subr.mxu0 0.0
  %2620 = vmatpush1.msra.mxu0 %v2363
  %2621 = vmatprep.subr.mxu0 0.0
  %2622 = vmatpush1.msra.mxu0 %v2364
  %2623 = vmatprep.subr.mxu0 0.0
  %2624 = vmatpush1.msra.mxu0 %v2365
  %2625 = vmatprep.subr.mxu0 0.0
  %2626 = vmatpush1.msra.mxu0 %v2366
  %2627 = vmatprep.subr.mxu0 0.0
  %2628 = vmatpush1.msra.mxu0 %v2367
  %2629 = vmatprep.subr.mxu0 0.0
  %2630 = vmatpush1.msra.mxu0 0.0
  %2631 = vmatprep.subr.mxu0 0.0
  %2632 = vmatpush1.msra.mxu0 0.0
  %2633 = vmatprep.subr.mxu0 0.0
  %2634 = vmatpush1.msra.mxu0 0.0
  %2635 = vmatprep.subr.mxu0 0.0
  %2636 = vmatpush1.msra.mxu0 0.0
  %2637 = vmatprep.subr.mxu0 0.0
  %2638 = vmatpush1.msra.mxu0 0.0
  %2639 = vmatprep.subr.mxu0 0.0
  %2640 = vmatpush1.msra.mxu0 0.0
  %2641 = vmatprep.subr.mxu0 0.0
  %2642 = vmatpush1.msra.mxu0 0.0
  %2643 = vmatprep.subr.mxu0 0.0
  %2644 = vmatpush1.msra.mxu0 0.0
  %2645 = vmatprep.subr.mxu0 0.0
  %2646 = vmatpush1.msra.mxu0 0.0
  %2647 = vmatprep.subr.mxu0 0.0
  %2648 = vmatpush1.msra.mxu0 0.0
  %2649 = vmatprep.mubr.f32.mxu0 %v1319
  %2650 = vmatmul.mubr.f32.gmra.mrb[0].mxu0 %v1184
  %v2651 = vpop.f32.mrb[0].mxu0
  %v2652 = vadd.f32 %v2582, %v2651
  %v2653 = vpop.f32.mrb[0].mxu0
  %2654 = vdwg.mxu0
  %v2655 = vld [vmem:[%s15] sm:$0xf]
  %v2656 = vmul.f32 %v1842, 0.5
  %v2657 = vmul.f32 %v2656, 1.442695
  %v2658 = vpow.pop %v2657
  %v2659 = vmul.f32 %v2655, %v2658
  %v2660 = vadd.f32 %v1761, %v2659
  %v2661 = vsub.f32 %v2652, %v1842
  %v2662 = vmul.f32 %v1842, 1.442695
  %v2663 = vpow.pop %v2662
  %v2664 = vsub.f32 %v1761, %v2247
  %v2665 = vmul.f32 %v2664, %v2664
  %v2666 = vadd.f32 %v2663, %v2665
  %v2667 = vmul.f32 %v2652, 1.442695
  %v2668 = vpow.pop %v2667
  %v2669 = vrcp.pop %v2668
  %v2670 = vmul.f32 %v2666, %v2669
  %v2671 = vadd.f32 %v2661, %v2670
  %v2672 = vsub.f32 %v2671, 1.0
  %v2673 = vmul.f32 %v2672, 0.5
  %vm2674 = vcmask 125952
  %v2675 = vsel %vm2674, %v2673, 0.0
  %2676 = vadd.xlane.f32.xlu0 %v2675
  %v2677 = vpop.xlane.xlu0 %2676
  %v2678 = vrot.slane %v2677, 4
  %v2679 = vadd.f32 %v2677, %v2678
  %v2680 = vrot.slane %v2679, 2
  %v2681 = vadd.f32 %v2679, %v2680
  %v2682 = vrot.slane %v2681, 1
  %v2683 = vadd.f32 %v2681, %v2682
  %s2684 = vtos %v2683
  %v2685 = vrcp.pop 4.0
  %s2686 = vtos %v2685
  %s2687 = smul.f32 %s2684, %s2686
  %s2688 = smax.f32 %s2687, 2.0
  %v2689 = vld [vmem:[%s63] sm:$0xff]
  %v2690 = vld [vmem:[%s63 + $0x8] sm:$0xff]
  %v2691 = vld [vmem:[%s63 + $0x10] sm:$0xff]
  %v2692 = vld [vmem:[%s63 + $0x18] sm:$0xff]
  %v2693 = vld [vmem:[%s63 + $0x20] sm:$0xff]
  %v2694 = vld [vmem:[%s63 + $0x28] sm:$0xff]
  %v2695 = vld [vmem:[%s63 + $0x30] sm:$0xff]
  %v2696 = vld [vmem:[%s63 + $0x38] sm:$0xff]
  %v2697 = vld [vmem:[%s63 + $0x40] sm:$0xff]
  %v2698 = vld [vmem:[%s63 + $0x48] sm:$0xff]
  %v2699 = vld [vmem:[%s63 + $0x50] sm:$0xff]
  %v2700 = vld [vmem:[%s63 + $0x58] sm:$0xff]
  %v2701 = vld [vmem:[%s63 + $0x60] sm:$0xff]
  %v2702 = vld [vmem:[%s63 + $0x68] sm:$0xff]
  %v2703 = vld [vmem:[%s63 + $0x70] sm:$0xff]
  %v2704 = vld [vmem:[%s63 + $0x78] sm:$0xff]
  %v2705 = vld [vmem:[%s63 + $0x80] sm:$0xff]
  %v2706 = vld [vmem:[%s63 + $0x88] sm:$0xff]
  %v2707 = vld [vmem:[%s63 + $0x90] sm:$0xff]
  %v2708 = vld [vmem:[%s63 + $0x98] sm:$0xff]
  %v2709 = vld [vmem:[%s63 + $0xa0] sm:$0xff]
  %v2710 = vld [vmem:[%s63 + $0xa8] sm:$0xff]
  %v2711 = vld [vmem:[%s63 + $0xb0] sm:$0xff]
  %v2712 = vld [vmem:[%s63 + $0xb8] sm:$0xff]
  %v2713 = vld [vmem:[%s63 + $0xc0] sm:$0xff]
  %v2714 = vld [vmem:[%s63 + $0xc8] sm:$0xff]
  %v2715 = vld [vmem:[%s63 + $0xd0] sm:$0xff]
  %v2716 = vld [vmem:[%s63 + $0xd8] sm:$0xff]
  %v2717 = vld [vmem:[%s63 + $0xe0] sm:$0xff]
  %v2718 = vld [vmem:[%s63 + $0xe8] sm:$0xff]
  %v2719 = vld [vmem:[%s63 + $0xf0] sm:$0xff]
  %v2720 = vld [vmem:[%s63 + $0xf8] sm:$0xff]
  %v2721 = vld [vmem:[%s63 + $0x100] sm:$0xff]
  %v2722 = vld [vmem:[%s63 + $0x108] sm:$0xff]
  %v2723 = vld [vmem:[%s63 + $0x110] sm:$0xff]
  %v2724 = vld [vmem:[%s63 + $0x118] sm:$0xff]
  %v2725 = vld [vmem:[%s63 + $0x120] sm:$0xff]
  %v2726 = vld [vmem:[%s63 + $0x128] sm:$0xff]
  %v2727 = vld [vmem:[%s63 + $0x130] sm:$0xff]
  %v2728 = vld [vmem:[%s63 + $0x138] sm:$0xff]
  %v2729 = vld [vmem:[%s63 + $0x140] sm:$0xff]
  %v2730 = vld [vmem:[%s63 + $0x148] sm:$0xff]
  %v2731 = vld [vmem:[%s63 + $0x150] sm:$0xff]
  %v2732 = vld [vmem:[%s63 + $0x158] sm:$0xff]
  %v2733 = vld [vmem:[%s63 + $0x160] sm:$0xff]
  %v2734 = vld [vmem:[%s63 + $0x168] sm:$0xff]
  %v2735 = vld [vmem:[%s63 + $0x170] sm:$0xff]
  %v2736 = vld [vmem:[%s63 + $0x178] sm:$0xff]
  %v2737 = vld [vmem:[%s63 + $0x180] sm:$0xff]
  %v2738 = vld [vmem:[%s63 + $0x188] sm:$0xff]
  %v2739 = vld [vmem:[%s63 + $0x190] sm:$0xff]
  %v2740 = vld [vmem:[%s63 + $0x198] sm:$0xff]
  %v2741 = vld [vmem:[%s63 + $0x1a0] sm:$0xff]
  %v2742 = vld [vmem:[%s63 + $0x1a8] sm:$0xff]
  %v2743 = vld [vmem:[%s63 + $0x1b0] sm:$0xff]
  %v2744 = vld [vmem:[%s63 + $0x1b8] sm:$0xff]
  %v2745 = vld [vmem:[%s63 + $0x1c0] sm:$0xff]
  %v2746 = vld [vmem:[%s63 + $0x1c8] sm:$0xff]
  %v2747 = vld [vmem:[%s63 + $0x1d0] sm:$0xff]
  %v2748 = vld [vmem:[%s63 + $0x1d8] sm:$0xff]
  %v2749 = vld [vmem:[%s63 + $0x1e0] sm:$0xff]
  %v2750 = vld [vmem:[%s63 + $0x1e8] sm:$0xff]
  %v2751 = vld [vmem:[%s63 + $0x1f0] sm:$0xff]
  %v2752 = vld [vmem:[%s63 + $0x1f8] sm:$0xff]
  %v2753 = vld [vmem:[%s63 + $0x200] sm:$0xff]
  %v2754 = vld [vmem:[%s63 + $0x208] sm:$0xff]
  %v2755 = vld [vmem:[%s63 + $0x210] sm:$0xff]
  %v2756 = vld [vmem:[%s63 + $0x218] sm:$0xff]
  %v2757 = vld [vmem:[%s63 + $0x220] sm:$0xff]
  %v2758 = vld [vmem:[%s63 + $0x228] sm:$0xff]
  %v2759 = vld [vmem:[%s63 + $0x230] sm:$0xff]
  %v2760 = vld [vmem:[%s63 + $0x238] sm:$0xff]
  %v2761 = vld [vmem:[%s63 + $0x240] sm:$0xff]
  %v2762 = vld [vmem:[%s63 + $0x248] sm:$0xff]
  %v2763 = vld [vmem:[%s63 + $0x250] sm:$0xff]
  %v2764 = vld [vmem:[%s63 + $0x258] sm:$0xff]
  %v2765 = vld [vmem:[%s63 + $0x260] sm:$0xff]
  %v2766 = vld [vmem:[%s63 + $0x268] sm:$0xff]
  %v2767 = vld [vmem:[%s63 + $0x270] sm:$0xff]
  %v2768 = vld [vmem:[%s63 + $0x278] sm:$0xff]
  %v2769 = vld [vmem:[%s63 + $0x280] sm:$0xff]
  %v2770 = vld [vmem:[%s63 + $0x288] sm:$0xff]
  %v2771 = vld [vmem:[%s63 + $0x290] sm:$0xff]
  %v2772 = vld [vmem:[%s63 + $0x298] sm:$0xff]
  %v2773 = vld [vmem:[%s63 + $0x2a0] sm:$0xff]
  %v2774 = vld [vmem:[%s63 + $0x2a8] sm:$0xff]
  %v2775 = vld [vmem:[%s63 + $0x2b0] sm:$0xff]
  %v2776 = vld [vmem:[%s63 + $0x2b8] sm:$0xff]
  %v2777 = vld [vmem:[%s63 + $0x2c0] sm:$0xff]
  %v2778 = vld [vmem:[%s63 + $0x2c8] sm:$0xff]
  %v2779 = vld [vmem:[%s63 + $0x2d0] sm:$0xff]
  %v2780 = vld [vmem:[%s63 + $0x2d8] sm:$0xff]
  %v2781 = vld [vmem:[%s63 + $0x2e0] sm:$0xff]
  %v2782 = vld [vmem:[%s63 + $0x2e8] sm:$0xff]
  %v2783 = vld [vmem:[%s63 + $0x2f0] sm:$0xff]
  %v2784 = vld [vmem:[%s63 + $0x2f8] sm:$0xff]
  %v2785 = vld [vmem:[%s63 + $0x300] sm:$0xff]
  %v2786 = vld [vmem:[%s63 + $0x308] sm:$0xff]
  %v2787 = vld [vmem:[%s63 + $0x310] sm:$0xff]
  %v2788 = vld [vmem:[%s63 + $0x318] sm:$0xff]
  %v2789 = vld [vmem:[%s63 + $0x320] sm:$0xff]
  %v2790 = vld [vmem:[%s63 + $0x328] sm:$0xff]
  %v2791 = vld [vmem:[%s63 + $0x330] sm:$0xff]
  %v2792 = vld [vmem:[%s63 + $0x338] sm:$0xff]
  %v2793 = vld [vmem:[%s63 + $0x340] sm:$0xff]
  %v2794 = vld [vmem:[%s63 + $0x348] sm:$0xff]
  %v2795 = vld [vmem:[%s63 + $0x350] sm:$0xff]
  %v2796 = vld [vmem:[%s63 + $0x358] sm:$0xff]
  %v2797 = vld [vmem:[%s63 + $0x360] sm:$0xff]
  %v2798 = vld [vmem:[%s63 + $0x368] sm:$0xff]
  %v2799 = vld [vmem:[%s63 + $0x370] sm:$0xff]
  %v2800 = vld [vmem:[%s63 + $0x378] sm:$0xff]
  %v2801 = vld [vmem:[%s63 + $0x380] sm:$0xff]
  %v2802 = vld [vmem:[%s63 + $0x388] sm:$0xff]
  %v2803 = vld [vmem:[%s63 + $0x390] sm:$0xff]
  %v2804 = vld [vmem:[%s63 + $0x398] sm:$0xff]
  %v2805 = vld [vmem:[%s63 + $0x3a0] sm:$0xff]
  %v2806 = vld [vmem:[%s63 + $0x3a8] sm:$0xff]
  %v2807 = vld [vmem:[%s65] sm:$0xff]
  %v2808 = vld [vmem:[%s65 + $0x8] sm:$0xff]
  %vm2809 = vcmask 130048
  %v2811 = vsel %vm2809, %v2660, 0
  %2813 = vmatprep.subr.mxu0 0.0
  %2814 = vmatpush1.msra.mxu0 %v2807
  %2815 = vmatprep.subr.mxu0 0.0
  %2816 = vmatpush1.msra.mxu0 %v2808
  %2817 = vmatprep.subr.mxu0 0.0
  %2818 = vmatpush1.msra.mxu0 0.0
  %2819 = vmatprep.subr.mxu0 0.0
  %2820 = vmatpush1.msra.mxu0 0.0
  %2821 = vmatprep.subr.mxu0 0.0
  %2822 = vmatpush1.msra.mxu0 0.0
  %2823 = vmatprep.subr.mxu0 0.0
  %2824 = vmatpush1.msra.mxu0 0.0
  %2825 = vmatprep.subr.mxu0 0.0
  %2826 = vmatpush1.msra.mxu0 0.0
  %2827 = vmatprep.subr.mxu0 0.0
  %2828 = vmatpush1.msra.mxu0 0.0
  %2829 = vmatprep.subr.mxu0 0.0
  %2830 = vmatpush1.msra.mxu0 0.0
  %2831 = vmatprep.subr.mxu0 0.0
  %2832 = vmatpush1.msra.mxu0 0.0
  %2833 = vmatprep.subr.mxu0 0.0
  %2834 = vmatpush1.msra.mxu0 0.0
  %2835 = vmatprep.subr.mxu0 0.0
  %2836 = vmatpush1.msra.mxu0 0.0
  %2837 = vmatprep.subr.mxu0 0.0
  %2838 = vmatpush1.msra.mxu0 0.0
  %2839 = vmatprep.subr.mxu0 0.0
  %2840 = vmatpush1.msra.mxu0 0.0
  %2841 = vmatprep.subr.mxu0 0.0
  %2842 = vmatpush1.msra.mxu0 0.0
  %2843 = vmatprep.subr.mxu0 0.0
  %2844 = vmatpush1.msra.mxu0 0.0
  %2845 = vmatprep.subr.mxu0 0.0
  %2846 = vmatpush1.msra.mxu0 0.0
  %2847 = vmatprep.subr.mxu0 0.0
  %2848 = vmatpush1.msra.mxu0 0.0
  %2849 = vmatprep.subr.mxu0 0.0
  %2850 = vmatpush1.msra.mxu0 0.0
  %2851 = vmatprep.subr.mxu0 0.0
  %2852 = vmatpush1.msra.mxu0 0.0
  %2853 = vmatprep.subr.mxu0 0.0
  %2854 = vmatpush1.msra.mxu0 0.0
  %2855 = vmatprep.subr.mxu0 0.0
  %2856 = vmatpush1.msra.mxu0 0.0
  %2857 = vmatprep.subr.mxu0 0.0
  %2858 = vmatpush1.msra.mxu0 0.0
  %2859 = vmatprep.subr.mxu0 0.0
  %2860 = vmatpush1.msra.mxu0 0.0
  %2861 = vmatprep.subr.mxu0 0.0
  %2862 = vmatpush1.msra.mxu0 0.0
  %2863 = vmatprep.subr.mxu0 0.0
  %2864 = vmatpush1.msra.mxu0 0.0
  %2865 = vmatprep.subr.mxu0 0.0
  %2866 = vmatpush1.msra.mxu0 0.0
  %2867 = vmatprep.subr.mxu0 0.0
  %2868 = vmatpush1.msra.mxu0 0.0
  %2869 = vmatprep.subr.mxu0 0.0
  %2870 = vmatpush1.msra.mxu0 0.0
  %2871 = vmatprep.subr.mxu0 0.0
  %2872 = vmatpush1.msra.mxu0 0.0
  %2873 = vmatprep.subr.mxu0 0.0
  %2874 = vmatpush1.msra.mxu0 0.0
  %2875 = vmatprep.subr.mxu0 0.0
  %2876 = vmatpush1.msra.mxu0 0.0
  %2877 = vmatprep.mubr.f32.mxu0 0.0
  %2878 = vmatmul.mubr.f32.gmra.mrb[0].mxu0 %v2811
  %v2879 = vpop.f32.mrb[0].mxu0
  %v2880 = vadd.f32 0.0, %v2879
  %v2881 = vpop.f32.mrb[0].mxu0
  %2882 = vdwg.mxu0
  %2883 = vmatprep.subr.mxu0 0.0
  %2884 = vmatpush1.msra.mxu0 %v2689
  %2885 = vmatprep.subr.mxu0 0.0
  %2886 = vmatpush1.msra.mxu0 %v2690
  %2887 = vmatprep.subr.mxu0 0.0
  %2888 = vmatpush1.msra.mxu0 %v2691
  %2889 = vmatprep.subr.mxu0 0.0
  %2890 = vmatpush1.msra.mxu0 %v2692
  %2891 = vmatprep.subr.mxu0 0.0
  %2892 = vmatpush1.msra.mxu0 %v2693
  %2893 = vmatprep.subr.mxu0 0.0
  %2894 = vmatpush1.msra.mxu0 %v2694
  %2895 = vmatprep.subr.mxu0 0.0
  %2896 = vmatpush1.msra.mxu0 %v2695
  %2897 = vmatprep.subr.mxu0 0.0
  %2898 = vmatpush1.msra.mxu0 %v2696
  %2899 = vmatprep.subr.mxu0 0.0
  %2900 = vmatpush1.msra.mxu0 %v2697
  %2901 = vmatprep.subr.mxu0 0.0
  %2902 = vmatpush1.msra.mxu0 %v2698
  %2903 = vmatprep.subr.mxu0 0.0
  %2904 = vmatpush1.msra.mxu0 %v2699
  %2905 = vmatprep.subr.mxu0 0.0
  %2906 = vmatpush1.msra.mxu0 %v2700
  %2907 = vmatprep.subr.mxu0 0.0
  %2908 = vmatpush1.msra.mxu0 %v2701
  %2909 = vmatprep.subr.mxu0 0.0
  %2910 = vmatpush1.msra.mxu0 %v2702
  %2911 = vmatprep.subr.mxu0 0.0
  %2912 = vmatpush1.msra.mxu0 %v2703
  %2913 = vmatprep.subr.mxu0 0.0
  %2914 = vmatpush1.msra.mxu0 %v2704
  %2915 = vmatprep.subr.mxu0 0.0
  %2916 = vmatpush1.msra.mxu0 %v2705
  %2917 = vmatprep.subr.mxu0 0.0
  %2918 = vmatpush1.msra.mxu0 %v2706
  %2919 = vmatprep.subr.mxu0 0.0
  %2920 = vmatpush1.msra.mxu0 %v2707
  %2921 = vmatprep.subr.mxu0 0.0
  %2922 = vmatpush1.msra.mxu0 %v2708
  %2923 = vmatprep.subr.mxu0 0.0
  %2924 = vmatpush1.msra.mxu0 %v2709
  %2925 = vmatprep.subr.mxu0 0.0
  %2926 = vmatpush1.msra.mxu0 %v2710
  %2927 = vmatprep.subr.mxu0 0.0
  %2928 = vmatpush1.msra.mxu0 %v2711
  %2929 = vmatprep.subr.mxu0 0.0
  %2930 = vmatpush1.msra.mxu0 %v2712
  %2931 = vmatprep.subr.mxu0 0.0
  %2932 = vmatpush1.msra.mxu0 %v2713
  %2933 = vmatprep.subr.mxu0 0.0
  %2934 = vmatpush1.msra.mxu0 %v2714
  %2935 = vmatprep.subr.mxu0 0.0
  %2936 = vmatpush1.msra.mxu0 %v2715
  %2937 = vmatprep.subr.mxu0 0.0
  %2938 = vmatpush1.msra.mxu0 %v2716
  %2939 = vmatprep.subr.mxu0 0.0
  %2940 = vmatpush1.msra.mxu0 %v2717
  %2941 = vmatprep.subr.mxu0 0.0
  %2942 = vmatpush1.msra.mxu0 %v2718
  %2943 = vmatprep.subr.mxu0 0.0
  %2944 = vmatpush1.msra.mxu0 %v2719
  %2945 = vmatprep.subr.mxu0 0.0
  %2946 = vmatpush1.msra.mxu0 %v2720
  %2947 = vmatprep.mubr.f32.mxu0 %v973
  %2948 = vmatmul.mubr.f32.gmra.mrb[0].mxu0 %v971
  %v2949 = vpop.f32.mrb[0].mxu0
  %v2950 = vadd.f32 %v2880, %v2949
  %v2951 = vpop.f32.mrb[0].mxu0
  %2952 = vdwg.mxu0
  %2953 = vmatprep.subr.mxu0 0.0
  %2954 = vmatpush1.msra.mxu0 %v2721
  %2955 = vmatprep.subr.mxu0 0.0
  %2956 = vmatpush1.msra.mxu0 %v2722
  %2957 = vmatprep.subr.mxu0 0.0
  %2958 = vmatpush1.msra.mxu0 %v2723
  %2959 = vmatprep.subr.mxu0 0.0
  %2960 = vmatpush1.msra.mxu0 %v2724
  %2961 = vmatprep.subr.mxu0 0.0
  %2962 = vmatpush1.msra.mxu0 %v2725
  %2963 = vmatprep.subr.mxu0 0.0
  %2964 = vmatpush1.msra.mxu0 %v2726
  %2965 = vmatprep.subr.mxu0 0.0
  %2966 = vmatpush1.msra.mxu0 %v2727
  %2967 = vmatprep.subr.mxu0 0.0
  %2968 = vmatpush1.msra.mxu0 %v2728
  %2969 = vmatprep.subr.mxu0 0.0
  %2970 = vmatpush1.msra.mxu0 %v2729
  %2971 = vmatprep.subr.mxu0 0.0
  %2972 = vmatpush1.msra.mxu0 %v2730
  %2973 = vmatprep.subr.mxu0 0.0
  %2974 = vmatpush1.msra.mxu0 %v2731
  %2975 = vmatprep.subr.mxu0 0.0
  %2976 = vmatpush1.msra.mxu0 %v2732
  %2977 = vmatprep.subr.mxu0 0.0
  %2978 = vmatpush1.msra.mxu0 %v2733
  %2979 = vmatprep.subr.mxu0 0.0
  %2980 = vmatpush1.msra.mxu0 %v2734
  %2981 = vmatprep.subr.mxu0 0.0
  %2982 = vmatpush1.msra.mxu0 %v2735
  %2983 = vmatprep.subr.mxu0 0.0
  %2984 = vmatpush1.msra.mxu0 %v2736
  %2985 = vmatprep.subr.mxu0 0.0
  %2986 = vmatpush1.msra.mxu0 %v2737
  %2987 = vmatprep.subr.mxu0 0.0
  %2988 = vmatpush1.msra.mxu0 %v2738
  %2989 = vmatprep.subr.mxu0 0.0
  %2990 = vmatpush1.msra.mxu0 %v2739
  %2991 = vmatprep.subr.mxu0 0.0
  %2992 = vmatpush1.msra.mxu0 %v2740
  %2993 = vmatprep.subr.mxu0 0.0
  %2994 = vmatpush1.msra.mxu0 %v2741
  %2995 = vmatprep.subr.mxu0 0.0
  %2996 = vmatpush1.msra.mxu0 %v2742
  %2997 = vmatprep.subr.mxu0 0.0
  %2998 = vmatpush1.msra.mxu0 %v2743
  %2999 = vmatprep.subr.mxu0 0.0
  %3000 = vmatpush1.msra.mxu0 %v2744
  %3001 = vmatprep.subr.mxu0 0.0
  %3002 = vmatpush1.msra.mxu0 %v2745
  %3003 = vmatprep.subr.mxu0 0.0
  %3004 = vmatpush1.msra.mxu0 %v2746
  %3005 = vmatprep.subr.mxu0 0.0
  %3006 = vmatpush1.msra.mxu0 %v2747
  %3007 = vmatprep.subr.mxu0 0.0
  %3008 = vmatpush1.msra.mxu0 %v2748
  %3009 = vmatprep.subr.mxu0 0.0
  %3010 = vmatpush1.msra.mxu0 %v2749
  %3011 = vmatprep.subr.mxu0 0.0
  %3012 = vmatpush1.msra.mxu0 %v2750
  %3013 = vmatprep.subr.mxu0 0.0
  %3014 = vmatpush1.msra.mxu0 %v2751
  %3015 = vmatprep.subr.mxu0 0.0
  %3016 = vmatpush1.msra.mxu0 %v2752
  %3017 = vmatprep.mubr.f32.mxu0 %v1044
  %3018 = vmatmul.mubr.f32.gmra.mrb[0].mxu0 %v1042
  %v3019 = vpop.f32.mrb[0].mxu0
  %v3020 = vadd.f32 %v2950, %v3019
  %v3021 = vpop.f32.mrb[0].mxu0
  %3022 = vdwg.mxu0
  %3023 = vmatprep.subr.mxu0 0.0
  %3024 = vmatpush1.msra.mxu0 %v2753
  %3025 = vmatprep.subr.mxu0 0.0
  %3026 = vmatpush1.msra.mxu0 %v2754
  %3027 = vmatprep.subr.mxu0 0.0
  %3028 = vmatpush1.msra.mxu0 %v2755
  %3029 = vmatprep.subr.mxu0 0.0
  %3030 = vmatpush1.msra.mxu0 %v2756
  %3031 = vmatprep.subr.mxu0 0.0
  %3032 = vmatpush1.msra.mxu0 %v2757
  %3033 = vmatprep.subr.mxu0 0.0
  %3034 = vmatpush1.msra.mxu0 %v2758
  %3035 = vmatprep.subr.mxu0 0.0
  %3036 = vmatpush1.msra.mxu0 %v2759
  %3037 = vmatprep.subr.mxu0 0.0
  %3038 = vmatpush1.msra.mxu0 %v2760
  %3039 = vmatprep.subr.mxu0 0.0
  %3040 = vmatpush1.msra.mxu0 %v2761
  %3041 = vmatprep.subr.mxu0 0.0
  %3042 = vmatpush1.msra.mxu0 %v2762
  %3043 = vmatprep.subr.mxu0 0.0
  %3044 = vmatpush1.msra.mxu0 %v2763
  %3045 = vmatprep.subr.mxu0 0.0
  %3046 = vmatpush1.msra.mxu0 %v2764
  %3047 = vmatprep.subr.mxu0 0.0
  %3048 = vmatpush1.msra.mxu0 %v2765
  %3049 = vmatprep.subr.mxu0 0.0
  %3050 = vmatpush1.msra.mxu0 %v2766
  %3051 = vmatprep.subr.mxu0 0.0
  %3052 = vmatpush1.msra.mxu0 %v2767
  %3053 = vmatprep.subr.mxu0 0.0
  %3054 = vmatpush1.msra.mxu0 %v2768
  %3055 = vmatprep.subr.mxu0 0.0
  %3056 = vmatpush1.msra.mxu0 %v2769
  %3057 = vmatprep.subr.mxu0 0.0
  %3058 = vmatpush1.msra.mxu0 %v2770
  %3059 = vmatprep.subr.mxu0 0.0
  %3060 = vmatpush1.msra.mxu0 %v2771
  %3061 = vmatprep.subr.mxu0 0.0
  %3062 = vmatpush1.msra.mxu0 %v2772
  %3063 = vmatprep.subr.mxu0 0.0
  %3064 = vmatpush1.msra.mxu0 %v2773
  %3065 = vmatprep.subr.mxu0 0.0
  %3066 = vmatpush1.msra.mxu0 %v2774
  %3067 = vmatprep.subr.mxu0 0.0
  %3068 = vmatpush1.msra.mxu0 %v2775
  %3069 = vmatprep.subr.mxu0 0.0
  %3070 = vmatpush1.msra.mxu0 %v2776
  %3071 = vmatprep.subr.mxu0 0.0
  %3072 = vmatpush1.msra.mxu0 %v2777
  %3073 = vmatprep.subr.mxu0 0.0
  %3074 = vmatpush1.msra.mxu0 %v2778
  %3075 = vmatprep.subr.mxu0 0.0
  %3076 = vmatpush1.msra.mxu0 %v2779
  %3077 = vmatprep.subr.mxu0 0.0
  %3078 = vmatpush1.msra.mxu0 %v2780
  %3079 = vmatprep.subr.mxu0 0.0
  %3080 = vmatpush1.msra.mxu0 %v2781
  %3081 = vmatprep.subr.mxu0 0.0
  %3082 = vmatpush1.msra.mxu0 %v2782
  %3083 = vmatprep.subr.mxu0 0.0
  %3084 = vmatpush1.msra.mxu0 %v2783
  %3085 = vmatprep.subr.mxu0 0.0
  %3086 = vmatpush1.msra.mxu0 %v2784
  %3087 = vmatprep.mubr.f32.mxu0 %v1115
  %3088 = vmatmul.mubr.f32.gmra.mrb[0].mxu0 %v1113
  %v3089 = vpop.f32.mrb[0].mxu0
  %v3090 = vadd.f32 %v3020, %v3089
  %v3091 = vpop.f32.mrb[0].mxu0
  %3092 = vdwg.mxu0
  %3093 = vmatprep.subr.mxu0 0.0
  %3094 = vmatpush1.msra.mxu0 %v2785
  %3095 = vmatprep.subr.mxu0 0.0
  %3096 = vmatpush1.msra.mxu0 %v2786
  %3097 = vmatprep.subr.mxu0 0.0
  %3098 = vmatpush1.msra.mxu0 %v2787
  %3099 = vmatprep.subr.mxu0 0.0
  %3100 = vmatpush1.msra.mxu0 %v2788
  %3101 = vmatprep.subr.mxu0 0.0
  %3102 = vmatpush1.msra.mxu0 %v2789
  %3103 = vmatprep.subr.mxu0 0.0
  %3104 = vmatpush1.msra.mxu0 %v2790
  %3105 = vmatprep.subr.mxu0 0.0
  %3106 = vmatpush1.msra.mxu0 %v2791
  %3107 = vmatprep.subr.mxu0 0.0
  %3108 = vmatpush1.msra.mxu0 %v2792
  %3109 = vmatprep.subr.mxu0 0.0
  %3110 = vmatpush1.msra.mxu0 %v2793
  %3111 = vmatprep.subr.mxu0 0.0
  %3112 = vmatpush1.msra.mxu0 %v2794
  %3113 = vmatprep.subr.mxu0 0.0
  %3114 = vmatpush1.msra.mxu0 %v2795
  %3115 = vmatprep.subr.mxu0 0.0
  %3116 = vmatpush1.msra.mxu0 %v2796
  %3117 = vmatprep.subr.mxu0 0.0
  %3118 = vmatpush1.msra.mxu0 %v2797
  %3119 = vmatprep.subr.mxu0 0.0
  %3120 = vmatpush1.msra.mxu0 %v2798
  %3121 = vmatprep.subr.mxu0 0.0
  %3122 = vmatpush1.msra.mxu0 %v2799
  %3123 = vmatprep.subr.mxu0 0.0
  %3124 = vmatpush1.msra.mxu0 %v2800
  %3125 = vmatprep.subr.mxu0 0.0
  %3126 = vmatpush1.msra.mxu0 %v2801
  %3127 = vmatprep.subr.mxu0 0.0
  %3128 = vmatpush1.msra.mxu0 %v2802
  %3129 = vmatprep.subr.mxu0 0.0
  %3130 = vmatpush1.msra.mxu0 %v2803
  %3131 = vmatprep.subr.mxu0 0.0
  %3132 = vmatpush1.msra.mxu0 %v2804
  %3133 = vmatprep.subr.mxu0 0.0
  %3134 = vmatpush1.msra.mxu0 %v2805
  %3135 = vmatprep.subr.mxu0 0.0
  %3136 = vmatpush1.msra.mxu0 %v2806
  %3137 = vmatprep.subr.mxu0 0.0
  %3138 = vmatpush1.msra.mxu0 0.0
  %3139 = vmatprep.subr.mxu0 0.0
  %3140 = vmatpush1.msra.mxu0 0.0
  %3141 = vmatprep.subr.mxu0 0.0
  %3142 = vmatpush1.msra.mxu0 0.0
  %3143 = vmatprep.subr.mxu0 0.0
  %3144 = vmatpush1.msra.mxu0 0.0
  %3145 = vmatprep.subr.mxu0 0.0
  %3146 = vmatpush1.msra.mxu0 0.0
  %3147 = vmatprep.subr.mxu0 0.0
  %3148 = vmatpush1.msra.mxu0 0.0
  %3149 = vmatprep.subr.mxu0 0.0
  %3150 = vmatpush1.msra.mxu0 0.0
  %3151 = vmatprep.subr.mxu0 0.0
  %3152 = vmatpush1.msra.mxu0 0.0
  %3153 = vmatprep.subr.mxu0 0.0
  %3154 = vmatpush1.msra.mxu0 0.0
  %3155 = vmatprep.subr.mxu0 0.0
  %3156 = vmatpush1.msra.mxu0 0.0
  %3157 = vmatprep.mubr.f32.mxu0 %v1319
  %3158 = vmatmul.mubr.f32.gmra.mrb[0].mxu0 %v1184
  %v3159 = vpop.f32.mrb[0].mxu0
  %v3160 = vadd.f32 %v3090, %v3159
  %v3161 = vpop.f32.mrb[0].mxu0
  %3162 = vdwg.mxu0
  %v3163 = vld [vmem:[%s67] sm:$0x1]
  %v3165 = vlaneseq
  %v3166 = vshrl.u32 %v3165, 7
  %v3167 = vsub.s32 0, %v3166
  %v3168 = vrot.slane %v3163, %v3167
  %v3170 = vadd.f32 %v3160, %v3168
  %v3171 = vld [vmem:[%s69] sm:$0xff]
  %v3172 = vld [vmem:[%s69 + $0x8] sm:$0xff]
  %v3173 = vld [vmem:[%s69 + $0x10] sm:$0xff]
  %v3174 = vld [vmem:[%s69 + $0x18] sm:$0xff]
  %v3175 = vld [vmem:[%s69 + $0x20] sm:$0xff]
  %v3176 = vld [vmem:[%s69 + $0x28] sm:$0xff]
  %v3177 = vld [vmem:[%s69 + $0x30] sm:$0xff]
  %v3178 = vld [vmem:[%s69 + $0x38] sm:$0xff]
  %v3179 = vld [vmem:[%s69 + $0x40] sm:$0xff]
  %v3180 = vld [vmem:[%s69 + $0x48] sm:$0xff]
  %v3181 = vld [vmem:[%s69 + $0x50] sm:$0xff]
  %v3182 = vld [vmem:[%s69 + $0x58] sm:$0xff]
  %v3183 = vld [vmem:[%s69 + $0x60] sm:$0xff]
  %v3184 = vld [vmem:[%s69 + $0x68] sm:$0xff]
  %v3185 = vld [vmem:[%s69 + $0x70] sm:$0xff]
  %v3186 = vld [vmem:[%s69 + $0x78] sm:$0xff]
  %v3187 = vld [vmem:[%s69 + $0x80] sm:$0xff]
  %v3188 = vld [vmem:[%s69 + $0x88] sm:$0xff]
  %v3189 = vld [vmem:[%s69 + $0x90] sm:$0xff]
  %v3190 = vld [vmem:[%s69 + $0x98] sm:$0xff]
  %v3191 = vld [vmem:[%s69 + $0xa0] sm:$0xff]
  %v3192 = vld [vmem:[%s69 + $0xa8] sm:$0xff]
  %v3193 = vld [vmem:[%s69 + $0xb0] sm:$0xff]
  %v3194 = vld [vmem:[%s69 + $0xb8] sm:$0xff]
  %v3195 = vld [vmem:[%s69 + $0xc0] sm:$0xff]
  %v3196 = vld [vmem:[%s69 + $0xc8] sm:$0xff]
  %v3197 = vld [vmem:[%s69 + $0xd0] sm:$0xff]
  %v3198 = vld [vmem:[%s69 + $0xd8] sm:$0xff]
  %v3199 = vld [vmem:[%s69 + $0xe0] sm:$0xff]
  %v3200 = vld [vmem:[%s69 + $0xe8] sm:$0xff]
  %v3201 = vld [vmem:[%s69 + $0xf0] sm:$0xff]
  %v3202 = vld [vmem:[%s69 + $0xf8] sm:$0xff]
  %v3203 = vld [vmem:[%s69 + $0x100] sm:$0xff]
  %v3204 = vld [vmem:[%s69 + $0x108] sm:$0xff]
  %v3205 = vld [vmem:[%s69 + $0x110] sm:$0xff]
  %v3206 = vld [vmem:[%s69 + $0x118] sm:$0xff]
  %v3207 = vld [vmem:[%s69 + $0x120] sm:$0xff]
  %v3208 = vld [vmem:[%s69 + $0x128] sm:$0xff]
  %v3209 = vld [vmem:[%s69 + $0x130] sm:$0xff]
  %v3210 = vld [vmem:[%s69 + $0x138] sm:$0xff]
  %v3211 = vld [vmem:[%s69 + $0x140] sm:$0xff]
  %v3212 = vld [vmem:[%s69 + $0x148] sm:$0xff]
  %v3213 = vld [vmem:[%s69 + $0x150] sm:$0xff]
  %v3214 = vld [vmem:[%s69 + $0x158] sm:$0xff]
  %v3215 = vld [vmem:[%s69 + $0x160] sm:$0xff]
  %v3216 = vld [vmem:[%s69 + $0x168] sm:$0xff]
  %v3217 = vld [vmem:[%s69 + $0x170] sm:$0xff]
  %v3218 = vld [vmem:[%s69 + $0x178] sm:$0xff]
  %v3219 = vld [vmem:[%s69 + $0x180] sm:$0xff]
  %v3220 = vld [vmem:[%s69 + $0x188] sm:$0xff]
  %v3221 = vld [vmem:[%s69 + $0x190] sm:$0xff]
  %v3222 = vld [vmem:[%s69 + $0x198] sm:$0xff]
  %v3223 = vld [vmem:[%s69 + $0x1a0] sm:$0xff]
  %v3224 = vld [vmem:[%s69 + $0x1a8] sm:$0xff]
  %v3225 = vld [vmem:[%s69 + $0x1b0] sm:$0xff]
  %v3226 = vld [vmem:[%s69 + $0x1b8] sm:$0xff]
  %v3227 = vld [vmem:[%s69 + $0x1c0] sm:$0xff]
  %v3228 = vld [vmem:[%s69 + $0x1c8] sm:$0xff]
  %v3229 = vld [vmem:[%s69 + $0x1d0] sm:$0xff]
  %v3230 = vld [vmem:[%s69 + $0x1d8] sm:$0xff]
  %v3231 = vld [vmem:[%s69 + $0x1e0] sm:$0xff]
  %v3232 = vld [vmem:[%s69 + $0x1e8] sm:$0xff]
  %v3233 = vld [vmem:[%s69 + $0x1f0] sm:$0xff]
  %v3234 = vld [vmem:[%s69 + $0x1f8] sm:$0xff]
  %v3235 = vld [vmem:[%s69 + $0x200] sm:$0xff]
  %v3236 = vld [vmem:[%s69 + $0x208] sm:$0xff]
  %v3237 = vld [vmem:[%s69 + $0x210] sm:$0xff]
  %v3238 = vld [vmem:[%s69 + $0x218] sm:$0xff]
  %v3239 = vld [vmem:[%s69 + $0x220] sm:$0xff]
  %v3240 = vld [vmem:[%s69 + $0x228] sm:$0xff]
  %v3241 = vld [vmem:[%s69 + $0x230] sm:$0xff]
  %v3242 = vld [vmem:[%s69 + $0x238] sm:$0xff]
  %v3243 = vld [vmem:[%s69 + $0x240] sm:$0xff]
  %v3244 = vld [vmem:[%s69 + $0x248] sm:$0xff]
  %v3245 = vld [vmem:[%s69 + $0x250] sm:$0xff]
  %v3246 = vld [vmem:[%s69 + $0x258] sm:$0xff]
  %v3247 = vld [vmem:[%s69 + $0x260] sm:$0xff]
  %v3248 = vld [vmem:[%s69 + $0x268] sm:$0xff]
  %v3249 = vld [vmem:[%s69 + $0x270] sm:$0xff]
  %v3250 = vld [vmem:[%s69 + $0x278] sm:$0xff]
  %v3251 = vld [vmem:[%s69 + $0x280] sm:$0xff]
  %v3252 = vld [vmem:[%s69 + $0x288] sm:$0xff]
  %v3253 = vld [vmem:[%s69 + $0x290] sm:$0xff]
  %v3254 = vld [vmem:[%s69 + $0x298] sm:$0xff]
  %v3255 = vld [vmem:[%s69 + $0x2a0] sm:$0xff]
  %v3256 = vld [vmem:[%s69 + $0x2a8] sm:$0xff]
  %v3257 = vld [vmem:[%s69 + $0x2b0] sm:$0xff]
  %v3258 = vld [vmem:[%s69 + $0x2b8] sm:$0xff]
  %v3259 = vld [vmem:[%s69 + $0x2c0] sm:$0xff]
  %v3260 = vld [vmem:[%s69 + $0x2c8] sm:$0xff]
  %v3261 = vld [vmem:[%s69 + $0x2d0] sm:$0xff]
  %v3262 = vld [vmem:[%s69 + $0x2d8] sm:$0xff]
  %v3263 = vld [vmem:[%s69 + $0x2e0] sm:$0xff]
  %v3264 = vld [vmem:[%s69 + $0x2e8] sm:$0xff]
  %v3265 = vld [vmem:[%s69 + $0x2f0] sm:$0xff]
  %v3266 = vld [vmem:[%s69 + $0x2f8] sm:$0xff]
  %v3267 = vld [vmem:[%s69 + $0x300] sm:$0xff]
  %v3268 = vld [vmem:[%s69 + $0x308] sm:$0xff]
  %v3269 = vld [vmem:[%s69 + $0x310] sm:$0xff]
  %v3270 = vld [vmem:[%s69 + $0x318] sm:$0xff]
  %v3271 = vld [vmem:[%s69 + $0x320] sm:$0xff]
  %v3272 = vld [vmem:[%s69 + $0x328] sm:$0xff]
  %v3273 = vld [vmem:[%s69 + $0x330] sm:$0xff]
  %v3274 = vld [vmem:[%s69 + $0x338] sm:$0xff]
  %v3275 = vld [vmem:[%s69 + $0x340] sm:$0xff]
  %v3276 = vld [vmem:[%s69 + $0x348] sm:$0xff]
  %v3277 = vld [vmem:[%s69 + $0x350] sm:$0xff]
  %v3278 = vld [vmem:[%s69 + $0x358] sm:$0xff]
  %v3279 = vld [vmem:[%s69 + $0x360] sm:$0xff]
  %v3280 = vld [vmem:[%s69 + $0x368] sm:$0xff]
  %v3281 = vld [vmem:[%s69 + $0x370] sm:$0xff]
  %v3282 = vld [vmem:[%s69 + $0x378] sm:$0xff]
  %v3283 = vld [vmem:[%s69 + $0x380] sm:$0xff]
  %v3284 = vld [vmem:[%s69 + $0x388] sm:$0xff]
  %v3285 = vld [vmem:[%s69 + $0x390] sm:$0xff]
  %v3286 = vld [vmem:[%s69 + $0x398] sm:$0xff]
  %v3287 = vld [vmem:[%s69 + $0x3a0] sm:$0xff]
  %v3288 = vld [vmem:[%s69 + $0x3a8] sm:$0xff]
  %v3289 = vld [vmem:[%s71] sm:$0xff]
  %v3290 = vld [vmem:[%s71 + $0x8] sm:$0xff]
  %3291 = vmatprep.subr.mxu0 0.0
  %3292 = vmatpush1.msra.mxu0 %v3289
  %3293 = vmatprep.subr.mxu0 0.0
  %3294 = vmatpush1.msra.mxu0 %v3290
  %3295 = vmatprep.subr.mxu0 0.0
  %3296 = vmatpush1.msra.mxu0 0.0
  %3297 = vmatprep.subr.mxu0 0.0
  %3298 = vmatpush1.msra.mxu0 0.0
  %3299 = vmatprep.subr.mxu0 0.0
  %3300 = vmatpush1.msra.mxu0 0.0
  %3301 = vmatprep.subr.mxu0 0.0
  %3302 = vmatpush1.msra.mxu0 0.0
  %3303 = vmatprep.subr.mxu0 0.0
  %3304 = vmatpush1.msra.mxu0 0.0
  %3305 = vmatprep.subr.mxu0 0.0
  %3306 = vmatpush1.msra.mxu0 0.0
  %3307 = vmatprep.subr.mxu0 0.0
  %3308 = vmatpush1.msra.mxu0 0.0
  %3309 = vmatprep.subr.mxu0 0.0
  %3310 = vmatpush1.msra.mxu0 0.0
  %3311 = vmatprep.subr.mxu0 0.0
  %3312 = vmatpush1.msra.mxu0 0.0
  %3313 = vmatprep.subr.mxu0 0.0
  %3314 = vmatpush1.msra.mxu0 0.0
  %3315 = vmatprep.subr.mxu0 0.0
  %3316 = vmatpush1.msra.mxu0 0.0
  %3317 = vmatprep.subr.mxu0 0.0
  %3318 = vmatpush1.msra.mxu0 0.0
  %3319 = vmatprep.subr.mxu0 0.0
  %3320 = vmatpush1.msra.mxu0 0.0
  %3321 = vmatprep.subr.mxu0 0.0
  %3322 = vmatpush1.msra.mxu0 0.0
  %3323 = vmatprep.subr.mxu0 0.0
  %3324 = vmatpush1.msra.mxu0 0.0
  %3325 = vmatprep.subr.mxu0 0.0
  %3326 = vmatpush1.msra.mxu0 0.0
  %3327 = vmatprep.subr.mxu0 0.0
  %3328 = vmatpush1.msra.mxu0 0.0
  %3329 = vmatprep.subr.mxu0 0.0
  %3330 = vmatpush1.msra.mxu0 0.0
  %3331 = vmatprep.subr.mxu0 0.0
  %3332 = vmatpush1.msra.mxu0 0.0
  %3333 = vmatprep.subr.mxu0 0.0
  %3334 = vmatpush1.msra.mxu0 0.0
  %3335 = vmatprep.subr.mxu0 0.0
  %3336 = vmatpush1.msra.mxu0 0.0
  %3337 = vmatprep.subr.mxu0 0.0
  %3338 = vmatpush1.msra.mxu0 0.0
  %3339 = vmatprep.subr.mxu0 0.0
  %3340 = vmatpush1.msra.mxu0 0.0
  %3341 = vmatprep.subr.mxu0 0.0
  %3342 = vmatpush1.msra.mxu0 0.0
  %3343 = vmatprep.subr.mxu0 0.0
  %3344 = vmatpush1.msra.mxu0 0.0
  %3345 = vmatprep.subr.mxu0 0.0
  %3346 = vmatpush1.msra.mxu0 0.0
  %3347 = vmatprep.subr.mxu0 0.0
  %3348 = vmatpush1.msra.mxu0 0.0
  %3349 = vmatprep.subr.mxu0 0.0
  %3350 = vmatpush1.msra.mxu0 0.0
  %3351 = vmatprep.subr.mxu0 0.0
  %3352 = vmatpush1.msra.mxu0 0.0
  %3353 = vmatprep.subr.mxu0 0.0
  %3354 = vmatpush1.msra.mxu0 0.0
  %3355 = vmatprep.mubr.f32.mxu0 0.0
  %3356 = vmatmul.mubr.f32.gmra.mrb[0].mxu0 %v2811
  %v3357 = vpop.f32.mrb[0].mxu0
  %v3358 = vadd.f32 0.0, %v3357
  %v3359 = vpop.f32.mrb[0].mxu0
  %3360 = vdwg.mxu0
  %3361 = vmatprep.subr.mxu0 0.0
  %3362 = vmatpush1.msra.mxu0 %v3171
  %3363 = vmatprep.subr.mxu0 0.0
  %3364 = vmatpush1.msra.mxu0 %v3172
  %3365 = vmatprep.subr.mxu0 0.0
  %3366 = vmatpush1.msra.mxu0 %v3173
  %3367 = vmatprep.subr.mxu0 0.0
  %3368 = vmatpush1.msra.mxu0 %v3174
  %3369 = vmatprep.subr.mxu0 0.0
  %3370 = vmatpush1.msra.mxu0 %v3175
  %3371 = vmatprep.subr.mxu0 0.0
  %3372 = vmatpush1.msra.mxu0 %v3176
  %3373 = vmatprep.subr.mxu0 0.0
  %3374 = vmatpush1.msra.mxu0 %v3177
  %3375 = vmatprep.subr.mxu0 0.0
  %3376 = vmatpush1.msra.mxu0 %v3178
  %3377 = vmatprep.subr.mxu0 0.0
  %3378 = vmatpush1.msra.mxu0 %v3179
  %3379 = vmatprep.subr.mxu0 0.0
  %3380 = vmatpush1.msra.mxu0 %v3180
  %3381 = vmatprep.subr.mxu0 0.0
  %3382 = vmatpush1.msra.mxu0 %v3181
  %3383 = vmatprep.subr.mxu0 0.0
  %3384 = vmatpush1.msra.mxu0 %v3182
  %3385 = vmatprep.subr.mxu0 0.0
  %3386 = vmatpush1.msra.mxu0 %v3183
  %3387 = vmatprep.subr.mxu0 0.0
  %3388 = vmatpush1.msra.mxu0 %v3184
  %3389 = vmatprep.subr.mxu0 0.0
  %3390 = vmatpush1.msra.mxu0 %v3185
  %3391 = vmatprep.subr.mxu0 0.0
  %3392 = vmatpush1.msra.mxu0 %v3186
  %3393 = vmatprep.subr.mxu0 0.0
  %3394 = vmatpush1.msra.mxu0 %v3187
  %3395 = vmatprep.subr.mxu0 0.0
  %3396 = vmatpush1.msra.mxu0 %v3188
  %3397 = vmatprep.subr.mxu0 0.0
  %3398 = vmatpush1.msra.mxu0 %v3189
  %3399 = vmatprep.subr.mxu0 0.0
  %3400 = vmatpush1.msra.mxu0 %v3190
  %3401 = vmatprep.subr.mxu0 0.0
  %3402 = vmatpush1.msra.mxu0 %v3191
  %3403 = vmatprep.subr.mxu0 0.0
  %3404 = vmatpush1.msra.mxu0 %v3192
  %3405 = vmatprep.subr.mxu0 0.0
  %3406 = vmatpush1.msra.mxu0 %v3193
  %3407 = vmatprep.subr.mxu0 0.0
  %3408 = vmatpush1.msra.mxu0 %v3194
  %3409 = vmatprep.subr.mxu0 0.0
  %3410 = vmatpush1.msra.mxu0 %v3195
  %3411 = vmatprep.subr.mxu0 0.0
  %3412 = vmatpush1.msra.mxu0 %v3196
  %3413 = vmatprep.subr.mxu0 0.0
  %3414 = vmatpush1.msra.mxu0 %v3197
  %3415 = vmatprep.subr.mxu0 0.0
  %3416 = vmatpush1.msra.mxu0 %v3198
  %3417 = vmatprep.subr.mxu0 0.0
  %3418 = vmatpush1.msra.mxu0 %v3199
  %3419 = vmatprep.subr.mxu0 0.0
  %3420 = vmatpush1.msra.mxu0 %v3200
  %3421 = vmatprep.subr.mxu0 0.0
  %3422 = vmatpush1.msra.mxu0 %v3201
  %3423 = vmatprep.subr.mxu0 0.0
  %3424 = vmatpush1.msra.mxu0 %v3202
  %3425 = vmatprep.mubr.f32.mxu0 %v973
  %3426 = vmatmul.mubr.f32.gmra.mrb[0].mxu0 %v971
  %v3427 = vpop.f32.mrb[0].mxu0
  %v3428 = vadd.f32 %v3358, %v3427
  %v3429 = vpop.f32.mrb[0].mxu0
  %3430 = vdwg.mxu0
  %3431 = vmatprep.subr.mxu0 0.0
  %3432 = vmatpush1.msra.mxu0 %v3203
  %3433 = vmatprep.subr.mxu0 0.0
  %3434 = vmatpush1.msra.mxu0 %v3204
  %3435 = vmatprep.subr.mxu0 0.0
  %3436 = vmatpush1.msra.mxu0 %v3205
  %3437 = vmatprep.subr.mxu0 0.0
  %3438 = vmatpush1.msra.mxu0 %v3206
  %3439 = vmatprep.subr.mxu0 0.0
  %3440 = vmatpush1.msra.mxu0 %v3207
  %3441 = vmatprep.subr.mxu0 0.0
  %3442 = vmatpush1.msra.mxu0 %v3208
  %3443 = vmatprep.subr.mxu0 0.0
  %3444 = vmatpush1.msra.mxu0 %v3209
  %3445 = vmatprep.subr.mxu0 0.0
  %3446 = vmatpush1.msra.mxu0 %v3210
  %3447 = vmatprep.subr.mxu0 0.0
  %3448 = vmatpush1.msra.mxu0 %v3211
  %3449 = vmatprep.subr.mxu0 0.0
  %3450 = vmatpush1.msra.mxu0 %v3212
  %3451 = vmatprep.subr.mxu0 0.0
  %3452 = vmatpush1.msra.mxu0 %v3213
  %3453 = vmatprep.subr.mxu0 0.0
  %3454 = vmatpush1.msra.mxu0 %v3214
  %3455 = vmatprep.subr.mxu0 0.0
  %3456 = vmatpush1.msra.mxu0 %v3215
  %3457 = vmatprep.subr.mxu0 0.0
  %3458 = vmatpush1.msra.mxu0 %v3216
  %3459 = vmatprep.subr.mxu0 0.0
  %3460 = vmatpush1.msra.mxu0 %v3217
  %3461 = vmatprep.subr.mxu0 0.0
  %3462 = vmatpush1.msra.mxu0 %v3218
  %3463 = vmatprep.subr.mxu0 0.0
  %3464 = vmatpush1.msra.mxu0 %v3219
  %3465 = vmatprep.subr.mxu0 0.0
  %3466 = vmatpush1.msra.mxu0 %v3220
  %3467 = vmatprep.subr.mxu0 0.0
  %3468 = vmatpush1.msra.mxu0 %v3221
  %3469 = vmatprep.subr.mxu0 0.0
  %3470 = vmatpush1.msra.mxu0 %v3222
  %3471 = vmatprep.subr.mxu0 0.0
  %3472 = vmatpush1.msra.mxu0 %v3223
  %3473 = vmatprep.subr.mxu0 0.0
  %3474 = vmatpush1.msra.mxu0 %v3224
  %3475 = vmatprep.subr.mxu0 0.0
  %3476 = vmatpush1.msra.mxu0 %v3225
  %3477 = vmatprep.subr.mxu0 0.0
  %3478 = vmatpush1.msra.mxu0 %v3226
  %3479 = vmatprep.subr.mxu0 0.0
  %3480 = vmatpush1.msra.mxu0 %v3227
  %3481 = vmatprep.subr.mxu0 0.0
  %3482 = vmatpush1.msra.mxu0 %v3228
  %3483 = vmatprep.subr.mxu0 0.0
  %3484 = vmatpush1.msra.mxu0 %v3229
  %3485 = vmatprep.subr.mxu0 0.0
  %3486 = vmatpush1.msra.mxu0 %v3230
  %3487 = vmatprep.subr.mxu0 0.0
  %3488 = vmatpush1.msra.mxu0 %v3231
  %3489 = vmatprep.subr.mxu0 0.0
  %3490 = vmatpush1.msra.mxu0 %v3232
  %3491 = vmatprep.subr.mxu0 0.0
  %3492 = vmatpush1.msra.mxu0 %v3233
  %3493 = vmatprep.subr.mxu0 0.0
  %3494 = vmatpush1.msra.mxu0 %v3234
  %3495 = vmatprep.mubr.f32.mxu0 %v1044
  %3496 = vmatmul.mubr.f32.gmra.mrb[0].mxu0 %v1042
  %v3497 = vpop.f32.mrb[0].mxu0
  %v3498 = vadd.f32 %v3428, %v3497
  %v3499 = vpop.f32.mrb[0].mxu0
  %3500 = vdwg.mxu0
  %3501 = vmatprep.subr.mxu0 0.0
  %3502 = vmatpush1.msra.mxu0 %v3235
  %3503 = vmatprep.subr.mxu0 0.0
  %3504 = vmatpush1.msra.mxu0 %v3236
  %3505 = vmatprep.subr.mxu0 0.0
  %3506 = vmatpush1.msra.mxu0 %v3237
  %3507 = vmatprep.subr.mxu0 0.0
  %3508 = vmatpush1.msra.mxu0 %v3238
  %3509 = vmatprep.subr.mxu0 0.0
  %3510 = vmatpush1.msra.mxu0 %v3239
  %3511 = vmatprep.subr.mxu0 0.0
  %3512 = vmatpush1.msra.mxu0 %v3240
  %3513 = vmatprep.subr.mxu0 0.0
  %3514 = vmatpush1.msra.mxu0 %v3241
  %3515 = vmatprep.subr.mxu0 0.0
  %3516 = vmatpush1.msra.mxu0 %v3242
  %3517 = vmatprep.subr.mxu0 0.0
  %3518 = vmatpush1.msra.mxu0 %v3243
  %3519 = vmatprep.subr.mxu0 0.0
  %3520 = vmatpush1.msra.mxu0 %v3244
  %3521 = vmatprep.subr.mxu0 0.0
  %3522 = vmatpush1.msra.mxu0 %v3245
  %3523 = vmatprep.subr.mxu0 0.0
  %3524 = vmatpush1.msra.mxu0 %v3246
  %3525 = vmatprep.subr.mxu0 0.0
  %3526 = vmatpush1.msra.mxu0 %v3247
  %3527 = vmatprep.subr.mxu0 0.0
  %3528 = vmatpush1.msra.mxu0 %v3248
  %3529 = vmatprep.subr.mxu0 0.0
  %3530 = vmatpush1.msra.mxu0 %v3249
  %3531 = vmatprep.subr.mxu0 0.0
  %3532 = vmatpush1.msra.mxu0 %v3250
  %3533 = vmatprep.subr.mxu0 0.0
  %3534 = vmatpush1.msra.mxu0 %v3251
  %3535 = vmatprep.subr.mxu0 0.0
  %3536 = vmatpush1.msra.mxu0 %v3252
  %3537 = vmatprep.subr.mxu0 0.0
  %3538 = vmatpush1.msra.mxu0 %v3253
  %3539 = vmatprep.subr.mxu0 0.0
  %3540 = vmatpush1.msra.mxu0 %v3254
  %3541 = vmatprep.subr.mxu0 0.0
  %3542 = vmatpush1.msra.mxu0 %v3255
  %3543 = vmatprep.subr.mxu0 0.0
  %3544 = vmatpush1.msra.mxu0 %v3256
  %3545 = vmatprep.subr.mxu0 0.0
  %3546 = vmatpush1.msra.mxu0 %v3257
  %3547 = vmatprep.subr.mxu0 0.0
  %3548 = vmatpush1.msra.mxu0 %v3258
  %3549 = vmatprep.subr.mxu0 0.0
  %3550 = vmatpush1.msra.mxu0 %v3259
  %3551 = vmatprep.subr.mxu0 0.0
  %3552 = vmatpush1.msra.mxu0 %v3260
  %3553 = vmatprep.subr.mxu0 0.0
  %3554 = vmatpush1.msra.mxu0 %v3261
  %3555 = vmatprep.subr.mxu0 0.0
  %3556 = vmatpush1.msra.mxu0 %v3262
  %3557 = vmatprep.subr.mxu0 0.0
  %3558 = vmatpush1.msra.mxu0 %v3263
  %3559 = vmatprep.subr.mxu0 0.0
  %3560 = vmatpush1.msra.mxu0 %v3264
  %3561 = vmatprep.subr.mxu0 0.0
  %3562 = vmatpush1.msra.mxu0 %v3265
  %3563 = vmatprep.subr.mxu0 0.0
  %3564 = vmatpush1.msra.mxu0 %v3266
  %3565 = vmatprep.mubr.f32.mxu0 %v1115
  %3566 = vmatmul.mubr.f32.gmra.mrb[0].mxu0 %v1113
  %v3567 = vpop.f32.mrb[0].mxu0
  %v3568 = vadd.f32 %v3498, %v3567
  %v3569 = vpop.f32.mrb[0].mxu0
  %3570 = vdwg.mxu0
  %3571 = vmatprep.subr.mxu0 0.0
  %3572 = vmatpush1.msra.mxu0 %v3267
  %3573 = vmatprep.subr.mxu0 0.0
  %3574 = vmatpush1.msra.mxu0 %v3268
  %3575 = vmatprep.subr.mxu0 0.0
  %3576 = vmatpush1.msra.mxu0 %v3269
  %3577 = vmatprep.subr.mxu0 0.0
  %3578 = vmatpush1.msra.mxu0 %v3270
  %3579 = vmatprep.subr.mxu0 0.0
  %3580 = vmatpush1.msra.mxu0 %v3271
  %3581 = vmatprep.subr.mxu0 0.0
  %3582 = vmatpush1.msra.mxu0 %v3272
  %3583 = vmatprep.subr.mxu0 0.0
  %3584 = vmatpush1.msra.mxu0 %v3273
  %3585 = vmatprep.subr.mxu0 0.0
  %3586 = vmatpush1.msra.mxu0 %v3274
  %3587 = vmatprep.subr.mxu0 0.0
  %3588 = vmatpush1.msra.mxu0 %v3275
  %3589 = vmatprep.subr.mxu0 0.0
  %3590 = vmatpush1.msra.mxu0 %v3276
  %3591 = vmatprep.subr.mxu0 0.0
  %3592 = vmatpush1.msra.mxu0 %v3277
  %3593 = vmatprep.subr.mxu0 0.0
  %3594 = vmatpush1.msra.mxu0 %v3278
  %3595 = vmatprep.subr.mxu0 0.0
  %3596 = vmatpush1.msra.mxu0 %v3279
  %3597 = vmatprep.subr.mxu0 0.0
  %3598 = vmatpush1.msra.mxu0 %v3280
  %3599 = vmatprep.subr.mxu0 0.0
  %3600 = vmatpush1.msra.mxu0 %v3281
  %3601 = vmatprep.subr.mxu0 0.0
  %3602 = vmatpush1.msra.mxu0 %v3282
  %3603 = vmatprep.subr.mxu0 0.0
  %3604 = vmatpush1.msra.mxu0 %v3283
  %3605 = vmatprep.subr.mxu0 0.0
  %3606 = vmatpush1.msra.mxu0 %v3284
  %3607 = vmatprep.subr.mxu0 0.0
  %3608 = vmatpush1.msra.mxu0 %v3285
  %3609 = vmatprep.subr.mxu0 0.0
  %3610 = vmatpush1.msra.mxu0 %v3286
  %3611 = vmatprep.subr.mxu0 0.0
  %3612 = vmatpush1.msra.mxu0 %v3287
  %3613 = vmatprep.subr.mxu0 0.0
  %3614 = vmatpush1.msra.mxu0 %v3288
  %3615 = vmatprep.subr.mxu0 0.0
  %3616 = vmatpush1.msra.mxu0 0.0
  %3617 = vmatprep.subr.mxu0 0.0
  %3618 = vmatpush1.msra.mxu0 0.0
  %3619 = vmatprep.subr.mxu0 0.0
  %3620 = vmatpush1.msra.mxu0 0.0
  %3621 = vmatprep.subr.mxu0 0.0
  %3622 = vmatpush1.msra.mxu0 0.0
  %3623 = vmatprep.subr.mxu0 0.0
  %3624 = vmatpush1.msra.mxu0 0.0
  %3625 = vmatprep.subr.mxu0 0.0
  %3626 = vmatpush1.msra.mxu0 0.0
  %3627 = vmatprep.subr.mxu0 0.0
  %3628 = vmatpush1.msra.mxu0 0.0
  %3629 = vmatprep.subr.mxu0 0.0
  %3630 = vmatpush1.msra.mxu0 0.0
  %3631 = vmatprep.subr.mxu0 0.0
  %3632 = vmatpush1.msra.mxu0 0.0
  %3633 = vmatprep.subr.mxu0 0.0
  %3634 = vmatpush1.msra.mxu0 0.0
  %3635 = vmatprep.mubr.f32.mxu0 %v1319
  %3636 = vmatmul.mubr.f32.gmra.mrb[0].mxu0 %v1184
  %v3637 = vpop.f32.mrb[0].mxu0
  %v3638 = vadd.f32 %v3568, %v3637
  %v3639 = vpop.f32.mrb[0].mxu0
  %3640 = vdwg.mxu0
  %v3641 = vld [vmem:[%s73] sm:$0x1]
  %v3643 = vlaneseq
  %v3644 = vshrl.u32 %v3643, 7
  %v3645 = vsub.s32 0, %v3644
  %v3646 = vrot.slane %v3641, %v3645
  %v3648 = vadd.f32 %v3638, %v3646
  %v3649 = vld [vmem:[%s75] sm:$0xff]
  %v3650 = vld [vmem:[%s75 + $0x8] sm:$0xff]
  %v3651 = vld [vmem:[%s75 + $0x10] sm:$0xff]
  %v3652 = vld [vmem:[%s75 + $0x18] sm:$0xff]
  %v3653 = vld [vmem:[%s75 + $0x20] sm:$0xff]
  %v3654 = vld [vmem:[%s75 + $0x28] sm:$0xff]
  %v3655 = vld [vmem:[%s75 + $0x30] sm:$0xff]
  %v3656 = vld [vmem:[%s75 + $0x38] sm:$0xff]
  %v3657 = vld [vmem:[%s75 + $0x40] sm:$0xff]
  %v3658 = vld [vmem:[%s75 + $0x48] sm:$0xff]
  %v3659 = vld [vmem:[%s75 + $0x50] sm:$0xff]
  %v3660 = vld [vmem:[%s75 + $0x58] sm:$0xff]
  %v3661 = vld [vmem:[%s75 + $0x60] sm:$0xff]
  %v3662 = vld [vmem:[%s75 + $0x68] sm:$0xff]
  %v3663 = vld [vmem:[%s75 + $0x70] sm:$0xff]
  %v3664 = vld [vmem:[%s75 + $0x78] sm:$0xff]
  %v3665 = vld [vmem:[%s75 + $0x80] sm:$0xff]
  %v3666 = vld [vmem:[%s75 + $0x88] sm:$0xff]
  %v3667 = vld [vmem:[%s75 + $0x90] sm:$0xff]
  %v3668 = vld [vmem:[%s75 + $0x98] sm:$0xff]
  %v3669 = vld [vmem:[%s75 + $0xa0] sm:$0xff]
  %v3670 = vld [vmem:[%s75 + $0xa8] sm:$0xff]
  %v3671 = vld [vmem:[%s75 + $0xb0] sm:$0xff]
  %v3672 = vld [vmem:[%s75 + $0xb8] sm:$0xff]
  %v3673 = vld [vmem:[%s75 + $0xc0] sm:$0xff]
  %v3674 = vld [vmem:[%s75 + $0xc8] sm:$0xff]
  %v3675 = vld [vmem:[%s75 + $0xd0] sm:$0xff]
  %v3676 = vld [vmem:[%s75 + $0xd8] sm:$0xff]
  %v3677 = vld [vmem:[%s75 + $0xe0] sm:$0xff]
  %v3678 = vld [vmem:[%s75 + $0xe8] sm:$0xff]
  %v3679 = vld [vmem:[%s75 + $0xf0] sm:$0xff]
  %v3680 = vld [vmem:[%s75 + $0xf8] sm:$0xff]
  %v3681 = vld [vmem:[%s75 + $0x100] sm:$0xff]
  %v3682 = vld [vmem:[%s75 + $0x108] sm:$0xff]
  %v3683 = vld [vmem:[%s75 + $0x110] sm:$0xff]
  %v3684 = vld [vmem:[%s75 + $0x118] sm:$0xff]
  %v3685 = vld [vmem:[%s75 + $0x120] sm:$0xff]
  %v3686 = vld [vmem:[%s75 + $0x128] sm:$0xff]
  %v3687 = vld [vmem:[%s75 + $0x130] sm:$0xff]
  %v3688 = vld [vmem:[%s75 + $0x138] sm:$0xff]
  %v3689 = vld [vmem:[%s75 + $0x140] sm:$0xff]
  %v3690 = vld [vmem:[%s75 + $0x148] sm:$0xff]
  %v3691 = vld [vmem:[%s75 + $0x150] sm:$0xff]
  %v3692 = vld [vmem:[%s75 + $0x158] sm:$0xff]
  %v3693 = vld [vmem:[%s75 + $0x160] sm:$0xff]
  %v3694 = vld [vmem:[%s75 + $0x168] sm:$0xff]
  %v3695 = vld [vmem:[%s75 + $0x170] sm:$0xff]
  %v3696 = vld [vmem:[%s75 + $0x178] sm:$0xff]
  %v3697 = vld [vmem:[%s75 + $0x180] sm:$0xff]
  %v3698 = vld [vmem:[%s75 + $0x188] sm:$0xff]
  %v3699 = vld [vmem:[%s75 + $0x190] sm:$0xff]
  %v3700 = vld [vmem:[%s75 + $0x198] sm:$0xff]
  %v3701 = vld [vmem:[%s75 + $0x1a0] sm:$0xff]
  %v3702 = vld [vmem:[%s75 + $0x1a8] sm:$0xff]
  %v3703 = vld [vmem:[%s75 + $0x1b0] sm:$0xff]
  %v3704 = vld [vmem:[%s75 + $0x1b8] sm:$0xff]
  %v3705 = vld [vmem:[%s75 + $0x1c0] sm:$0xff]
  %v3706 = vld [vmem:[%s75 + $0x1c8] sm:$0xff]
  %v3707 = vld [vmem:[%s75 + $0x1d0] sm:$0xff]
  %v3708 = vld [vmem:[%s75 + $0x1d8] sm:$0xff]
  %v3709 = vld [vmem:[%s75 + $0x1e0] sm:$0xff]
  %v3710 = vld [vmem:[%s75 + $0x1e8] sm:$0xff]
  %v3711 = vld [vmem:[%s75 + $0x1f0] sm:$0xff]
  %v3712 = vld [vmem:[%s75 + $0x1f8] sm:$0xff]
  %v3713 = vld [vmem:[%s75 + $0x200] sm:$0xff]
  %v3714 = vld [vmem:[%s75 + $0x208] sm:$0xff]
  %v3715 = vld [vmem:[%s75 + $0x210] sm:$0xff]
  %v3716 = vld [vmem:[%s75 + $0x218] sm:$0xff]
  %v3717 = vld [vmem:[%s75 + $0x220] sm:$0xff]
  %v3718 = vld [vmem:[%s75 + $0x228] sm:$0xff]
  %v3719 = vld [vmem:[%s75 + $0x230] sm:$0xff]
  %v3720 = vld [vmem:[%s75 + $0x238] sm:$0xff]
  %v3721 = vld [vmem:[%s75 + $0x240] sm:$0xff]
  %v3722 = vld [vmem:[%s75 + $0x248] sm:$0xff]
  %v3723 = vld [vmem:[%s75 + $0x250] sm:$0xff]
  %v3724 = vld [vmem:[%s75 + $0x258] sm:$0xff]
  %v3725 = vld [vmem:[%s75 + $0x260] sm:$0xff]
  %v3726 = vld [vmem:[%s75 + $0x268] sm:$0xff]
  %v3727 = vld [vmem:[%s75 + $0x270] sm:$0xff]
  %v3728 = vld [vmem:[%s75 + $0x278] sm:$0xff]
  %v3729 = vld [vmem:[%s75 + $0x280] sm:$0xff]
  %v3730 = vld [vmem:[%s75 + $0x288] sm:$0xff]
  %v3731 = vld [vmem:[%s75 + $0x290] sm:$0xff]
  %v3732 = vld [vmem:[%s75 + $0x298] sm:$0xff]
  %v3733 = vld [vmem:[%s75 + $0x2a0] sm:$0xff]
  %v3734 = vld [vmem:[%s75 + $0x2a8] sm:$0xff]
  %v3735 = vld [vmem:[%s75 + $0x2b0] sm:$0xff]
  %v3736 = vld [vmem:[%s75 + $0x2b8] sm:$0xff]
  %v3737 = vld [vmem:[%s75 + $0x2c0] sm:$0xff]
  %v3738 = vld [vmem:[%s75 + $0x2c8] sm:$0xff]
  %v3739 = vld [vmem:[%s75 + $0x2d0] sm:$0xff]
  %v3740 = vld [vmem:[%s75 + $0x2d8] sm:$0xff]
  %v3741 = vld [vmem:[%s75 + $0x2e0] sm:$0xff]
  %v3742 = vld [vmem:[%s75 + $0x2e8] sm:$0xff]
  %v3743 = vld [vmem:[%s75 + $0x2f0] sm:$0xff]
  %v3744 = vld [vmem:[%s75 + $0x2f8] sm:$0xff]
  %v3745 = vld [vmem:[%s75 + $0x300] sm:$0xff]
  %v3746 = vld [vmem:[%s75 + $0x308] sm:$0xff]
  %v3747 = vld [vmem:[%s75 + $0x310] sm:$0xff]
  %v3748 = vld [vmem:[%s75 + $0x318] sm:$0xff]
  %v3749 = vld [vmem:[%s75 + $0x320] sm:$0xff]
  %v3750 = vld [vmem:[%s75 + $0x328] sm:$0xff]
  %v3751 = vld [vmem:[%s75 + $0x330] sm:$0xff]
  %v3752 = vld [vmem:[%s75 + $0x338] sm:$0xff]
  %v3753 = vld [vmem:[%s75 + $0x340] sm:$0xff]
  %v3754 = vld [vmem:[%s75 + $0x348] sm:$0xff]
  %v3755 = vld [vmem:[%s75 + $0x350] sm:$0xff]
  %v3756 = vld [vmem:[%s75 + $0x358] sm:$0xff]
  %v3757 = vld [vmem:[%s75 + $0x360] sm:$0xff]
  %v3758 = vld [vmem:[%s75 + $0x368] sm:$0xff]
  %v3759 = vld [vmem:[%s75 + $0x370] sm:$0xff]
  %v3760 = vld [vmem:[%s75 + $0x378] sm:$0xff]
  %v3761 = vld [vmem:[%s75 + $0x380] sm:$0xff]
  %v3762 = vld [vmem:[%s75 + $0x388] sm:$0xff]
  %v3763 = vld [vmem:[%s75 + $0x390] sm:$0xff]
  %v3764 = vld [vmem:[%s75 + $0x398] sm:$0xff]
  %v3765 = vld [vmem:[%s75 + $0x3a0] sm:$0xff]
  %v3766 = vld [vmem:[%s75 + $0x3a8] sm:$0xff]
  %v3767 = vld [vmem:[%s77] sm:$0xff]
  %v3768 = vld [vmem:[%s77 + $0x8] sm:$0xff]
  %3769 = vmatprep.subr.mxu0 0.0
  %3770 = vmatpush1.msra.mxu0 %v3767
  %3771 = vmatprep.subr.mxu0 0.0
  %3772 = vmatpush1.msra.mxu0 %v3768
  %3773 = vmatprep.subr.mxu0 0.0
  %3774 = vmatpush1.msra.mxu0 0.0
  %3775 = vmatprep.subr.mxu0 0.0
  %3776 = vmatpush1.msra.mxu0 0.0
  %3777 = vmatprep.subr.mxu0 0.0
  %3778 = vmatpush1.msra.mxu0 0.0
  %3779 = vmatprep.subr.mxu0 0.0
  %3780 = vmatpush1.msra.mxu0 0.0
  %3781 = vmatprep.subr.mxu0 0.0
  %3782 = vmatpush1.msra.mxu0 0.0
  %3783 = vmatprep.subr.mxu0 0.0
  %3784 = vmatpush1.msra.mxu0 0.0
  %3785 = vmatprep.subr.mxu0 0.0
  %3786 = vmatpush1.msra.mxu0 0.0
  %3787 = vmatprep.subr.mxu0 0.0
  %3788 = vmatpush1.msra.mxu0 0.0
  %3789 = vmatprep.subr.mxu0 0.0
  %3790 = vmatpush1.msra.mxu0 0.0
  %3791 = vmatprep.subr.mxu0 0.0
  %3792 = vmatpush1.msra.mxu0 0.0
  %3793 = vmatprep.subr.mxu0 0.0
  %3794 = vmatpush1.msra.mxu0 0.0
  %3795 = vmatprep.subr.mxu0 0.0
  %3796 = vmatpush1.msra.mxu0 0.0
  %3797 = vmatprep.subr.mxu0 0.0
  %3798 = vmatpush1.msra.mxu0 0.0
  %3799 = vmatprep.subr.mxu0 0.0
  %3800 = vmatpush1.msra.mxu0 0.0
  %3801 = vmatprep.subr.mxu0 0.0
  %3802 = vmatpush1.msra.mxu0 0.0
  %3803 = vmatprep.subr.mxu0 0.0
  %3804 = vmatpush1.msra.mxu0 0.0
  %3805 = vmatprep.subr.mxu0 0.0
  %3806 = vmatpush1.msra.mxu0 0.0
  %3807 = vmatprep.subr.mxu0 0.0
  %3808 = vmatpush1.msra.mxu0 0.0
  %3809 = vmatprep.subr.mxu0 0.0
  %3810 = vmatpush1.msra.mxu0 0.0
  %3811 = vmatprep.subr.mxu0 0.0
  %3812 = vmatpush1.msra.mxu0 0.0
  %3813 = vmatprep.subr.mxu0 0.0
  %3814 = vmatpush1.msra.mxu0 0.0
  %3815 = vmatprep.subr.mxu0 0.0
  %3816 = vmatpush1.msra.mxu0 0.0
  %3817 = vmatprep.subr.mxu0 0.0
  %3818 = vmatpush1.msra.mxu0 0.0
  %3819 = vmatprep.subr.mxu0 0.0
  %3820 = vmatpush1.msra.mxu0 0.0
  %3821 = vmatprep.subr.mxu0 0.0
  %3822 = vmatpush1.msra.mxu0 0.0
  %3823 = vmatprep.subr.mxu0 0.0
  %3824 = vmatpush1.msra.mxu0 0.0
  %3825 = vmatprep.subr.mxu0 0.0
  %3826 = vmatpush1.msra.mxu0 0.0
  %3827 = vmatprep.subr.mxu0 0.0
  %3828 = vmatpush1.msra.mxu0 0.0
  %3829 = vmatprep.subr.mxu0 0.0
  %3830 = vmatpush1.msra.mxu0 0.0
  %3831 = vmatprep.subr.mxu0 0.0
  %3832 = vmatpush1.msra.mxu0 0.0
  %3833 = vmatprep.mubr.f32.mxu0 0.0
  %3834 = vmatmul.mubr.f32.gmra.mrb[0].mxu0 %v2811
  %v3835 = vpop.f32.mrb[0].mxu0
  %v3836 = vadd.f32 0.0, %v3835
  %v3837 = vpop.f32.mrb[0].mxu0
  %3838 = vdwg.mxu0
  %3839 = vmatprep.subr.mxu0 0.0
  %3840 = vmatpush1.msra.mxu0 %v3649
  %3841 = vmatprep.subr.mxu0 0.0
  %3842 = vmatpush1.msra.mxu0 %v3650
  %3843 = vmatprep.subr.mxu0 0.0
  %3844 = vmatpush1.msra.mxu0 %v3651
  %3845 = vmatprep.subr.mxu0 0.0
  %3846 = vmatpush1.msra.mxu0 %v3652
  %3847 = vmatprep.subr.mxu0 0.0
  %3848 = vmatpush1.msra.mxu0 %v3653
  %3849 = vmatprep.subr.mxu0 0.0
  %3850 = vmatpush1.msra.mxu0 %v3654
  %3851 = vmatprep.subr.mxu0 0.0
  %3852 = vmatpush1.msra.mxu0 %v3655
  %3853 = vmatprep.subr.mxu0 0.0
  %3854 = vmatpush1.msra.mxu0 %v3656
  %3855 = vmatprep.subr.mxu0 0.0
  %3856 = vmatpush1.msra.mxu0 %v3657
  %3857 = vmatprep.subr.mxu0 0.0
  %3858 = vmatpush1.msra.mxu0 %v3658
  %3859 = vmatprep.subr.mxu0 0.0
  %3860 = vmatpush1.msra.mxu0 %v3659
  %3861 = vmatprep.subr.mxu0 0.0
  %3862 = vmatpush1.msra.mxu0 %v3660
  %3863 = vmatprep.subr.mxu0 0.0
  %3864 = vmatpush1.msra.mxu0 %v3661
  %3865 = vmatprep.subr.mxu0 0.0
  %3866 = vmatpush1.msra.mxu0 %v3662
  %3867 = vmatprep.subr.mxu0 0.0
  %3868 = vmatpush1.msra.mxu0 %v3663
  %3869 = vmatprep.subr.mxu0 0.0
  %3870 = vmatpush1.msra.mxu0 %v3664
  %3871 = vmatprep.subr.mxu0 0.0
  %3872 = vmatpush1.msra.mxu0 %v3665
  %3873 = vmatprep.subr.mxu0 0.0
  %3874 = vmatpush1.msra.mxu0 %v3666
  %3875 = vmatprep.subr.mxu0 0.0
  %3876 = vmatpush1.msra.mxu0 %v3667
  %3877 = vmatprep.subr.mxu0 0.0
  %3878 = vmatpush1.msra.mxu0 %v3668
  %3879 = vmatprep.subr.mxu0 0.0
  %3880 = vmatpush1.msra.mxu0 %v3669
  %3881 = vmatprep.subr.mxu0 0.0
  %3882 = vmatpush1.msra.mxu0 %v3670
  %3883 = vmatprep.subr.mxu0 0.0
  %3884 = vmatpush1.msra.mxu0 %v3671
  %3885 = vmatprep.subr.mxu0 0.0
  %3886 = vmatpush1.msra.mxu0 %v3672
  %3887 = vmatprep.subr.mxu0 0.0
  %3888 = vmatpush1.msra.mxu0 %v3673
  %3889 = vmatprep.subr.mxu0 0.0
  %3890 = vmatpush1.msra.mxu0 %v3674
  %3891 = vmatprep.subr.mxu0 0.0
  %3892 = vmatpush1.msra.mxu0 %v3675
  %3893 = vmatprep.subr.mxu0 0.0
  %3894 = vmatpush1.msra.mxu0 %v3676
  %3895 = vmatprep.subr.mxu0 0.0
  %3896 = vmatpush1.msra.mxu0 %v3677
  %3897 = vmatprep.subr.mxu0 0.0
  %3898 = vmatpush1.msra.mxu0 %v3678
  %3899 = vmatprep.subr.mxu0 0.0
  %3900 = vmatpush1.msra.mxu0 %v3679
  %3901 = vmatprep.subr.mxu0 0.0
  %3902 = vmatpush1.msra.mxu0 %v3680
  %3903 = vmatprep.mubr.f32.mxu0 %v973
  %3904 = vmatmul.mubr.f32.gmra.mrb[0].mxu0 %v971
  %v3905 = vpop.f32.mrb[0].mxu0
  %v3906 = vadd.f32 %v3836, %v3905
  %v3907 = vpop.f32.mrb[0].mxu0
  %3908 = vdwg.mxu0
  %3909 = vmatprep.subr.mxu0 0.0
  %3910 = vmatpush1.msra.mxu0 %v3681
  %3911 = vmatprep.subr.mxu0 0.0
  %3912 = vmatpush1.msra.mxu0 %v3682
  %3913 = vmatprep.subr.mxu0 0.0
  %3914 = vmatpush1.msra.mxu0 %v3683
  %3915 = vmatprep.subr.mxu0 0.0
  %3916 = vmatpush1.msra.mxu0 %v3684
  %3917 = vmatprep.subr.mxu0 0.0
  %3918 = vmatpush1.msra.mxu0 %v3685
  %3919 = vmatprep.subr.mxu0 0.0
  %3920 = vmatpush1.msra.mxu0 %v3686
  %3921 = vmatprep.subr.mxu0 0.0
  %3922 = vmatpush1.msra.mxu0 %v3687
  %3923 = vmatprep.subr.mxu0 0.0
  %3924 = vmatpush1.msra.mxu0 %v3688
  %3925 = vmatprep.subr.mxu0 0.0
  %3926 = vmatpush1.msra.mxu0 %v3689
  %3927 = vmatprep.subr.mxu0 0.0
  %3928 = vmatpush1.msra.mxu0 %v3690
  %3929 = vmatprep.subr.mxu0 0.0
  %3930 = vmatpush1.msra.mxu0 %v3691
  %3931 = vmatprep.subr.mxu0 0.0
  %3932 = vmatpush1.msra.mxu0 %v3692
  %3933 = vmatprep.subr.mxu0 0.0
  %3934 = vmatpush1.msra.mxu0 %v3693
  %3935 = vmatprep.subr.mxu0 0.0
  %3936 = vmatpush1.msra.mxu0 %v3694
  %3937 = vmatprep.subr.mxu0 0.0
  %3938 = vmatpush1.msra.mxu0 %v3695
  %3939 = vmatprep.subr.mxu0 0.0
  %3940 = vmatpush1.msra.mxu0 %v3696
  %3941 = vmatprep.subr.mxu0 0.0
  %3942 = vmatpush1.msra.mxu0 %v3697
  %3943 = vmatprep.subr.mxu0 0.0
  %3944 = vmatpush1.msra.mxu0 %v3698
  %3945 = vmatprep.subr.mxu0 0.0
  %3946 = vmatpush1.msra.mxu0 %v3699
  %3947 = vmatprep.subr.mxu0 0.0
  %3948 = vmatpush1.msra.mxu0 %v3700
  %3949 = vmatprep.subr.mxu0 0.0
  %3950 = vmatpush1.msra.mxu0 %v3701
  %3951 = vmatprep.subr.mxu0 0.0
  %3952 = vmatpush1.msra.mxu0 %v3702
  %3953 = vmatprep.subr.mxu0 0.0
  %3954 = vmatpush1.msra.mxu0 %v3703
  %3955 = vmatprep.subr.mxu0 0.0
  %3956 = vmatpush1.msra.mxu0 %v3704
  %3957 = vmatprep.subr.mxu0 0.0
  %3958 = vmatpush1.msra.mxu0 %v3705
  %3959 = vmatprep.subr.mxu0 0.0
  %3960 = vmatpush1.msra.mxu0 %v3706
  %3961 = vmatprep.subr.mxu0 0.0
  %3962 = vmatpush1.msra.mxu0 %v3707
  %3963 = vmatprep.subr.mxu0 0.0
  %3964 = vmatpush1.msra.mxu0 %v3708
  %3965 = vmatprep.subr.mxu0 0.0
  %3966 = vmatpush1.msra.mxu0 %v3709
  %3967 = vmatprep.subr.mxu0 0.0
  %3968 = vmatpush1.msra.mxu0 %v3710
  %3969 = vmatprep.subr.mxu0 0.0
  %3970 = vmatpush1.msra.mxu0 %v3711
  %3971 = vmatprep.subr.mxu0 0.0
  %3972 = vmatpush1.msra.mxu0 %v3712
  %3973 = vmatprep.mubr.f32.mxu0 %v1044
  %3974 = vmatmul.mubr.f32.gmra.mrb[0].mxu0 %v1042
  %v3975 = vpop.f32.mrb[0].mxu0
  %v3976 = vadd.f32 %v3906, %v3975
  %v3977 = vpop.f32.mrb[0].mxu0
  %3978 = vdwg.mxu0
  %3979 = vmatprep.subr.mxu0 0.0
  %3980 = vmatpush1.msra.mxu0 %v3713
  %3981 = vmatprep.subr.mxu0 0.0
  %3982 = vmatpush1.msra.mxu0 %v3714
  %3983 = vmatprep.subr.mxu0 0.0
  %3984 = vmatpush1.msra.mxu0 %v3715
  %3985 = vmatprep.subr.mxu0 0.0
  %3986 = vmatpush1.msra.mxu0 %v3716
  %3987 = vmatprep.subr.mxu0 0.0
  %3988 = vmatpush1.msra.mxu0 %v3717
  %3989 = vmatprep.subr.mxu0 0.0
  %3990 = vmatpush1.msra.mxu0 %v3718
  %3991 = vmatprep.subr.mxu0 0.0
  %3992 = vmatpush1.msra.mxu0 %v3719
  %3993 = vmatprep.subr.mxu0 0.0
  %3994 = vmatpush1.msra.mxu0 %v3720
  %3995 = vmatprep.subr.mxu0 0.0
  %3996 = vmatpush1.msra.mxu0 %v3721
  %3997 = vmatprep.subr.mxu0 0.0
  %3998 = vmatpush1.msra.mxu0 %v3722
  %3999 = vmatprep.subr.mxu0 0.0
  %4000 = vmatpush1.msra.mxu0 %v3723
  %4001 = vmatprep.subr.mxu0 0.0
  %4002 = vmatpush1.msra.mxu0 %v3724
  %4003 = vmatprep.subr.mxu0 0.0
  %4004 = vmatpush1.msra.mxu0 %v3725
  %4005 = vmatprep.subr.mxu0 0.0
  %4006 = vmatpush1.msra.mxu0 %v3726
  %4007 = vmatprep.subr.mxu0 0.0
  %4008 = vmatpush1.msra.mxu0 %v3727
  %4009 = vmatprep.subr.mxu0 0.0
  %4010 = vmatpush1.msra.mxu0 %v3728
  %4011 = vmatprep.subr.mxu0 0.0
  %4012 = vmatpush1.msra.mxu0 %v3729
  %4013 = vmatprep.subr.mxu0 0.0
  %4014 = vmatpush1.msra.mxu0 %v3730
  %4015 = vmatprep.subr.mxu0 0.0
  %4016 = vmatpush1.msra.mxu0 %v3731
  %4017 = vmatprep.subr.mxu0 0.0
  %4018 = vmatpush1.msra.mxu0 %v3732
  %4019 = vmatprep.subr.mxu0 0.0
  %4020 = vmatpush1.msra.mxu0 %v3733
  %4021 = vmatprep.subr.mxu0 0.0
  %4022 = vmatpush1.msra.mxu0 %v3734
  %4023 = vmatprep.subr.mxu0 0.0
  %4024 = vmatpush1.msra.mxu0 %v3735
  %4025 = vmatprep.subr.mxu0 0.0
  %4026 = vmatpush1.msra.mxu0 %v3736
  %4027 = vmatprep.subr.mxu0 0.0
  %4028 = vmatpush1.msra.mxu0 %v3737
  %4029 = vmatprep.subr.mxu0 0.0
  %4030 = vmatpush1.msra.mxu0 %v3738
  %4031 = vmatprep.subr.mxu0 0.0
  %4032 = vmatpush1.msra.mxu0 %v3739
  %4033 = vmatprep.subr.mxu0 0.0
  %4034 = vmatpush1.msra.mxu0 %v3740
  %4035 = vmatprep.subr.mxu0 0.0
  %4036 = vmatpush1.msra.mxu0 %v3741
  %4037 = vmatprep.subr.mxu0 0.0
  %4038 = vmatpush1.msra.mxu0 %v3742
  %4039 = vmatprep.subr.mxu0 0.0
  %4040 = vmatpush1.msra.mxu0 %v3743
  %4041 = vmatprep.subr.mxu0 0.0
  %4042 = vmatpush1.msra.mxu0 %v3744
  %4043 = vmatprep.mubr.f32.mxu0 %v1115
  %4044 = vmatmul.mubr.f32.gmra.mrb[0].mxu0 %v1113
  %v4045 = vpop.f32.mrb[0].mxu0
  %v4046 = vadd.f32 %v3976, %v4045
  %v4047 = vpop.f32.mrb[0].mxu0
  %4048 = vdwg.mxu0
  %4049 = vmatprep.subr.mxu0 0.0
  %4050 = vmatpush1.msra.mxu0 %v3745
  %4051 = vmatprep.subr.mxu0 0.0
  %4052 = vmatpush1.msra.mxu0 %v3746
  %4053 = vmatprep.subr.mxu0 0.0
  %4054 = vmatpush1.msra.mxu0 %v3747
  %4055 = vmatprep.subr.mxu0 0.0
  %4056 = vmatpush1.msra.mxu0 %v3748
  %4057 = vmatprep.subr.mxu0 0.0
  %4058 = vmatpush1.msra.mxu0 %v3749
  %4059 = vmatprep.subr.mxu0 0.0
  %4060 = vmatpush1.msra.mxu0 %v3750
  %4061 = vmatprep.subr.mxu0 0.0
  %4062 = vmatpush1.msra.mxu0 %v3751
  %4063 = vmatprep.subr.mxu0 0.0
  %4064 = vmatpush1.msra.mxu0 %v3752
  %4065 = vmatprep.subr.mxu0 0.0
  %4066 = vmatpush1.msra.mxu0 %v3753
  %4067 = vmatprep.subr.mxu0 0.0
  %4068 = vmatpush1.msra.mxu0 %v3754
  %4069 = vmatprep.subr.mxu0 0.0
  %4070 = vmatpush1.msra.mxu0 %v3755
  %4071 = vmatprep.subr.mxu0 0.0
  %4072 = vmatpush1.msra.mxu0 %v3756
  %4073 = vmatprep.subr.mxu0 0.0
  %4074 = vmatpush1.msra.mxu0 %v3757
  %4075 = vmatprep.subr.mxu0 0.0
  %4076 = vmatpush1.msra.mxu0 %v3758
  %4077 = vmatprep.subr.mxu0 0.0
  %4078 = vmatpush1.msra.mxu0 %v3759
  %4079 = vmatprep.subr.mxu0 0.0
  %4080 = vmatpush1.msra.mxu0 %v3760
  %4081 = vmatprep.subr.mxu0 0.0
  %4082 = vmatpush1.msra.mxu0 %v3761
  %4083 = vmatprep.subr.mxu0 0.0
  %4084 = vmatpush1.msra.mxu0 %v3762
  %4085 = vmatprep.subr.mxu0 0.0
  %4086 = vmatpush1.msra.mxu0 %v3763
  %4087 = vmatprep.subr.mxu0 0.0
  %4088 = vmatpush1.msra.mxu0 %v3764
  %4089 = vmatprep.subr.mxu0 0.0
  %4090 = vmatpush1.msra.mxu0 %v3765
  %4091 = vmatprep.subr.mxu0 0.0
  %4092 = vmatpush1.msra.mxu0 %v3766
  %4093 = vmatprep.subr.mxu0 0.0
  %4094 = vmatpush1.msra.mxu0 0.0
  %4095 = vmatprep.subr.mxu0 0.0
  %4096 = vmatpush1.msra.mxu0 0.0
  %4097 = vmatprep.subr.mxu0 0.0
  %4098 = vmatpush1.msra.mxu0 0.0
  %4099 = vmatprep.subr.mxu0 0.0
  %4100 = vmatpush1.msra.mxu0 0.0
  %4101 = vmatprep.subr.mxu0 0.0
  %4102 = vmatpush1.msra.mxu0 0.0
  %4103 = vmatprep.subr.mxu0 0.0
  %4104 = vmatpush1.msra.mxu0 0.0
  %4105 = vmatprep.subr.mxu0 0.0
  %4106 = vmatpush1.msra.mxu0 0.0
  %4107 = vmatprep.subr.mxu0 0.0
  %4108 = vmatpush1.msra.mxu0 0.0
  %4109 = vmatprep.subr.mxu0 0.0
  %4110 = vmatpush1.msra.mxu0 0.0
  %4111 = vmatprep.subr.mxu0 0.0
  %4112 = vmatpush1.msra.mxu0 0.0
  %4113 = vmatprep.mubr.f32.mxu0 %v1319
  %4114 = vmatmul.mubr.f32.gmra.mrb[0].mxu0 %v1184
  %v4115 = vpop.f32.mrb[0].mxu0
  %v4116 = vadd.f32 %v4046, %v4115
  %v4117 = vpop.f32.mrb[0].mxu0
  %4118 = vdwg.mxu0
  %v4119 = vld [vmem:[%s79] sm:$0x1]
  %v4121 = vlaneseq
  %v4122 = vshrl.u32 %v4121, 7
  %v4123 = vsub.s32 0, %v4122
  %v4124 = vrot.slane %v4119, %v4123
  %v4126 = vadd.f32 %v4116, %v4124
  %v4127 = vld [vmem:[%s9] sm:$0xf]
  %v4128 = vsub.f32 %v4127, %v3170
  %v4129 = vmul.f32 %v4128, %v4128
  %vm4130 = vcmask 175104
  %v4131 = vsel %vm4130, %v4129, 0.0
  %4132 = vadd.xlane.f32.xlu0 %v4131
  %v4133 = vpop.xlane.xlu0 %4132
  %v4134 = vrot.slane %v4133, 4
  %v4135 = vadd.f32 %v4133, %v4134
  %v4136 = vrot.slane %v4135, 2
  %v4137 = vadd.f32 %v4135, %v4136
  %v4138 = vrot.slane %v4137, 1
  %v4139 = vadd.f32 %v4137, %v4138
  %s4140 = vtos %v4139
  %v4141 = vrcp.pop 2.0
  %s4142 = vtos %v4141
  %s4143 = smul.f32 %s4140, %s4142
  %v4144 = vrcp.pop 11.0
  %s4145 = vtos %v4144
  %s4146 = smul.f32 %s4143, %s4145
  %v4147 = vld [vmem:[%s17] sm:$0xff]
  %v4148 = vld [vmem:[%s17 + $0x8] sm:$0xff]
  %v4149 = vld [vmem:[%s17 + $0x10] sm:$0x3f]
  %vm4150 = vcmask 179200
  %v4152 = vsel %vm4150, %v4129, 0
  %vm4154 = vcmask 1045504
  %v4156 = vsel %vm4154, %v4149, 0
  %4158 = vmatprep.subr.mxu0 0.0
  %4159 = vmatpush1.msra.mxu0 %v4147
  %4160 = vmatprep.subr.mxu0 0.0
  %4161 = vmatpush1.msra.mxu0 %v4148
  %4162 = vmatprep.subr.mxu0 0.0
  %4163 = vmatpush1.msra.mxu0 %v4156
  %4164 = vmatprep.subr.mxu0 0.0
  %4165 = vmatpush1.msra.mxu0 0.0
  %4166 = vmatprep.subr.mxu0 0.0
  %4167 = vmatpush1.msra.mxu0 0.0
  %4168 = vmatprep.subr.mxu0 0.0
  %4169 = vmatpush1.msra.mxu0 0.0
  %4170 = vmatprep.subr.mxu0 0.0
  %4171 = vmatpush1.msra.mxu0 0.0
  %4172 = vmatprep.subr.mxu0 0.0
  %4173 = vmatpush1.msra.mxu0 0.0
  %4174 = vmatprep.subr.mxu0 0.0
  %4175 = vmatpush1.msra.mxu0 0.0
  %4176 = vmatprep.subr.mxu0 0.0
  %4177 = vmatpush1.msra.mxu0 0.0
  %4178 = vmatprep.subr.mxu0 0.0
  %4179 = vmatpush1.msra.mxu0 0.0
  %4180 = vmatprep.subr.mxu0 0.0
  %4181 = vmatpush1.msra.mxu0 0.0
  %4182 = vmatprep.subr.mxu0 0.0
  %4183 = vmatpush1.msra.mxu0 0.0
  %4184 = vmatprep.subr.mxu0 0.0
  %4185 = vmatpush1.msra.mxu0 0.0
  %4186 = vmatprep.subr.mxu0 0.0
  %4187 = vmatpush1.msra.mxu0 0.0
  %4188 = vmatprep.subr.mxu0 0.0
  %4189 = vmatpush1.msra.mxu0 0.0
  %4190 = vmatprep.subr.mxu0 0.0
  %4191 = vmatpush1.msra.mxu0 0.0
  %4192 = vmatprep.subr.mxu0 0.0
  %4193 = vmatpush1.msra.mxu0 0.0
  %4194 = vmatprep.subr.mxu0 0.0
  %4195 = vmatpush1.msra.mxu0 0.0
  %4196 = vmatprep.subr.mxu0 0.0
  %4197 = vmatpush1.msra.mxu0 0.0
  %4198 = vmatprep.subr.mxu0 0.0
  %4199 = vmatpush1.msra.mxu0 0.0
  %4200 = vmatprep.subr.mxu0 0.0
  %4201 = vmatpush1.msra.mxu0 0.0
  %4202 = vmatprep.subr.mxu0 0.0
  %4203 = vmatpush1.msra.mxu0 0.0
  %4204 = vmatprep.subr.mxu0 0.0
  %4205 = vmatpush1.msra.mxu0 0.0
  %4206 = vmatprep.subr.mxu0 0.0
  %4207 = vmatpush1.msra.mxu0 0.0
  %4208 = vmatprep.subr.mxu0 0.0
  %4209 = vmatpush1.msra.mxu0 0.0
  %4210 = vmatprep.subr.mxu0 0.0
  %4211 = vmatpush1.msra.mxu0 0.0
  %4212 = vmatprep.subr.mxu0 0.0
  %4213 = vmatpush1.msra.mxu0 0.0
  %4214 = vmatprep.subr.mxu0 0.0
  %4215 = vmatpush1.msra.mxu0 0.0
  %4216 = vmatprep.subr.mxu0 0.0
  %4217 = vmatpush1.msra.mxu0 0.0
  %4218 = vmatprep.subr.mxu0 0.0
  %4219 = vmatpush1.msra.mxu0 0.0
  %4220 = vmatprep.subr.mxu0 0.0
  %4221 = vmatpush1.msra.mxu0 0.0
  %4222 = vmatprep.mubr.f32.mxu0 0.0
  %4223 = vmatmul.mubr.f32.gmra.mrb[0].mxu0 %v4152
  %v4224 = vpop.f32.mrb[0].mxu0
  %v4225 = vadd.f32 0.0, %v4224
  %v4226 = vpop.f32.mrb[0].mxu0
  %4227 = vdwg.mxu0
  %v4228 = vadd.f32 %v4225, 1e-12
  %v4229 = vrsqrt.pop %v4228
  %v4230 = vmul.f32 %v4228, %v4229
  %vm4231 = vcmp.eq.f32.partialorder %v4228, inf
  %v4232 = vsel %vm4231, %v4228, %v4230
  %vm4233 = vcmp.eq.f32.partialorder %v4228, 0.0
  %v4234 = vand.u32 %v4228, 2147483648
  %v4235 = vsel %vm4233, %v4234, %v4232
  %vm4236 = vcmask 84992
  %v4237 = vsel %vm4236, %v4235, 0.0
  %4238 = vadd.xlane.f32.xlu0 %v4237
  %v4239 = vpop.xlane.xlu0 %4238
  %v4240 = vrot.slane %v4239, 4
  %v4241 = vadd.f32 %v4239, %v4240
  %v4242 = vrot.slane %v4241, 2
  %v4243 = vadd.f32 %v4241, %v4242
  %v4244 = vrot.slane %v4243, 1
  %v4245 = vadd.f32 %v4243, %v4244
  %s4246 = vtos %v4245
  %v4247 = vrcp.pop 44.0
  %s4248 = vtos %v4247
  %s4249 = smul.f32 %s4246, %s4248
  %v4250 = vlaneseq
  %v4251 = vand.u32 %v4250, 127
  %vm4252 = vcmp.eq.s32.totalorder %v4251, 10
  %v4253 = vsel %vm4252, %v4235, 0.0
  %v4254 = vsel %vm4236, %v4253, 0.0
  %4255 = vadd.xlane.f32.xlu0 %v4254
  %v4256 = vpop.xlane.xlu0 %4255
  %v4257 = vrot.slane %v4256, 4
  %v4258 = vadd.f32 %v4256, %v4257
  %v4259 = vrot.slane %v4258, 2
  %v4260 = vadd.f32 %v4258, %v4259
  %v4261 = vrot.slane %v4260, 1
  %v4262 = vadd.f32 %v4260, %v4261
  %s4263 = vtos %v4262
  %v4264 = vrcp.pop 4.0
  %s4265 = vtos %v4264
  %s4266 = smul.f32 %s4263, %s4265
  %v4267 = vsel %vm4236, %v4225, 0.0
  %4268 = vadd.xlane.f32.xlu0 %v4267
  %v4269 = vpop.xlane.xlu0 %4268
  %v4270 = vrot.slane %v4269, 4
  %v4271 = vadd.f32 %v4269, %v4270
  %v4272 = vrot.slane %v4271, 2
  %v4273 = vadd.f32 %v4271, %v4272
  %v4274 = vrot.slane %v4273, 1
  %v4275 = vadd.f32 %v4273, %v4274
  %s4276 = vtos %v4275
  %v4277 = vrcp.pop 44.0
  %s4278 = vtos %v4277
  %s4279 = smul.f32 %s4276, %s4278
  %v4280 = vld [vmem:[%s11] sm:$0xf]
  %v4281 = vmax.f32 %v3648, 0.0
  %v4282 = vmul.f32 %v3648, %v4280
  %v4283 = vsub.f32 %v4281, %v4282
  %v4284 = vand.u32 2147483647, %v3648
  %v4285 = vsub.f32 0.0, %v4284
  %v4286 = vmul.f32 %v4285, 1.442695
  %v4287 = vpow.pop %v4286
  %v4288 = vadd.f32 %v4287, 1.0
  %v4289 = vlog2.pop %v4288
  %v4290 = vmul.f32 %v4289, 0.6931472
  %v4291 = vadd.f32 %v4283, %v4290
  %vm4292 = vcmask 355328
  %v4293 = vsel %vm4292, %v4291, 0.0
  %4294 = vadd.xlane.f32.xlu0 %v4293
  %v4295 = vpop.xlane.xlu0 %4294
  %v4296 = vrot.slane %v4295, 4
  %v4297 = vadd.f32 %v4295, %v4296
  %v4298 = vrot.slane %v4297, 2
  %v4299 = vadd.f32 %v4297, %v4298
  %v4300 = vrot.slane %v4299, 1
  %v4301 = vadd.f32 %v4299, %v4300
  %s4302 = vtos %v4301
  %v4303 = vrcp.pop 44.0
  %s4304 = vtos %v4303
  %s4305 = smul.f32 %s4302, %s4304
  %v4306 = vld [vmem:[%s13] sm:$0xf]
  %v4307 = vmax.f32 %v4126, 0.0
  %v4308 = vmul.f32 %v4126, %v4306
  %v4309 = vsub.f32 %v4307, %v4308
  %v4310 = vand.u32 2147483647, %v4126
  %v4311 = vsub.f32 0.0, %v4310
  %v4312 = vmul.f32 %v4311, 1.442695
  %v4313 = vpow.pop %v4312
  %v4314 = vadd.f32 %v4313, 1.0
  %v4315 = vlog2.pop %v4314
  %v4316 = vmul.f32 %v4315, 0.6931472
  %v4317 = vadd.f32 %v4309, %v4316
  %v4318 = vsel %vm4130, %v4317, 0.0
  %4319 = vadd.xlane.f32.xlu0 %v4318
  %v4320 = vpop.xlane.xlu0 %4319
  %v4321 = vrot.slane %v4320, 4
  %v4322 = vadd.f32 %v4320, %v4321
  %v4323 = vrot.slane %v4322, 2
  %v4324 = vadd.f32 %v4322, %v4323
  %v4325 = vrot.slane %v4324, 1
  %v4326 = vadd.f32 %v4324, %v4325
  %s4327 = vtos %v4326
  %v4328 = vrcp.pop 44.0
  %s4329 = vtos %v4328
  %s4330 = smul.f32 %s4327, %s4329
  %s4331 = sadd.f32 %s4146, %s2688
  %s4332 = smul.f32 %s4305, 0.01
  %s4333 = sadd.f32 %s4331, %s4332
  %s4334 = smul.f32 %s4330, 0.01
  %s4335 = sadd.f32 %s4333, %s4334
  %vm4336 = vcmp.eq.s32.totalorder %v4251, 0
  %v4337 = vstv %s4335
  %v4338 = vsel %vm4336, %v4337, 0.0
  %vm4339 = vcmp.eq.s32.totalorder %v4251, 1
  %v4340 = vstv %s4146
  %v4341 = vsel %vm4339, %v4340, %v4338
  %vm4342 = vcmp.eq.s32.totalorder %v4251, 2
  %v4343 = vstv %s2688
  %v4344 = vsel %vm4342, %v4343, %v4341
  %vm4345 = vcmp.eq.s32.totalorder %v4251, 3
  %v4346 = vstv %s4249
  %v4347 = vsel %vm4345, %v4346, %v4344
  %vm4348 = vcmp.eq.s32.totalorder %v4251, 4
  %v4349 = vstv %s4266
  %v4350 = vsel %vm4348, %v4349, %v4347
  %vm4351 = vcmp.eq.s32.totalorder %v4251, 5
  %v4352 = vstv %s4279
  %v4353 = vsel %vm4351, %v4352, %v4350
  %vm4354 = vcmp.eq.s32.totalorder %v4251, 6
  %v4355 = vstv %s4305
  %v4356 = vsel %vm4354, %v4355, %v4353
  %vm4357 = vcmp.eq.s32.totalorder %v4251, 7
  %v4358 = vstv %s4330
  %v4359 = vsel %vm4357, %v4358, %v4356
  %4360 = vst [vmem:[%s81] sm:$0x1] %v4359
  // Predicated region
  $region162: #{tscvae_forward.1} parent=0 // pred_check
    _
  $region163: #{tscvae_forward.1} parent=0 // pred_check_branch
    %4362 = sbr.rel (0) target = $region165
  $region164: #{tscvae_forward.1} parent=0 // pred_region
    _
  $region165: #{tscvae_forward.1} parent=0 // pred_fallthru
    _
  // Predicated region
  $region166: #{tscvae_forward.1} parent=0 // pred_check
    _
  $region167: #{tscvae_forward.1} parent=0 // pred_check_branch
    %4364 = sbr.rel (0) target = $region169
  $region168: #{tscvae_forward.1} parent=0 // pred_region
    _
  $region169: #{tscvae_forward.1} parent=0 // pred_fallthru
    _

</llo_original>
